<compile_context>
chip_gen: v5e
topology: v5e:2x2
jax: 0.10.0
libtpu: 0.0.40
codegen_flags: <defaults>
</compile_context>

<pallas_src>
import jax
import jax.numpy as jnp
from jax.experimental import pallas as pl
from jax.experimental.pallas import tpu as pltpu

LANES = 128            # lane-dense GEMM-output channel padding
KSIZE = 7
STRIDE = 2
C_IN, C1, C2, C3 = 3, 16, 32, 32   # fixed by the PyTorch module


def _round_up(x, m):
    return (x + m - 1) // m * m


def _pick_tm(m, max_tm=512):
    """M-tile: >=2 grid steps when M is large enough (v7x megacore + DMA/compute
    overlap), multiple of 16 (bf16 sublane tile), capped by max_tm.
    NOTE: max_tm could be raised on v6e (128 MiB VMEM) for larger batches."""
    if m <= 128:
        return m                                   # single full-dim block is legal
    return min(max_tm, _round_up(-(-m // 2), 16))


def _vmem_limit(*block_bytes):
    """Modest per-call scoped-VMEM request sized from the actual blocks
    (double/triple buffering + headroom) instead of a blanket 48 MiB."""
    need = 3 * sum(block_bytes) + (1 << 20)
    return int(min(32 << 20, max(8 << 20, need)))


# ----------------------------- Pallas kernels ------------------------------

def _conv_bn_relu_kernel(p_ref, w_ref, b_ref, o_ref):
    # p_ref: [tm, K] bf16   w_ref: [K, 128] bf16   b_ref: [1, 128] f32
    # o_ref: [tm, 128] bf16.  BN folded into w/b; epilogue = bias-add + ReLU.
    y = jnp.dot(p_ref[...], w_ref[...], preferred_element_type=jnp.float32)
    o_ref[...] = jnp.maximum(y + b_ref[...], 0.0).astype(o_ref.dtype)


def conv_bn_relu_gemm(patches, wk, bias, max_tm=512):
    """patches [M, K] bf16, wk [K, 128] bf16, bias [1, 128] f32 -> [M, 128] bf16."""
    M, K = patches.shape
    Cp = wk.shape[1]
    tm = _pick_tm(M, max_tm)
    grid = (pl.cdiv(M, tm),)
    # NOTE: a ragged last M-block (e.g. M=1682 with tm=512 -> 146-row tail)
    # relies on Pallas masking out-of-range rows; benign because those rows only
    # feed output rows that are never stored.
    vmem = _vmem_limit(tm * K * 2, K * Cp * 2, Cp * 4, tm * Cp * 2)
    return pl.pallas_call(
        _conv_bn_relu_kernel,
        out_shape=jax.ShapeDtypeStruct((M, Cp), jnp.bfloat16),
        grid=grid,
        in_specs=[
            pl.BlockSpec((tm, K), lambda i: (i, 0)),
            pl.BlockSpec((K, Cp), lambda i: (0, 0)),
            pl.BlockSpec((1, Cp), lambda i: (0, 0)),
        ],
        out_specs=pl.BlockSpec((tm, Cp), lambda i: (i, 0)),
        compiler_params=pltpu.CompilerParams(
            dimension_semantics=("parallel",),
            vmem_limit_bytes=vmem),
    )(patches, wk, bias)


def conv3_head_gemm(patches, wk, bias, hwk, hb, np_img):
    """Fused conv3 (+folded BN + ReLU) and Linear head.

    patches: [n_pos*np_img, K] bf16, rows ordered position-major / image-minor
             with the image axis zero-padded to np_img (multiple of 8).
    wk: [K, 128] bf16, bias: [1, 128] f32, hwk: [n_pos, 128, 128] bf16,
    hb: [1, 128] f32.  Returns q: [np_img, 128] f32 (slice in the wrapper).
    """
    M, K = patches.shape
    Cp = wk.shape[1]
    n_pos = M // np_img
    Op = hwk.shape[-1]

    def kernel(p_ref, w_ref, b_ref, hw_ref, hb_ref, o_ref):
        y = jnp.dot(p_ref[...], w_ref[...], preferred_element_type=jnp.float32)
        y = jnp.maximum(y + b_ref[...], 0.0).astype(jnp.bfloat16)  # [n_pos*np_img, 128]
        acc = jnp.zeros((np_img, Op), jnp.float32)
        # Unrolled (n_pos == 9); np_img % 8 == 0 keeps every slice (8,128)-aligned.
        for p in range(n_pos):
            acc = acc + jnp.dot(y[p * np_img:(p + 1) * np_img, :], hw_ref[p],
                                preferred_element_type=jnp.float32)
        o_ref[...] = acc + hb_ref[...]

    vmem = _vmem_limit(M * K * 2, K * Cp * 2, Cp * 4,
                       n_pos * Cp * Op * 2, Op * 4, np_img * Op * 4)
    return pl.pallas_call(
        kernel,
        out_shape=jax.ShapeDtypeStruct((np_img, Op), jnp.float32),
        grid=(1,),
        in_specs=[
            pl.BlockSpec((M, K), lambda i: (0, 0)),
            pl.BlockSpec((K, Cp), lambda i: (0, 0)),
            pl.BlockSpec((1, Cp), lambda i: (0, 0)),
            pl.BlockSpec((n_pos, Cp, Op), lambda i: (0, 0, 0)),
            pl.BlockSpec((1, Op), lambda i: (0, 0)),
        ],
        out_specs=pl.BlockSpec((np_img, Op), lambda i: (0, 0)),
        compiler_params=pltpu.CompilerParams(vmem_limit_bytes=vmem),
    )(patches, wk, bias, hwk, hb)


# ------------------------------- JAX glue -----------------------------------

def _im2col_nhwc(x, k, stride):
    """x: [N,H,W,C] -> ([N*Ho*Wo, k*k*C], Ho, Wo); column order (kh, kw, c)."""
    N, H, W, C = x.shape
    Ho = (H - k) // stride + 1
    Wo = (W - k) // stride + 1
    cols = [x[:, i:i + stride * Ho:stride, j:j + stride * Wo:stride, :]
            for i in range(k) for j in range(k)]
    p = jnp.stack(cols, axis=3)                     # [N, Ho, Wo, k*k, C]
    return p.reshape(N * Ho * Wo, k * k * C), Ho, Wo


def _im2col_pos_major(x, k, stride, n_pad):
    """Rows ordered (position, image) with the image axis zero-padded to n_pad."""
    N, H, W, C = x.shape
    Ho = (H - k) // stride + 1
    Wo = (W - k) // stride + 1
    cols = [x[:, i:i + stride * Ho:stride, j:j + stride * Wo:stride, :]
            for i in range(k) for j in range(k)]
    p = jnp.stack(cols, axis=3)                     # [N, Ho, Wo, k*k, C]
    p = p.transpose(1, 2, 0, 3, 4)                  # [Ho, Wo, N, k*k, C]
    p = jnp.pad(p, ((0, 0), (0, 0), (0, n_pad - N), (0, 0), (0, 0)))
    return p.reshape(Ho * Wo * n_pad, k * k * C), Ho, Wo


# --------------------- parameter folding (done once) ------------------------

def _fold_conv(w, b, gamma, beta, mean, var, k_pad_to=None, eps=1e-5):
    """PyTorch conv weight [Cout,Cin,k,k] + eval-mode BN -> bf16 GEMM weight
    [K(_pad), 128] (output lanes zero-padded) + f32 bias [1, 128]."""
    scale = gamma / jnp.sqrt(var + eps)
    bias = (b - mean) * scale + beta
    Cout, Cin, kh, kw = w.shape
    wt = jnp.transpose(w, (2, 3, 1, 0)) * scale     # [kh, kw, Cin, Cout], BN folded
    K = kh * kw * Cin
    wk = wt.reshape(K, Cout)
    if k_pad_to is not None and k_pad_to > K:       # zero rows match padded patch cols
        wk = jnp.pad(wk, ((0, k_pad_to - K), (0, 0)))
    wk = jnp.pad(wk, ((0, 0), (0, LANES - Cout)))   # lane-dense GEMM output
    bias = jnp.pad(bias, (0, LANES - Cout)).reshape(1, LANES)
    return wk.astype(jnp.bfloat16), bias.astype(jnp.float32)


def _fold_head(hw, hb, cin, convh, convw):
    """Permute head weight columns from PyTorch's NCHW .view(N,-1) ordering to
    the NHWC / position-major layout of the fused kernel; pad to 128 lanes."""
    O = hw.shape[0]
    hw4 = hw.reshape(O, cin, convh, convw)          # [O, C, H, W]
    hw4 = jnp.transpose(hw4, (2, 3, 1, 0))          # [H, W, C, O]
    hw4 = jnp.pad(hw4, ((0, 0), (0, 0), (0, LANES - cin), (0, LANES - O)))
    hwk = hw4.reshape(convh * convw, LANES, LANES)
    hbp = jnp.pad(hb, (0, LANES - O)).reshape(1, LANES)
    return hwk.astype(jnp.bfloat16), hbp.astype(jnp.float32)


def prepare_params(p, convh, convw):
    # conv1: K = 147 stays exact (full-dim K block is legal; padding buys nothing).
    wk1, b1 = _fold_conv(p["c1w"], p["c1b"], p["g1"], p["b1"], p["m1"], p["v1"])
    # conv2/conv3: contract over the TRUE 16/32 input channels of the de-padded
    # activations; K tail-padded to the next multiple of 128 (784->896, 1568->1664).
    wk2, b2 = _fold_conv(p["c2w"], p["c2b"], p["g2"], p["b2"], p["m2"], p["v2"],
                         k_pad_to=_round_up(C1 * KSIZE * KSIZE, LANES))
    wk3, b3 = _fold_conv(p["c3w"], p["c3b"], p["g3"], p["b3"], p["m3"], p["v3"],
                         k_pad_to=_round_up(C2 * KSIZE * KSIZE, LANES))
    hwk, hbp = _fold_head(p["hw"], p["hb"], cin=C3, convh=convh, convw=convw)
    return {"wk1": wk1, "bias1": b1, "wk2": wk2, "bias2": b2,
            "wk3": wk3, "bias3": b3, "hwk": hwk, "hb": hbp}


# -------------------------------- forward -----------------------------------

def dqn_forward(x_nchw, q, outputs, k=KSIZE, stride=STRIDE):
    n = x_nchw.shape[0]
    np_img = _round_up(max(n, 1), 8)                 # (8,128)-aligned output slab

    x = jnp.transpose(x_nchw, (0, 2, 3, 1)).astype(jnp.bfloat16)   # NHWC + bf16 once

    p1, h1, w1 = _im2col_nhwc(x, k, stride)                        # [n*h1*w1, 147]
    a1 = conv_bn_relu_gemm(p1, q["wk1"], q["bias1"])               # [M1, 128] bf16
    a1 = a1.reshape(n, h1, w1, LANES)[..., :C1]                    # de-pad -> 16 ch

    p2, h2, w2 = _im2col_nhwc(a1, k, stride)                       # [n*h2*w2, 784]
    p2 = jnp.pad(p2, ((0, 0), (0, q["wk2"].shape[0] - p2.shape[1])))   # -> 896
    a2 = conv_bn_relu_gemm(p2, q["wk2"], q["bias2"])               # [M2, 128] bf16
    a2 = a2.reshape(n, h2, w2, LANES)[..., :C2]                    # de-pad -> 32 ch

    p3, _, _ = _im2col_pos_major(a2, k, stride, np_img)            # [9*np_img, 1568]
    p3 = jnp.pad(p3, ((0, 0), (0, q["wk3"].shape[0] - p3.shape[1])))   # -> 1664
    q_full = conv3_head_gemm(p3, q["wk3"], q["bias3"], q["hwk"], q["hb"], np_img)
    return q_full[:n, :outputs]


# ---------------------------- params / reference ----------------------------

def _conv_size_out(size, k=KSIZE, s=STRIDE):
    return (size - (k - 1) - 1) // s + 1


def init_params(h, w, outputs, key):
    convw = _conv_size_out(_conv_size_out(_conv_size_out(w)))
    convh = _conv_size_out(_conv_size_out(_conv_size_out(h)))
    lin_in = convw * convh * C3
    ks = jax.random.split(key, 16)
    f32 = jnp.float32

    def rnd(k_, shape, s=0.05):
        return (jax.random.normal(k_, shape, f32) * s).astype(f32)

    return {
        "c1w": rnd(ks[0], (C1, C_IN, KSIZE, KSIZE)), "c1b": rnd(ks[1], (C1,)),
        "g1": 1.0 + rnd(ks[2], (C1,), 0.1), "b1": rnd(ks[3], (C1,), 0.1),
        "m1": jnp.zeros((C1,), f32), "v1": jnp.ones((C1,), f32),

        "c2w": rnd(ks[4], (C2, C1, KSIZE, KSIZE)), "c2b": rnd(ks[5], (C2,)),
        "g2": 1.0 + rnd(ks[6], (C2,), 0.1), "b2": rnd(ks[7], (C2,), 0.1),
        "m2": jnp.zeros((C2,), f32), "v2": jnp.ones((C2,), f32),

        "c3w": rnd(ks[8], (C3, C2, KSIZE, KSIZE)), "c3b": rnd(ks[9], (C3,)),
        "g3": 1.0 + rnd(ks[10], (C3,), 0.1), "b3": rnd(ks[11], (C3,), 0.1),
        "m3": jnp.zeros((C3,), f32), "v3": jnp.ones((C3,), f32),

        "hw": rnd(ks[12], (outputs, lin_in)), "hb": rnd(ks[13], (outputs,)),
    }


def _reference_forward(x, p, eps=1e-5):
    """Pure-JAX (XLA) f32 reference of the PyTorch forward, eval-mode BN."""
    def block(xx, w, b, g, bt, m, v):
        y = jax.lax.conv_general_dilated(
            xx, w, window_strides=(STRIDE, STRIDE), padding="VALID",
            dimension_numbers=("NCHW", "OIHW", "NCHW"),
            precision=jax.lax.Precision.HIGHEST)
        y = y + b[None, :, None, None]
        s = g / jnp.sqrt(v + eps)
        y = s[None, :, None, None] * (y - m[None, :, None, None]) + bt[None, :, None, None]
        return jnp.maximum(y, 0.0)

    x = block(x, p["c1w"], p["c1b"], p["g1"], p["b1"], p["m1"], p["v1"])
    x = block(x, p["c2w"], p["c2b"], p["g2"], p["b2"], p["m2"], p["v2"])
    x = block(x, p["c3w"], p["c3b"], p["g3"], p["b3"], p["m3"], p["v3"])
    flat = x.reshape(x.shape[0], -1)                 # NCHW flatten == torch .view
    return jnp.dot(flat, p["hw"].T, precision=jax.lax.Precision.HIGHEST) + p["hb"]


if __name__ == "__main__":
    H = W = 64        # DQN(h=64, w=64, outputs=4): 64 -> 29 -> 12 -> 3 spatial
    OUTPUTS = 4
    BATCH = 2

    key = jax.random.PRNGKey(0)
    pkey, xkey = jax.random.split(key)
    params = init_params(H, W, OUTPUTS, pkey)
    convw = _conv_size_out(_conv_size_out(_conv_size_out(W)))
    convh = _conv_size_out(_conv_size_out(_conv_size_out(H)))
    prepared = prepare_params(params, convh, convw)

    x = jax.random.normal(xkey, (BATCH, 3, H, W), jnp.float32)   # NCHW input

    fwd = jax.jit(dqn_forward, static_argnums=(2,))
    out = jax.block_until_ready(fwd(x, prepared, OUTPUTS))
    assert out.shape == (BATCH, OUTPUTS), out.shape

    ref = jax.block_until_ready(_reference_forward(x, params))
    err = float(jnp.max(jnp.abs(out - ref)))
    # bf16 GEMM operands with f32 accumulation -> relaxed tolerance vs the
    # f32 HIGHEST-precision reference (deliberate precision change).
    assert jnp.allclose(out, ref, rtol=2e-2, atol=2e-2), err

    print("KERNEL_OK")
</pallas_src>

<mosaic_0001>
module attributes {stable_mosaic.version = 11 : i64} {
  func.func @_conv_bn_relu_kernel(%arg0: i32, %arg1: memref<512x147xbf16, #tpu.memory_space<vmem>>, %arg2: memref<147x128xbf16, #tpu.memory_space<vmem>>, %arg3: memref<1x128xf32, #tpu.memory_space<vmem>>, %arg4: memref<512x128xbf16, #tpu.memory_space<vmem>>) attributes {dimension_semantics = [#tpu.dimension_semantics<parallel>], iteration_bounds = array<i64: 4>, scalar_prefetch = 0 : i64, scratch_operands = 0 : i64, tpu.core_type = #tpu.core_type<tc>, window_params = [{transform_indices = @transform_0, window_bounds = array<i64: 512, 147>}, {pipeline_mode = #tpu.pipeline_mode<synchronous>, transform_indices = @transform_1, window_bounds = array<i64: 147, 128>}, {pipeline_mode = #tpu.pipeline_mode<synchronous>, transform_indices = @transform_2, window_bounds = array<i64: 1, 128>}, {transform_indices = @transform_3, window_bounds = array<i64: 512, 128>}]} {
    %c0 = arith.constant 0 : index
    %c0_0 = arith.constant 0 : index
    %0 = vector.load %arg1[%c0, %c0_0] : memref<512x147xbf16, #tpu.memory_space<vmem>>, vector<512x147xbf16>
    %c0_1 = arith.constant 0 : index
    %c0_2 = arith.constant 0 : index
    %1 = vector.load %arg2[%c0_1, %c0_2] : memref<147x128xbf16, #tpu.memory_space<vmem>>, vector<147x128xbf16>
    %cst = arith.constant dense<0.000000e+00> : vector<512x128xf32>
    %2 = tpu.matmul %0, %1, %cst {dimension_numbers = #tpu.dot_dimension_numbers<[1], [0], [0], [1], [0, 0, 1, 1], [], []>} : vector<512x147xbf16>, vector<147x128xbf16>, vector<512x128xf32> -> vector<512x128xf32>
    %c0_3 = arith.constant 0 : index
    %c0_4 = arith.constant 0 : index
    %3 = vector.load %arg3[%c0_3, %c0_4] : memref<1x128xf32, #tpu.memory_space<vmem>>, vector<1x128xf32>
    %4 = vector.broadcast %3 : vector<1x128xf32> to vector<512x128xf32>
    %5 = arith.addf %2, %4 : vector<512x128xf32>
    %cst_5 = arith.constant 0.000000e+00 : f32
    %6 = vector.broadcast %cst_5 : f32 to vector<512x128xf32>
    %7 = arith.maximumf %5, %6 : vector<512x128xf32>
    %8 = arith.truncf %7 : vector<512x128xf32> to vector<512x128xbf16>
    %c0_6 = arith.constant 0 : index
    %c0_7 = arith.constant 0 : index
    %9 = vector.load %arg4[%c0_6, %c0_7] : memref<512x128xbf16, #tpu.memory_space<vmem>>, vector<512x128xbf16>
    tpu.vector_store %arg4[%c0_6, %c0_7], %8 {strides = array<i32>} : memref<512x128xbf16, #tpu.memory_space<vmem>>, vector<512x128xbf16>,
    return
  }
  func.func @transform_0(%arg0: i32) -> (i32, i32) {
    %c0_i32 = arith.constant 0 : i32
    %c0_i32_0 = arith.constant 0 : i32
    return %arg0, %c0_i32 : i32, i32
  }
  func.func @transform_1(%arg0: i32) -> (i32, i32) {
    %c0_i32 = arith.constant 0 : i32
    %c0_i32_0 = arith.constant 0 : i32
    %c0_i32_1 = arith.constant 0 : i32
    return %c0_i32, %c0_i32_0 : i32, i32
  }
  func.func @transform_2(%arg0: i32) -> (i32, i32) {
    %c0_i32 = arith.constant 0 : i32
    %c0_i32_0 = arith.constant 0 : i32
    %c0_i32_1 = arith.constant 0 : i32
    return %c0_i32, %c0_i32_0 : i32, i32
  }
  func.func @transform_3(%arg0: i32) -> (i32, i32) {
    %c0_i32 = arith.constant 0 : i32
    %c0_i32_0 = arith.constant 0 : i32
    return %arg0, %c0_i32 : i32, i32
  }
}

module attributes {stable_mosaic.version = 11 : i64} {
  func.func @_conv_bn_relu_kernel(%arg0: i32, %arg1: memref<144x896xbf16, #tpu.memory_space<vmem>>, %arg2: memref<896x128xbf16, #tpu.memory_space<vmem>>, %arg3: memref<1x128xf32, #tpu.memory_space<vmem>>, %arg4: memref<144x128xbf16, #tpu.memory_space<vmem>>) attributes {dimension_semantics = [#tpu.dimension_semantics<parallel>], iteration_bounds = array<i64: 2>, scalar_prefetch = 0 : i64, scratch_operands = 0 : i64, tpu.core_type = #tpu.core_type<tc>, window_params = [{transform_indices = @transform_0, window_bounds = array<i64: 144, 896>}, {pipeline_mode = #tpu.pipeline_mode<synchronous>, transform_indices = @transform_1, window_bounds = array<i64: 896, 128>}, {pipeline_mode = #tpu.pipeline_mode<synchronous>, transform_indices = @transform_2, window_bounds = array<i64: 1, 128>}, {transform_indices = @transform_3, window_bounds = array<i64: 144, 128>}]} {
    %c0 = arith.constant 0 : index
    %c0_0 = arith.constant 0 : index
    %0 = vector.load %arg1[%c0, %c0_0] : memref<144x896xbf16, #tpu.memory_space<vmem>>, vector<144x896xbf16>
    %c0_1 = arith.constant 0 : index
    %c0_2 = arith.constant 0 : index
    %1 = vector.load %arg2[%c0_1, %c0_2] : memref<896x128xbf16, #tpu.memory_space<vmem>>, vector<896x128xbf16>
    %cst = arith.constant dense<0.000000e+00> : vector<144x128xf32>
    %2 = tpu.matmul %0, %1, %cst {dimension_numbers = #tpu.dot_dimension_numbers<[1], [0], [0], [1], [0, 0, 1, 1], [], []>} : vector<144x896xbf16>, vector<896x128xbf16>, vector<144x128xf32> -> vector<144x128xf32>
    %c0_3 = arith.constant 0 : index
    %c0_4 = arith.constant 0 : index
    %3 = vector.load %arg3[%c0_3, %c0_4] : memref<1x128xf32, #tpu.memory_space<vmem>>, vector<1x128xf32>
    %4 = vector.broadcast %3 : vector<1x128xf32> to vector<144x128xf32>
    %5 = arith.addf %2, %4 : vector<144x128xf32>
    %cst_5 = arith.constant 0.000000e+00 : f32
    %6 = vector.broadcast %cst_5 : f32 to vector<144x128xf32>
    %7 = arith.maximumf %5, %6 : vector<144x128xf32>
    %8 = arith.truncf %7 : vector<144x128xf32> to vector<144x128xbf16>
    %c0_6 = arith.constant 0 : index
    %c0_7 = arith.constant 0 : index
    %9 = vector.load %arg4[%c0_6, %c0_7] : memref<144x128xbf16, #tpu.memory_space<vmem>>, vector<144x128xbf16>
    tpu.vector_store %arg4[%c0_6, %c0_7], %8 {strides = array<i32>} : memref<144x128xbf16, #tpu.memory_space<vmem>>, vector<144x128xbf16>,
    return
  }
  func.func @transform_0(%arg0: i32) -> (i32, i32) {
    %c0_i32 = arith.constant 0 : i32
    %c0_i32_0 = arith.constant 0 : i32
    return %arg0, %c0_i32 : i32, i32
  }
  func.func @transform_1(%arg0: i32) -> (i32, i32) {
    %c0_i32 = arith.constant 0 : i32
    %c0_i32_0 = arith.constant 0 : i32
    %c0_i32_1 = arith.constant 0 : i32
    return %c0_i32, %c0_i32_0 : i32, i32
  }
  func.func @transform_2(%arg0: i32) -> (i32, i32) {
    %c0_i32 = arith.constant 0 : i32
    %c0_i32_0 = arith.constant 0 : i32
    %c0_i32_1 = arith.constant 0 : i32
    return %c0_i32, %c0_i32_0 : i32, i32
  }
  func.func @transform_3(%arg0: i32) -> (i32, i32) {
    %c0_i32 = arith.constant 0 : i32
    %c0_i32_0 = arith.constant 0 : i32
    return %arg0, %c0_i32 : i32, i32
  }
}

module attributes {stable_mosaic.version = 11 : i64} {
  func.func @kernel(%arg0: i32, %arg1: memref<72x1664xbf16, #tpu.memory_space<vmem>>, %arg2: memref<1664x128xbf16, #tpu.memory_space<vmem>>, %arg3: memref<1x128xf32, #tpu.memory_space<vmem>>, %arg4: memref<9x128x128xbf16, #tpu.memory_space<vmem>>, %arg5: memref<1x128xf32, #tpu.memory_space<vmem>>, %arg6: memref<8x128xf32, #tpu.memory_space<vmem>>) attributes {dimension_semantics = [#tpu.dimension_semantics<arbitrary>], iteration_bounds = array<i64: 1>, scalar_prefetch = 0 : i64, scratch_operands = 0 : i64, tpu.core_type = #tpu.core_type<tc>, window_params = [{pipeline_mode = #tpu.pipeline_mode<synchronous>, transform_indices = @transform_0, window_bounds = array<i64: 72, 1664>}, {pipeline_mode = #tpu.pipeline_mode<synchronous>, transform_indices = @transform_1, window_bounds = array<i64: 1664, 128>}, {pipeline_mode = #tpu.pipeline_mode<synchronous>, transform_indices = @transform_2, window_bounds = array<i64: 1, 128>}, {pipeline_mode = #tpu.pipeline_mode<synchronous>, transform_indices = @transform_3, window_bounds = array<i64: 9, 128, 128>}, {pipeline_mode = #tpu.pipeline_mode<synchronous>, transform_indices = @transform_4, window_bounds = array<i64: 1, 128>}, {pipeline_mode = #tpu.pipeline_mode<synchronous>, transform_indices = @transform_5, window_bounds = array<i64: 8, 128>}]} {
    %c0 = arith.constant 0 : index
    %c0_0 = arith.constant 0 : index
    %0 = vector.load %arg1[%c0, %c0_0] : memref<72x1664xbf16, #tpu.memory_space<vmem>>, vector<72x1664xbf16>
    %c0_1 = arith.constant 0 : index
    %c0_2 = arith.constant 0 : index
    %1 = vector.load %arg2[%c0_1, %c0_2] : memref<1664x128xbf16, #tpu.memory_space<vmem>>, vector<1664x128xbf16>
    %cst = arith.constant dense<0.000000e+00> : vector<72x128xf32>
    %2 = tpu.matmul %0, %1, %cst {dimension_numbers = #tpu.dot_dimension_numbers<[1], [0], [0], [1], [0, 0, 1, 1], [], []>} : vector<72x1664xbf16>, vector<1664x128xbf16>, vector<72x128xf32> -> vector<72x128xf32>
    %c0_3 = arith.constant 0 : index
    %c0_4 = arith.constant 0 : index
    %3 = vector.load %arg3[%c0_3, %c0_4] : memref<1x128xf32, #tpu.memory_space<vmem>>, vector<1x128xf32>
    %4 = vector.broadcast %3 : vector<1x128xf32> to vector<72x128xf32>
    %5 = arith.addf %2, %4 : vector<72x128xf32>
    %cst_5 = arith.constant 0.000000e+00 : f32
    %6 = vector.broadcast %cst_5 : f32 to vector<72x128xf32>
    %7 = arith.maximumf %5, %6 : vector<72x128xf32>
    %8 = arith.truncf %7 : vector<72x128xf32> to vector<72x128xbf16>
    %cst_6 = arith.constant 0.000000e+00 : f32
    %9 = vector.broadcast %cst_6 : f32 to vector<8x128xf32>
    %10 = vector.extract_strided_slice %8 {offsets = [0, 0], sizes = [8, 128], strides = [1, 1]} : vector<72x128xbf16> to vector<8x128xbf16>
    %c0_7 = arith.constant 0 : index
    %c0_8 = arith.constant 0 : index
    %c0_9 = arith.constant 0 : index
    %11 = vector.load %arg4[%c0_7, %c0_8, %c0_9] : memref<9x128x128xbf16, #tpu.memory_space<vmem>>, vector<1x128x128xbf16>
    %12 = vector.shape_cast %11 : vector<1x128x128xbf16> to vector<128x128xbf16>
    %cst_10 = arith.constant dense<0.000000e+00> : vector<8x128xf32>
    %13 = tpu.matmul %10, %12, %cst_10 {dimension_numbers = #tpu.dot_dimension_numbers<[1], [0], [0], [1], [0, 0, 1, 1], [], []>} : vector<8x128xbf16>, vector<128x128xbf16>, vector<8x128xf32> -> vector<8x128xf32>
    %14 = arith.addf %9, %13 : vector<8x128xf32>
    %15 = vector.extract_strided_slice %8 {offsets = [8, 0], sizes = [8, 128], strides = [1, 1]} : vector<72x128xbf16> to vector<8x128xbf16>
    %c1 = arith.constant 1 : index
    %c0_11 = arith.constant 0 : index
    %c0_12 = arith.constant 0 : index
    %16 = vector.load %arg4[%c1, %c0_11, %c0_12] : memref<9x128x128xbf16, #tpu.memory_space<vmem>>, vector<1x128x128xbf16>
    %17 = vector.shape_cast %16 : vector<1x128x128xbf16> to vector<128x128xbf16>
    %cst_13 = arith.constant dense<0.000000e+00> : vector<8x128xf32>
    %18 = tpu.matmul %15, %17, %cst_13 {dimension_numbers = #tpu.dot_dimension_numbers<[1], [0], [0], [1], [0, 0, 1, 1], [], []>} : vector<8x128xbf16>, vector<128x128xbf16>, vector<8x128xf32> -> vector<8x128xf32>
    %19 = arith.addf %14, %18 : vector<8x128xf32>
    %20 = vector.extract_strided_slice %8 {offsets = [16, 0], sizes = [8, 128], strides = [1, 1]} : vector<72x128xbf16> to vector<8x128xbf16>
    %c2 = arith.constant 2 : index
    %c0_14 = arith.constant 0 : index
    %c0_15 = arith.constant 0 : index
    %21 = vector.load %arg4[%c2, %c0_14, %c0_15] : memref<9x128x128xbf16, #tpu.memory_space<vmem>>, vector<1x128x128xbf16>
    %22 = vector.shape_cast %21 : vector<1x128x128xbf16> to vector<128x128xbf16>
    %cst_16 = arith.constant dense<0.000000e+00> : vector<8x128xf32>
    %23 = tpu.matmul %20, %22, %cst_16 {dimension_numbers = #tpu.dot_dimension_numbers<[1], [0], [0], [1], [0, 0, 1, 1], [], []>} : vector<8x128xbf16>, vector<128x128xbf16>, vector<8x128xf32> -> vector<8x128xf32>
    %24 = arith.addf %19, %23 : vector<8x128xf32>
    %25 = vector.extract_strided_slice %8 {offsets = [24, 0], sizes = [8, 128], strides = [1, 1]} : vector<72x128xbf16> to vector<8x128xbf16>
    %c3 = arith.constant 3 : index
    %c0_17 = arith.constant 0 : index
    %c0_18 = arith.constant 0 : index
    %26 = vector.load %arg4[%c3, %c0_17, %c0_18] : memref<9x128x128xbf16, #tpu.memory_space<vmem>>, vector<1x128x128xbf16>
    %27 = vector.shape_cast %26 : vector<1x128x128xbf16> to vector<128x128xbf16>
    %cst_19 = arith.constant dense<0.000000e+00> : vector<8x128xf32>
    %28 = tpu.matmul %25, %27, %cst_19 {dimension_numbers = #tpu.dot_dimension_numbers<[1], [0], [0], [1], [0, 0, 1, 1], [], []>} : vector<8x128xbf16>, vector<128x128xbf16>, vector<8x128xf32> -> vector<8x128xf32>
    %29 = arith.addf %24, %28 : vector<8x128xf32>
    %30 = vector.extract_strided_slice %8 {offsets = [32, 0], sizes = [8, 128], strides = [1, 1]} : vector<72x128xbf16> to vector<8x128xbf16>
    %c4 = arith.constant 4 : index
    %c0_20 = arith.constant 0 : index
    %c0_21 = arith.constant 0 : index
    %31 = vector.load %arg4[%c4, %c0_20, %c0_21] : memref<9x128x128xbf16, #tpu.memory_space<vmem>>, vector<1x128x128xbf16>
    %32 = vector.shape_cast %31 : vector<1x128x128xbf16> to vector<128x128xbf16>
    %cst_22 = arith.constant dense<0.000000e+00> : vector<8x128xf32>
    %33 = tpu.matmul %30, %32, %cst_22 {dimension_numbers = #tpu.dot_dimension_numbers<[1], [0], [0], [1], [0, 0, 1, 1], [], []>} : vector<8x128xbf16>, vector<128x128xbf16>, vector<8x128xf32> -> vector<8x128xf32>
    %34 = arith.addf %29, %33 : vector<8x128xf32>
    %35 = vector.extract_strided_slice %8 {offsets = [40, 0], sizes = [8, 128], strides = [1, 1]} : vector<72x128xbf16> to vector<8x128xbf16>
    %c5 = arith.constant 5 : index
    %c0_23 = arith.constant 0 : index
    %c0_24 = arith.constant 0 : index
    %36 = vector.load %arg4[%c5, %c0_23, %c0_24] : memref<9x128x128xbf16, #tpu.memory_space<vmem>>, vector<1x128x128xbf16>
    %37 = vector.shape_cast %36 : vector<1x128x128xbf16> to vector<128x128xbf16>
    %cst_25 = arith.constant dense<0.000000e+00> : vector<8x128xf32>
    %38 = tpu.matmul %35, %37, %cst_25 {dimension_numbers = #tpu.dot_dimension_numbers<[1], [0], [0], [1], [0, 0, 1, 1], [], []>} : vector<8x128xbf16>, vector<128x128xbf16>, vector<8x128xf32> -> vector<8x128xf32>
    %39 = arith.addf %34, %38 : vector<8x128xf32>
    %40 = vector.extract_strided_slice %8 {offsets = [48, 0], sizes = [8, 128], strides = [1, 1]} : vector<72x128xbf16> to vector<8x128xbf16>
    %c6 = arith.constant 6 : index
    %c0_26 = arith.constant 0 : index
    %c0_27 = arith.constant 0 : index
    %41 = vector.load %arg4[%c6, %c0_26, %c0_27] : memref<9x128x128xbf16, #tpu.memory_space<vmem>>, vector<1x128x128xbf16>
    %42 = vector.shape_cast %41 : vector<1x128x128xbf16> to vector<128x128xbf16>
    %cst_28 = arith.constant dense<0.000000e+00> : vector<8x128xf32>
    %43 = tpu.matmul %40, %42, %cst_28 {dimension_numbers = #tpu.dot_dimension_numbers<[1], [0], [0], [1], [0, 0, 1, 1], [], []>} : vector<8x128xbf16>, vector<128x128xbf16>, vector<8x128xf32> -> vector<8x128xf32>
    %44 = arith.addf %39, %43 : vector<8x128xf32>
    %45 = vector.extract_strided_slice %8 {offsets = [56, 0], sizes = [8, 128], strides = [1, 1]} : vector<72x128xbf16> to vector<8x128xbf16>
    %c7 = arith.constant 7 : index
    %c0_29 = arith.constant 0 : index
    %c0_30 = arith.constant 0 : index
    %46 = vector.load %arg4[%c7, %c0_29, %c0_30] : memref<9x128x128xbf16, #tpu.memory_space<vmem>>, vector<1x128x128xbf16>
    %47 = vector.shape_cast %46 : vector<1x128x128xbf16> to vector<128x128xbf16>
    %cst_31 = arith.constant dense<0.000000e+00> : vector<8x128xf32>
    %48 = tpu.matmul %45, %47, %cst_31 {dimension_numbers = #tpu.dot_dimension_numbers<[1], [0], [0], [1], [0, 0, 1, 1], [], []>} : vector<8x128xbf16>, vector<128x128xbf16>, vector<8x128xf32> -> vector<8x128xf32>
    %49 = arith.addf %44, %48 : vector<8x128xf32>
    %50 = vector.extract_strided_slice %8 {offsets = [64, 0], sizes = [8, 128], strides = [1, 1]} : vector<72x128xbf16> to vector<8x128xbf16>
    %c8 = arith.constant 8 : index
    %c0_32 = arith.constant 0 : index
    %c0_33 = arith.constant 0 : index
    %51 = vector.load %arg4[%c8, %c0_32, %c0_33] : memref<9x128x128xbf16, #tpu.memory_space<vmem>>, vector<1x128x128xbf16>
    %52 = vector.shape_cast %51 : vector<1x128x128xbf16> to vector<128x128xbf16>
    %cst_34 = arith.constant dense<0.000000e+00> : vector<8x128xf32>
    %53 = tpu.matmul %50, %52, %cst_34 {dimension_numbers = #tpu.dot_dimension_numbers<[1], [0], [0], [1], [0, 0, 1, 1], [], []>} : vector<8x128xbf16>, vector<128x128xbf16>, vector<8x128xf32> -> vector<8x128xf32>
    %54 = arith.addf %49, %53 : vector<8x128xf32>
    %c0_35 = arith.constant 0 : index
    %c0_36 = arith.constant 0 : index
    %55 = vector.load %arg5[%c0_35, %c0_36] : memref<1x128xf32, #tpu.memory_space<vmem>>, vector<1x128xf32>
    %56 = vector.broadcast %55 : vector<1x128xf32> to vector<8x128xf32>
    %57 = arith.addf %54, %56 : vector<8x128xf32>
    %c0_37 = arith.constant 0 : index
    %c0_38 = arith.constant 0 : index
    %58 = vector.load %arg6[%c0_37, %c0_38] : memref<8x128xf32, #tpu.memory_space<vmem>>, vector<8x128xf32>
    tpu.vector_store %arg6[%c0_37, %c0_38], %57 {strides = array<i32>} : memref<8x128xf32, #tpu.memory_space<vmem>>, vector<8x128xf32>,
    return
  }
  func.func @transform_0(%arg0: i32) -> (i32, i32) {
    %c0_i32 = arith.constant 0 : i32
    %c0_i32_0 = arith.constant 0 : i32
    %c0_i32_1 = arith.constant 0 : i32
    return %c0_i32, %c0_i32_0 : i32, i32
  }
  func.func @transform_1(%arg0: i32) -> (i32, i32) {
    %c0_i32 = arith.constant 0 : i32
    %c0_i32_0 = arith.constant 0 : i32
    %c0_i32_1 = arith.constant 0 : i32
    return %c0_i32, %c0_i32_0 : i32, i32
  }
  func.func @transform_2(%arg0: i32) -> (i32, i32) {
    %c0_i32 = arith.constant 0 : i32
    %c0_i32_0 = arith.constant 0 : i32
    %c0_i32_1 = arith.constant 0 : i32
    return %c0_i32, %c0_i32_0 : i32, i32
  }
  func.func @transform_3(%arg0: i32) -> (i32, i32, i32) {
    %c0_i32 = arith.constant 0 : i32
    %c0_i32_0 = arith.constant 0 : i32
    %c0_i32_1 = arith.constant 0 : i32
    %c0_i32_2 = arith.constant 0 : i32
    return %c0_i32, %c0_i32_0, %c0_i32_1 : i32, i32, i32
  }
  func.func @transform_4(%arg0: i32) -> (i32, i32) {
    %c0_i32 = arith.constant 0 : i32
    %c0_i32_0 = arith.constant 0 : i32
    %c0_i32_1 = arith.constant 0 : i32
    return %c0_i32, %c0_i32_0 : i32, i32
  }
  func.func @transform_5(%arg0: i32) -> (i32, i32) {
    %c0_i32 = arith.constant 0 : i32
    %c0_i32_0 = arith.constant 0 : i32
    %c0_i32_1 = arith.constant 0 : i32
    return %c0_i32, %c0_i32_0 : i32, i32
  }
}

</mosaic_0001>

<llo_original>
// kernel: dqn_forward.3
$region0: #{dqn_forward.3}
  #allocation0 [shape = 'u32[]', space=smem, size = 0x4, offset = 0x4, fixed_abs, tag = 'smem constant byte address 0x4 - core index']
  #allocation1 [shape = 'u32[72,128]{1,0:T(1,128)}', space=vmem, size = 0x9000, scoped, tag = 'internal scratch']
  %s0 = inlined_call_operand.vmem [shape: bf16[1682,147], index: 0, kind: input, shape index: {}]
  %s1 = inlined_call_operand.vmem [shape: bf16[147,128], index: 1, kind: input, shape index: {}]
  %s2 = inlined_call_operand.vmem [shape: f32[1,128], index: 2, kind: input, shape index: {}]
  %s3 = inlined_call_operand.vmem [shape: bf16[1682,128], index: 3, kind: output, shape index: {}]
  %s4 = sld [smem:[#allocation0]]
  $region89: #{dqn_forward.3} parent=0
    _
  %s6 = ssub.s32 1, %s4
  %s7 = scalar_select 0, %s6, %s4
  $region1: #{dqn_forward.3} parent=0
    #allocation2 [shape = 'u8[262144]{0}', space=vmem, size = 0x40000, scoped, tag = 'output window, operand 0']
    loop: start=0, step=1, limit=6
    $region2: #{dqn_forward.3} parent=1 // loop_pre_header
      _
    $region3: #{dqn_forward.3} parent=1 // loop_header
      %s9 = sphi 0, %s13
      %p10 = scmp.ge.s32.totalorder %s9, 6
      %s19 = sphi 0, %s21
      %s22 = sphi 0, %s19
      %s23 = sphi 0, %s22
      %s39 = sphi 0, %s23
      %s43 = sphi 0, %s43
      %s45 = sphi 0, %s43
      %s46 = sphi 0, %s45
      %s60 = sphi 0, %s46
      %s64 = sphi 0, %s64
      %s66 = sphi 0, %s64
      %s67 = sphi 0, %s66
      %s81 = sphi 0, %s67
      %s87 = sphi 0, %s89
      %s90 = sphi 0, %s87
      %s91 = sphi 0, %s90
      %s107 = sphi 0, %s91
    $region4: #{dqn_forward.3} parent=1 // loop_header_branch
      %12 = sbr.rel (%p10) target = $region8
    $region5: #{dqn_forward.3} parent=1 // loop_body
      %s14 = ssub.s32 %s9, 1
      %s15 = ssub.s32 %s9, 2
      %s16 = sadd.s32 %s9, 1
      %s17 = ssub.s32 %s9, %s16
      %p18 = scmp.eq.s32.totalorder %s17, 0
      %s20 = sadd.s32 %s19, 1
      %s21 = scalar_select %p18, %s19, %s20
      %p24 = pneg %p18
      %p25 = scmp.eq.s32.totalorder %s9, 3
      %p26 = por %p24, %p25
      %p27 = scmp.ne.s32.totalorder %s19, %s22
      %p28 = scmp.eq.s32.totalorder %s9, 0
      %p29 = por %p27, %p28
      %p30 = scmp.ne.s32.totalorder %s19, %s22
      %p31 = scmp.eq.s32.totalorder %s14, 3
      %p32 = por %p30, %p31
      %p33 = scmp.ne.s32.totalorder %s22, %s23
      %p34 = scmp.eq.s32.totalorder %s14, 0
      %p35 = por %p33, %p34
      %p36 = scmp.ne.s32.totalorder %s22, %s23
      %p37 = scmp.eq.s32.totalorder %s15, 3
      %p38 = por %p36, %p37
      %p40 = scmp.ne.s32.totalorder %s23, %s39
      %p41 = scmp.eq.s32.totalorder %s15, 0
      %p42 = por %p40, %p41
      %s44 = sadd.s32 %s43, 1
      %p47 = scmp.eq.s32.totalorder %s9, 3
      %p48 = scmp.ne.s32.totalorder %s43, %s45
      %p49 = scmp.eq.s32.totalorder %s9, 0
      %p50 = por %p48, %p49
      %p51 = scmp.ne.s32.totalorder %s43, %s45
      %p52 = scmp.eq.s32.totalorder %s14, 3
      %p53 = por %p51, %p52
      %p54 = scmp.ne.s32.totalorder %s45, %s46
      %p55 = scmp.eq.s32.totalorder %s14, 0
      %p56 = por %p54, %p55
      %p57 = scmp.ne.s32.totalorder %s45, %s46
      %p58 = scmp.eq.s32.totalorder %s15, 3
      %p59 = por %p57, %p58
      %p61 = scmp.ne.s32.totalorder %s46, %s60
      %p62 = scmp.eq.s32.totalorder %s15, 0
      %p63 = por %p61, %p62
      %s65 = sadd.s32 %s64, 1
      %p68 = scmp.eq.s32.totalorder %s9, 3
      %p69 = scmp.ne.s32.totalorder %s64, %s66
      %p70 = scmp.eq.s32.totalorder %s9, 0
      %p71 = por %p69, %p70
      %p72 = scmp.ne.s32.totalorder %s64, %s66
      %p73 = scmp.eq.s32.totalorder %s14, 3
      %p74 = por %p72, %p73
      %p75 = scmp.ne.s32.totalorder %s66, %s67
      %p76 = scmp.eq.s32.totalorder %s14, 0
      %p77 = por %p75, %p76
      %p78 = scmp.ne.s32.totalorder %s66, %s67
      %p79 = scmp.eq.s32.totalorder %s15, 3
      %p80 = por %p78, %p79
      %p82 = scmp.ne.s32.totalorder %s67, %s81
      %p83 = scmp.eq.s32.totalorder %s15, 0
      %p84 = por %p82, %p83
      %s85 = ssub.s32 %s9, %s16
      %p86 = scmp.eq.s32.totalorder %s85, 0
      %s88 = sadd.s32 %s87, 1
      %s89 = scalar_select %p86, %s87, %s88
      %p92 = pneg %p86
      %p93 = scmp.eq.s32.totalorder %s9, 3
      %p94 = por %p92, %p93
      %p95 = scmp.ne.s32.totalorder %s87, %s90
      %p96 = scmp.eq.s32.totalorder %s9, 0
      %p97 = por %p95, %p96
      %p98 = scmp.ne.s32.totalorder %s87, %s90
      %p99 = scmp.eq.s32.totalorder %s14, 3
      %p100 = por %p98, %p99
      %p101 = scmp.ne.s32.totalorder %s90, %s91
      %p102 = scmp.eq.s32.totalorder %s14, 0
      %p103 = por %p101, %p102
      %p104 = scmp.ne.s32.totalorder %s90, %s91
      %p105 = scmp.eq.s32.totalorder %s15, 3
      %p106 = por %p104, %p105
      %p108 = scmp.ne.s32.totalorder %s91, %s107
      %p109 = scmp.eq.s32.totalorder %s15, 0
      %p110 = por %p108, %p109
      %p111 = scmp.le.s32.totalorder 1, %s9
      %p112 = scmp.lt.s32.totalorder %s9, 5
      %p113 = pnand %p111, %p112
      %p114 = pneg %p113
      // Predicated region
      $region9: #{dqn_forward.3} parent=5 // pred_check
        _
      $region10: #{dqn_forward.3} parent=5 // pred_check_branch
        %116 = sbr.rel (%p113) target = $region12
      $region11: #{dqn_forward.3} parent=5 // pred_region
        %s117 = ssub.s32 %s9, 1
        // Predicated region
        $region13: #{dqn_forward.3} parent=11 // pred_check
          %p118 = pneg %p56
        $region14: #{dqn_forward.3} parent=11 // pred_check_branch
          %120 = sbr.rel (%p118) target = $region16
        $region15: #{dqn_forward.3} parent=11 // pred_region
          _
        $region16: #{dqn_forward.3} parent=11 // pred_fallthru
          _
        // Predicated region
        $region17: #{dqn_forward.3} parent=11 // pred_check
          %p121 = pneg %p77
        $region18: #{dqn_forward.3} parent=11 // pred_check_branch
          %123 = sbr.rel (%p121) target = $region20
        $region19: #{dqn_forward.3} parent=11 // pred_region
          _
        $region20: #{dqn_forward.3} parent=11 // pred_fallthru
          _
      $region12: #{dqn_forward.3} parent=5 // pred_fallthru
        _
      %p124 = scmp.lt.s32.totalorder %s9, 4
      // Predicated region
      $region21: #{dqn_forward.3} parent=5 // pred_check
        %p125 = pneg %p124
      $region22: #{dqn_forward.3} parent=5 // pred_check_branch
        %127 = sbr.rel (%p125) target = $region24
      $region23: #{dqn_forward.3} parent=5 // pred_region
        // Predicated region
        $region25: #{dqn_forward.3} parent=23 // pred_check
          %p128 = pneg %p29
        $region26: #{dqn_forward.3} parent=23 // pred_check_branch
          %130 = sbr.rel (%p128) target = $region28
        $region27: #{dqn_forward.3} parent=23 // pred_region
          %s131 = smul.u32 64, %s9
          %s132 = ssub.s32 211, %s131
          %p133 = scmp.lt.s32.totalorder %s132, 64
          %s134 = scalar_select %p133, %s132, 64
          %s135 = smul.u32 4, %s134
          %s136 = smul.u32 %s135, 2
          %p137 = scmp.lt.s32.totalorder %s131, 210
          %s138 = scalar_select %p137, %s131, 210
          %s139 = smul.addr %s138, 2
          %s140 = smul.addr %s139, 4
          %s141 = scalar_lea.vmem %s0, %s140
          %s142 = smul.u32 64, %s9
          %s143 = ssub.s32 211, %s142
          %p144 = scmp.lt.s32.totalorder %s143, 64
          %s145 = scalar_select %p144, %s143, 64
          %s146 = smul.u32 4, %s145
          %s147 = smul.u32 %s146, 2
        $region28: #{dqn_forward.3} parent=23 // pred_fallthru
          _
      $region24: #{dqn_forward.3} parent=5 // pred_fallthru
        _
      %p148 = scmp.le.s32.totalorder 1, %s9
      %p149 = scmp.lt.s32.totalorder %s9, 5
      %p150 = pnand %p148, %p149
      %p151 = pneg %p150
      // Predicated region
      $region29: #{dqn_forward.3} parent=5 // pred_check
        _
      $region30: #{dqn_forward.3} parent=5 // pred_check_branch
        %153 = sbr.rel (%p150) target = $region32
      $region31: #{dqn_forward.3} parent=5 // pred_region
        %s154 = ssub.s32 %s9, 1
        %s155 = smul.u32 64, %s14
        %s156 = ssub.s32 211, %s155
        %p157 = scmp.lt.s32.totalorder %s156, 64
        %s158 = scalar_select %p157, %s156, 64
        %s159 = smul.u32 4, %s158
        %s160 = smul.u32 %s159, 2
        %p161 = scmp.lt.s32.totalorder %s155, 210
        %s162 = scalar_select %p161, %s155, 210
        %s163 = smul.addr %s162, 2
        %s164 = smul.addr %s163, 4
        %s165 = scalar_lea.vmem %s0, %s164
        %p166 = pneg %p35
        %p167 = pneg %p32
        %p168 = pneg %p56
        %p169 = pneg %p53
        %p170 = pneg %p77
        %p171 = pneg %p74
        %p172 = pneg %p103
        %p173 = pneg %p100
        %s174 = sand.u32 %s90, 1
        %s175 = sand.u32 %s90, 1
        %s176 = smul.addr %s175, 256
        %s177 = scalar_lea.vmem [#allocation2], %s176
        %s178 = smul.u32 64, %s14
        %s179 = ssub.s32 211, %s178
        %p180 = scmp.lt.s32.totalorder %s179, 64
        %s181 = scalar_select %p180, %s179, 64
        %s182 = smul.u32 4, %s181
        %s183 = smul.u32 %s182, 2
        %p184 = scmp.lt.s32.totalorder %s178, 210
        %s185 = scalar_select %p184, %s178, 210
        %s186 = smul.addr %s185, 2
        %s187 = smul.addr %s186, 4
        %s188 = scalar_lea.vmem %s0, %s187
        %s189 = smul.u32 64, %s14
        %s190 = ssub.s32 211, %s189
        %p191 = scmp.lt.s32.totalorder %s190, 64
        %s192 = scalar_select %p191, %s190, 64
        %s193 = smul.u32 4, %s192
        %s194 = smul.u32 %s193, 2
        %s195 = smul.u32 64, %s14
        %s196 = ssub.s32 211, %s195
        %p197 = scmp.lt.s32.totalorder %s196, 64
        %s198 = scalar_select %p197, %s196, 64
        %s199 = smul.u32 4, %s198
        %v201 = vld [vmem:[%s188] sm:$0xff]
        %v202 = vld [vmem:[%s188 + $0x8] sm:$0xff]
        %v203 = vld [vmem:[%s188 + $0x10] sm:$0xff]
        %v204 = vld [vmem:[%s188 + $0x18] sm:$0xff]
        %v205 = vld [vmem:[%s188 + $0x20] sm:$0xff]
        %v206 = vld [vmem:[%s188 + $0x28] sm:$0xff]
        %v207 = vld [vmem:[%s188 + $0x30] sm:$0xff]
        %v208 = vld [vmem:[%s188 + $0x38] sm:$0xff]
        %v209 = vld [vmem:[%s188 + $0x40] sm:$0xff]
        %v210 = vld [vmem:[%s188 + $0x48] sm:$0xff]
        %v211 = vld [vmem:[%s188 + $0x50] sm:$0xff]
        %v212 = vld [vmem:[%s188 + $0x58] sm:$0xff]
        %v213 = vld [vmem:[%s188 + $0x60] sm:$0xff]
        %v214 = vld [vmem:[%s188 + $0x68] sm:$0xff]
        %v215 = vld [vmem:[%s188 + $0x70] sm:$0xff]
        %v216 = vld [vmem:[%s188 + $0x78] sm:$0xff]
        %v217 = vld [vmem:[%s188 + $0x80] sm:$0xff]
        %v218 = vld [vmem:[%s188 + $0x88] sm:$0xff]
        %v219 = vld [vmem:[%s188 + $0x90] sm:$0xff]
        %v220 = vld [vmem:[%s188 + $0x98] sm:$0xff]
        %v221 = vld [vmem:[%s188 + $0xa0] sm:$0xff]
        %v222 = vld [vmem:[%s188 + $0xa8] sm:$0xff]
        %v223 = vld [vmem:[%s188 + $0xb0] sm:$0xff]
        %v224 = vld [vmem:[%s188 + $0xb8] sm:$0xff]
        %v225 = vld [vmem:[%s188 + $0xc0] sm:$0xff]
        %v226 = vld [vmem:[%s188 + $0xc8] sm:$0xff]
        %v227 = vld [vmem:[%s188 + $0xd0] sm:$0xff]
        %v228 = vld [vmem:[%s188 + $0xd8] sm:$0xff]
        %v229 = vld [vmem:[%s188 + $0xe0] sm:$0xff]
        %v230 = vld [vmem:[%s188 + $0xe8] sm:$0xff]
        %v231 = vld [vmem:[%s188 + $0xf0] sm:$0xff]
        %v232 = vld [vmem:[%s188 + $0xf8] sm:$0xff]
        %v233 = vld [vmem:[%s188 + $0x100] sm:$0xff]
        %v234 = vld [vmem:[%s188 + $0x108] sm:$0xff]
        %v235 = vld [vmem:[%s188 + $0x110] sm:$0xff]
        %v236 = vld [vmem:[%s188 + $0x118] sm:$0xff]
        %v237 = vld [vmem:[%s188 + $0x120] sm:$0xff]
        %v238 = vld [vmem:[%s188 + $0x128] sm:$0xff]
        %v239 = vld [vmem:[%s188 + $0x130] sm:$0xff]
        %v240 = vld [vmem:[%s188 + $0x138] sm:$0xff]
        %v241 = vld [vmem:[%s188 + $0x140] sm:$0xff]
        %v242 = vld [vmem:[%s188 + $0x148] sm:$0xff]
        %v243 = vld [vmem:[%s188 + $0x150] sm:$0xff]
        %v244 = vld [vmem:[%s188 + $0x158] sm:$0xff]
        %v245 = vld [vmem:[%s188 + $0x160] sm:$0xff]
        %v246 = vld [vmem:[%s188 + $0x168] sm:$0xff]
        %v247 = vld [vmem:[%s188 + $0x170] sm:$0xff]
        %v248 = vld [vmem:[%s188 + $0x178] sm:$0xff]
        %v249 = vld [vmem:[%s188 + $0x180] sm:$0xff]
        %v250 = vld [vmem:[%s188 + $0x188] sm:$0xff]
        %v251 = vld [vmem:[%s188 + $0x190] sm:$0xff]
        %v252 = vld [vmem:[%s188 + $0x198] sm:$0xff]
        %v253 = vld [vmem:[%s188 + $0x1a0] sm:$0xff]
        %v254 = vld [vmem:[%s188 + $0x1a8] sm:$0xff]
        %v255 = vld [vmem:[%s188 + $0x1b0] sm:$0xff]
        %v256 = vld [vmem:[%s188 + $0x1b8] sm:$0xff]
        %v257 = vld [vmem:[%s188 + $0x1c0] sm:$0xff]
        %v258 = vld [vmem:[%s188 + $0x1c8] sm:$0xff]
        %v259 = vld [vmem:[%s188 + $0x1d0] sm:$0xff]
        %v260 = vld [vmem:[%s188 + $0x1d8] sm:$0xff]
        %v261 = vld [vmem:[%s188 + $0x1e0] sm:$0xff]
        %v262 = vld [vmem:[%s188 + $0x1e8] sm:$0xff]
        %v263 = vld [vmem:[%s188 + $0x1f0] sm:$0xff]
        %v264 = vld [vmem:[%s188 + $0x1f8] sm:$0xff]
        %v265 = vld [vmem:[%s1] sm:$0xf]
        %v266 = vld [vmem:[%s1 + $0x4] sm:$0xf]
        %v267 = vld [vmem:[%s1 + $0x8] sm:$0xf]
        %v268 = vld [vmem:[%s1 + $0xc] sm:$0xf]
        %v269 = vld [vmem:[%s1 + $0x10] sm:$0xf]
        %v270 = vld [vmem:[%s1 + $0x14] sm:$0xf]
        %v271 = vld [vmem:[%s1 + $0x18] sm:$0xf]
        %v272 = vld [vmem:[%s1 + $0x1c] sm:$0xf]
        %v273 = vld [vmem:[%s1 + $0x20] sm:$0xf]
        %v274 = vld [vmem:[%s1 + $0x24] sm:$0xf]
        %v275 = vld [vmem:[%s1 + $0x28] sm:$0xf]
        %v276 = vld [vmem:[%s1 + $0x2c] sm:$0xf]
        %v277 = vld [vmem:[%s1 + $0x30] sm:$0xf]
        %v278 = vld [vmem:[%s1 + $0x34] sm:$0xf]
        %v279 = vld [vmem:[%s1 + $0x38] sm:$0xf]
        %v280 = vld [vmem:[%s1 + $0x3c] sm:$0xf]
        %v281 = vld [vmem:[%s1 + $0x40] sm:$0xf]
        %v282 = vld [vmem:[%s1 + $0x44] sm:$0xf]
        %v283 = vld [vmem:[%s1 + $0x48] sm:$0x3]
        %v284 = vld [vmem:[%s2] sm:$0x1]
        %v286 = vperm.slane %v284, 0
        %v352 = vunpack.c.l.b16 %v201
        %v353 = vunpack.c.h.b16 %v201
        %v354 = vunpack.c.l.b16 %v202
        %v355 = vunpack.c.h.b16 %v202
        %v356 = vunpack.c.l.b16 %v203
        %v357 = vunpack.c.h.b16 %v203
        %v358 = vunpack.c.l.b16 %v204
        %v359 = vunpack.c.h.b16 %v204
        %v360 = vunpack.c.l.b16 %v205
        %v361 = vunpack.c.h.b16 %v205
        %v362 = vunpack.c.l.b16 %v206
        %v363 = vunpack.c.h.b16 %v206
        %v364 = vunpack.c.l.b16 %v207
        %v365 = vunpack.c.h.b16 %v207
        %v366 = vunpack.c.l.b16 %v208
        %v367 = vunpack.c.h.b16 %v208
        %v368 = vunpack.c.l.b16 %v209
        %v369 = vunpack.c.h.b16 %v209
        %v370 = vunpack.c.l.b16 %v210
        %v371 = vunpack.c.h.b16 %v210
        %v372 = vunpack.c.l.b16 %v211
        %v373 = vunpack.c.h.b16 %v211
        %v374 = vunpack.c.l.b16 %v212
        %v375 = vunpack.c.h.b16 %v212
        %v376 = vunpack.c.l.b16 %v213
        %v377 = vunpack.c.h.b16 %v213
        %v378 = vunpack.c.l.b16 %v214
        %v379 = vunpack.c.h.b16 %v214
        %v380 = vunpack.c.l.b16 %v215
        %v381 = vunpack.c.h.b16 %v215
        %v382 = vunpack.c.l.b16 %v216
        %v383 = vunpack.c.h.b16 %v216
        %v384 = vunpack.c.l.b16 %v217
        %v385 = vunpack.c.h.b16 %v217
        %v386 = vunpack.c.l.b16 %v218
        %v387 = vunpack.c.h.b16 %v218
        %v388 = vunpack.c.l.b16 %v219
        %v389 = vunpack.c.h.b16 %v219
        %v390 = vunpack.c.l.b16 %v220
        %v391 = vunpack.c.h.b16 %v220
        %v392 = vunpack.c.l.b16 %v221
        %v393 = vunpack.c.h.b16 %v221
        %v394 = vunpack.c.l.b16 %v222
        %v395 = vunpack.c.h.b16 %v222
        %v396 = vunpack.c.l.b16 %v223
        %v397 = vunpack.c.h.b16 %v223
        %v398 = vunpack.c.l.b16 %v224
        %v399 = vunpack.c.h.b16 %v224
        %v400 = vunpack.c.l.b16 %v225
        %v401 = vunpack.c.h.b16 %v225
        %v402 = vunpack.c.l.b16 %v226
        %v403 = vunpack.c.h.b16 %v226
        %v404 = vunpack.c.l.b16 %v227
        %v405 = vunpack.c.h.b16 %v227
        %v406 = vunpack.c.l.b16 %v228
        %v407 = vunpack.c.h.b16 %v228
        %v408 = vunpack.c.l.b16 %v229
        %v409 = vunpack.c.h.b16 %v229
        %v410 = vunpack.c.l.b16 %v230
        %v411 = vunpack.c.h.b16 %v230
        %v412 = vunpack.c.l.b16 %v231
        %v413 = vunpack.c.h.b16 %v231
        %v414 = vunpack.c.l.b16 %v232
        %v415 = vunpack.c.h.b16 %v232
        %v416 = vunpack.c.l.b16 %v233
        %v417 = vunpack.c.h.b16 %v233
        %v418 = vunpack.c.l.b16 %v234
        %v419 = vunpack.c.h.b16 %v234
        %v420 = vunpack.c.l.b16 %v235
        %v421 = vunpack.c.h.b16 %v235
        %v422 = vunpack.c.l.b16 %v236
        %v423 = vunpack.c.h.b16 %v236
        %v424 = vunpack.c.l.b16 %v237
        %v425 = vunpack.c.h.b16 %v237
        %v426 = vunpack.c.l.b16 %v238
        %v427 = vunpack.c.h.b16 %v238
        %v428 = vunpack.c.l.b16 %v239
        %v429 = vunpack.c.h.b16 %v239
        %v430 = vunpack.c.l.b16 %v240
        %v431 = vunpack.c.h.b16 %v240
        %v432 = vunpack.c.l.b16 %v241
        %v433 = vunpack.c.h.b16 %v241
        %v434 = vunpack.c.l.b16 %v242
        %v435 = vunpack.c.h.b16 %v242
        %v436 = vunpack.c.l.b16 %v243
        %v437 = vunpack.c.h.b16 %v243
        %v438 = vunpack.c.l.b16 %v244
        %v439 = vunpack.c.h.b16 %v244
        %v440 = vunpack.c.l.b16 %v245
        %v441 = vunpack.c.h.b16 %v245
        %v442 = vunpack.c.l.b16 %v246
        %v443 = vunpack.c.h.b16 %v246
        %v444 = vunpack.c.l.b16 %v247
        %v445 = vunpack.c.h.b16 %v247
        %v446 = vunpack.c.l.b16 %v248
        %v447 = vunpack.c.h.b16 %v248
        %v448 = vunpack.c.l.b16 %v249
        %v449 = vunpack.c.h.b16 %v249
        %v450 = vunpack.c.l.b16 %v250
        %v451 = vunpack.c.h.b16 %v250
        %v452 = vunpack.c.l.b16 %v251
        %v453 = vunpack.c.h.b16 %v251
        %v454 = vunpack.c.l.b16 %v252
        %v455 = vunpack.c.h.b16 %v252
        %v456 = vunpack.c.l.b16 %v253
        %v457 = vunpack.c.h.b16 %v253
        %v458 = vunpack.c.l.b16 %v254
        %v459 = vunpack.c.h.b16 %v254
        %v460 = vunpack.c.l.b16 %v255
        %v461 = vunpack.c.h.b16 %v255
        %v462 = vunpack.c.l.b16 %v256
        %v463 = vunpack.c.h.b16 %v256
        %v464 = vunpack.c.l.b16 %v257
        %v465 = vunpack.c.h.b16 %v257
        %v466 = vunpack.c.l.b16 %v258
        %v467 = vunpack.c.h.b16 %v258
        %v468 = vunpack.c.l.b16 %v259
        %v469 = vunpack.c.h.b16 %v259
        %v470 = vunpack.c.l.b16 %v260
        %v471 = vunpack.c.h.b16 %v260
        %v472 = vunpack.c.l.b16 %v261
        %v473 = vunpack.c.h.b16 %v261
        %v474 = vunpack.c.l.b16 %v262
        %v475 = vunpack.c.h.b16 %v262
        %v476 = vunpack.c.l.b16 %v263
        %v477 = vunpack.c.h.b16 %v263
        %v478 = vunpack.c.l.b16 %v264
        %v479 = vunpack.c.h.b16 %v264
        %v480 = vpack.c.b16 %v354, %v352
        %v481 = vpack.c.b16 %v355, %v353
        %v482 = vpack.c.b16 %v358, %v356
        %v483 = vpack.c.b16 %v359, %v357
        %v484 = vpack.c.b16 %v362, %v360
        %v485 = vpack.c.b16 %v363, %v361
        %v486 = vpack.c.b16 %v366, %v364
        %v487 = vpack.c.b16 %v367, %v365
        %v488 = vpack.c.b16 %v370, %v368
        %v489 = vpack.c.b16 %v371, %v369
        %v490 = vpack.c.b16 %v374, %v372
        %v491 = vpack.c.b16 %v375, %v373
        %v492 = vpack.c.b16 %v378, %v376
        %v493 = vpack.c.b16 %v379, %v377
        %v494 = vpack.c.b16 %v382, %v380
        %v495 = vpack.c.b16 %v383, %v381
        %v496 = vpack.c.b16 %v386, %v384
        %v497 = vpack.c.b16 %v387, %v385
        %v498 = vpack.c.b16 %v390, %v388
        %v499 = vpack.c.b16 %v391, %v389
        %v500 = vpack.c.b16 %v394, %v392
        %v501 = vpack.c.b16 %v395, %v393
        %v502 = vpack.c.b16 %v398, %v396
        %v503 = vpack.c.b16 %v399, %v397
        %v504 = vpack.c.b16 %v402, %v400
        %v505 = vpack.c.b16 %v403, %v401
        %v506 = vpack.c.b16 %v406, %v404
        %v507 = vpack.c.b16 %v407, %v405
        %v508 = vpack.c.b16 %v410, %v408
        %v509 = vpack.c.b16 %v411, %v409
        %v510 = vpack.c.b16 %v414, %v412
        %v511 = vpack.c.b16 %v415, %v413
        %v512 = vpack.c.b16 %v418, %v416
        %v513 = vpack.c.b16 %v419, %v417
        %v514 = vpack.c.b16 %v422, %v420
        %v515 = vpack.c.b16 %v423, %v421
        %v516 = vpack.c.b16 %v426, %v424
        %v517 = vpack.c.b16 %v427, %v425
        %v518 = vpack.c.b16 %v430, %v428
        %v519 = vpack.c.b16 %v431, %v429
        %v520 = vpack.c.b16 %v434, %v432
        %v521 = vpack.c.b16 %v435, %v433
        %v522 = vpack.c.b16 %v438, %v436
        %v523 = vpack.c.b16 %v439, %v437
        %v524 = vpack.c.b16 %v442, %v440
        %v525 = vpack.c.b16 %v443, %v441
        %v526 = vpack.c.b16 %v446, %v444
        %v527 = vpack.c.b16 %v447, %v445
        %v528 = vpack.c.b16 %v450, %v448
        %v529 = vpack.c.b16 %v451, %v449
        %v530 = vpack.c.b16 %v454, %v452
        %v531 = vpack.c.b16 %v455, %v453
        %v532 = vpack.c.b16 %v458, %v456
        %v533 = vpack.c.b16 %v459, %v457
        %v534 = vpack.c.b16 %v462, %v460
        %v535 = vpack.c.b16 %v463, %v461
        %v536 = vpack.c.b16 %v466, %v464
        %v537 = vpack.c.b16 %v467, %v465
        %v538 = vpack.c.b16 %v470, %v468
        %v539 = vpack.c.b16 %v471, %v469
        %v540 = vpack.c.b16 %v474, %v472
        %v541 = vpack.c.b16 %v475, %v473
        %v542 = vpack.c.b16 %v478, %v476
        %v543 = vpack.c.b16 %v479, %v477
        %v595 = vunpack.c.l.b16 %v265
        %v596 = vunpack.c.l.b16 %v266
        %v597 = vunpack.c.l.b16 %v267
        %v598 = vunpack.c.l.b16 %v268
        %v599 = vunpack.c.l.b16 %v269
        %v600 = vunpack.c.l.b16 %v270
        %v601 = vunpack.c.l.b16 %v271
        %v602 = vunpack.c.l.b16 %v272
        %v603 = vunpack.c.l.b16 %v273
        %v604 = vunpack.c.l.b16 %v274
        %v605 = vunpack.c.l.b16 %v275
        %v606 = vunpack.c.l.b16 %v276
        %v607 = vunpack.c.l.b16 %v277
        %v608 = vunpack.c.l.b16 %v278
        %v609 = vunpack.c.l.b16 %v279
        %v610 = vunpack.c.l.b16 %v280
        %v611 = vunpack.c.l.b16 %v281
        %v612 = vunpack.c.l.b16 %v282
        %v613 = vunpack.c.l.b16 %v283
        %v614 = vpack.c.b16 %v596, %v595
        %v615 = vpack.c.b16 %v598, %v597
        %v616 = vpack.c.b16 %v600, %v599
        %v617 = vpack.c.b16 %v602, %v601
        %v618 = vpack.c.b16 %v604, %v603
        %v619 = vpack.c.b16 %v606, %v605
        %v620 = vpack.c.b16 %v608, %v607
        %v621 = vpack.c.b16 %v610, %v609
        %v622 = vpack.c.b16 %v612, %v611
        %v623 = vpack.c.b16 %v613, %v613
        %vm633 = vcmask 154624
        %v635 = vsel %vm633, %v481, 0
        %v638 = vsel %vm633, %v483, 0
        %v641 = vsel %vm633, %v485, 0
        %v644 = vsel %vm633, %v487, 0
        %v647 = vsel %vm633, %v489, 0
        %v650 = vsel %vm633, %v491, 0
        %v653 = vsel %vm633, %v493, 0
        %v656 = vsel %vm633, %v495, 0
        %v659 = vsel %vm633, %v497, 0
        %v662 = vsel %vm633, %v499, 0
        %v665 = vsel %vm633, %v501, 0
        %v668 = vsel %vm633, %v503, 0
        %v671 = vsel %vm633, %v505, 0
        %v674 = vsel %vm633, %v507, 0
        %v677 = vsel %vm633, %v509, 0
        %v680 = vsel %vm633, %v511, 0
        %v683 = vsel %vm633, %v513, 0
        %v686 = vsel %vm633, %v515, 0
        %v689 = vsel %vm633, %v517, 0
        %v692 = vsel %vm633, %v519, 0
        %v695 = vsel %vm633, %v521, 0
        %v698 = vsel %vm633, %v523, 0
        %v701 = vsel %vm633, %v525, 0
        %v704 = vsel %vm633, %v527, 0
        %v707 = vsel %vm633, %v529, 0
        %v710 = vsel %vm633, %v531, 0
        %v713 = vsel %vm633, %v533, 0
        %v716 = vsel %vm633, %v535, 0
        %v719 = vsel %vm633, %v537, 0
        %v722 = vsel %vm633, %v539, 0
        %v725 = vsel %vm633, %v541, 0
        %v728 = vsel %vm633, %v543, 0
        %vm730 = vcmask 1040384
        %vm731 = vcmask 1041408
        %v732 = vsel %vm730, 4294967295, 65535
        %v733 = vsel %vm731, %v732, 0
        %v735 = vand.u32 %v623, %v733
        %737 = vmatpush.bf16.msra.mxu0 %v621
        %738 = vmatpush.bf16.msra.mxu0 %v620
        %739 = vmatpush.bf16.msra.mxu0 %v619
        %740 = vmatpush.bf16.msra.mxu0 %v618
        %741 = vmatpush.bf16.msra.mxu0 %v617
        %742 = vmatpush.bf16.msra.mxu0 %v616
        %743 = vmatpush.bf16.msra.mxu0 %v615
        %744 = vmatpush.bf16.msra.mxu0 %v614
        %745 = vmatmul.bf16.gmra.mxu0 %v480
        %v746 = vpop.f32.mrf.mxu0
        %v747 = vadd.f32 %v286, %v746
        %v748 = vpop.f32.mrf.mxu0
        %v749 = vadd.f32 %v286, %v748
        %750 = vmatmul.bf16.gmra.mxu0 %v482
        %v751 = vpop.f32.mrf.mxu0
        %v752 = vadd.f32 %v286, %v751
        %v753 = vpop.f32.mrf.mxu0
        %v754 = vadd.f32 %v286, %v753
        %755 = vmatmul.bf16.gmra.mxu0 %v484
        %v756 = vpop.f32.mrf.mxu0
        %v757 = vadd.f32 %v286, %v756
        %v758 = vpop.f32.mrf.mxu0
        %v759 = vadd.f32 %v286, %v758
        %760 = vmatmul.bf16.gmra.mxu0 %v486
        %v761 = vpop.f32.mrf.mxu0
        %v762 = vadd.f32 %v286, %v761
        %v763 = vpop.f32.mrf.mxu0
        %v764 = vadd.f32 %v286, %v763
        %765 = vmatmul.bf16.gmra.mxu0 %v488
        %v766 = vpop.f32.mrf.mxu0
        %v767 = vadd.f32 %v286, %v766
        %v768 = vpop.f32.mrf.mxu0
        %v769 = vadd.f32 %v286, %v768
        %770 = vmatmul.bf16.gmra.mxu0 %v490
        %v771 = vpop.f32.mrf.mxu0
        %v772 = vadd.f32 %v286, %v771
        %v773 = vpop.f32.mrf.mxu0
        %v774 = vadd.f32 %v286, %v773
        %775 = vmatmul.bf16.gmra.mxu0 %v492
        %v776 = vpop.f32.mrf.mxu0
        %v777 = vadd.f32 %v286, %v776
        %v778 = vpop.f32.mrf.mxu0
        %v779 = vadd.f32 %v286, %v778
        %780 = vmatmul.bf16.gmra.mxu0 %v494
        %v781 = vpop.f32.mrf.mxu0
        %v782 = vadd.f32 %v286, %v781
        %v783 = vpop.f32.mrf.mxu0
        %v784 = vadd.f32 %v286, %v783
        %785 = vmatmul.bf16.gmra.mxu0 %v496
        %v786 = vpop.f32.mrf.mxu0
        %v787 = vadd.f32 %v286, %v786
        %v788 = vpop.f32.mrf.mxu0
        %v789 = vadd.f32 %v286, %v788
        %790 = vmatmul.bf16.gmra.mxu0 %v498
        %v791 = vpop.f32.mrf.mxu0
        %v792 = vadd.f32 %v286, %v791
        %v793 = vpop.f32.mrf.mxu0
        %v794 = vadd.f32 %v286, %v793
        %795 = vmatmul.bf16.gmra.mxu0 %v500
        %v796 = vpop.f32.mrf.mxu0
        %v797 = vadd.f32 %v286, %v796
        %v798 = vpop.f32.mrf.mxu0
        %v799 = vadd.f32 %v286, %v798
        %800 = vmatmul.bf16.gmra.mxu0 %v502
        %v801 = vpop.f32.mrf.mxu0
        %v802 = vadd.f32 %v286, %v801
        %v803 = vpop.f32.mrf.mxu0
        %v804 = vadd.f32 %v286, %v803
        %805 = vmatmul.bf16.gmra.mxu0 %v504
        %v806 = vpop.f32.mrf.mxu0
        %v807 = vadd.f32 %v286, %v806
        %v808 = vpop.f32.mrf.mxu0
        %v809 = vadd.f32 %v286, %v808
        %810 = vmatmul.bf16.gmra.mxu0 %v506
        %v811 = vpop.f32.mrf.mxu0
        %v812 = vadd.f32 %v286, %v811
        %v813 = vpop.f32.mrf.mxu0
        %v814 = vadd.f32 %v286, %v813
        %815 = vmatmul.bf16.gmra.mxu0 %v508
        %v816 = vpop.f32.mrf.mxu0
        %v817 = vadd.f32 %v286, %v816
        %v818 = vpop.f32.mrf.mxu0
        %v819 = vadd.f32 %v286, %v818
        %820 = vmatmul.bf16.gmra.mxu0 %v510
        %v821 = vpop.f32.mrf.mxu0
        %v822 = vadd.f32 %v286, %v821
        %v823 = vpop.f32.mrf.mxu0
        %v824 = vadd.f32 %v286, %v823
        %825 = vmatmul.bf16.gmra.mxu0 %v512
        %v826 = vpop.f32.mrf.mxu0
        %v827 = vadd.f32 %v286, %v826
        %v828 = vpop.f32.mrf.mxu0
        %v829 = vadd.f32 %v286, %v828
        %830 = vmatmul.bf16.gmra.mxu0 %v514
        %v831 = vpop.f32.mrf.mxu0
        %v832 = vadd.f32 %v286, %v831
        %v833 = vpop.f32.mrf.mxu0
        %v834 = vadd.f32 %v286, %v833
        %835 = vmatmul.bf16.gmra.mxu0 %v516
        %v836 = vpop.f32.mrf.mxu0
        %v837 = vadd.f32 %v286, %v836
        %v838 = vpop.f32.mrf.mxu0
        %v839 = vadd.f32 %v286, %v838
        %840 = vmatmul.bf16.gmra.mxu0 %v518
        %v841 = vpop.f32.mrf.mxu0
        %v842 = vadd.f32 %v286, %v841
        %v843 = vpop.f32.mrf.mxu0
        %v844 = vadd.f32 %v286, %v843
        %845 = vmatmul.bf16.gmra.mxu0 %v520
        %v846 = vpop.f32.mrf.mxu0
        %v847 = vadd.f32 %v286, %v846
        %v848 = vpop.f32.mrf.mxu0
        %v849 = vadd.f32 %v286, %v848
        %850 = vmatmul.bf16.gmra.mxu0 %v522
        %v851 = vpop.f32.mrf.mxu0
        %v852 = vadd.f32 %v286, %v851
        %v853 = vpop.f32.mrf.mxu0
        %v854 = vadd.f32 %v286, %v853
        %855 = vmatmul.bf16.gmra.mxu0 %v524
        %v856 = vpop.f32.mrf.mxu0
        %v857 = vadd.f32 %v286, %v856
        %v858 = vpop.f32.mrf.mxu0
        %v859 = vadd.f32 %v286, %v858
        %860 = vmatmul.bf16.gmra.mxu0 %v526
        %v861 = vpop.f32.mrf.mxu0
        %v862 = vadd.f32 %v286, %v861
        %v863 = vpop.f32.mrf.mxu0
        %v864 = vadd.f32 %v286, %v863
        %865 = vmatmul.bf16.gmra.mxu0 %v528
        %v866 = vpop.f32.mrf.mxu0
        %v867 = vadd.f32 %v286, %v866
        %v868 = vpop.f32.mrf.mxu0
        %v869 = vadd.f32 %v286, %v868
        %870 = vmatmul.bf16.gmra.mxu0 %v530
        %v871 = vpop.f32.mrf.mxu0
        %v872 = vadd.f32 %v286, %v871
        %v873 = vpop.f32.mrf.mxu0
        %v874 = vadd.f32 %v286, %v873
        %875 = vmatmul.bf16.gmra.mxu0 %v532
        %v876 = vpop.f32.mrf.mxu0
        %v877 = vadd.f32 %v286, %v876
        %v878 = vpop.f32.mrf.mxu0
        %v879 = vadd.f32 %v286, %v878
        %880 = vmatmul.bf16.gmra.mxu0 %v534
        %v881 = vpop.f32.mrf.mxu0
        %v882 = vadd.f32 %v286, %v881
        %v883 = vpop.f32.mrf.mxu0
        %v884 = vadd.f32 %v286, %v883
        %885 = vmatmul.bf16.gmra.mxu0 %v536
        %v886 = vpop.f32.mrf.mxu0
        %v887 = vadd.f32 %v286, %v886
        %v888 = vpop.f32.mrf.mxu0
        %v889 = vadd.f32 %v286, %v888
        %890 = vmatmul.bf16.gmra.mxu0 %v538
        %v891 = vpop.f32.mrf.mxu0
        %v892 = vadd.f32 %v286, %v891
        %v893 = vpop.f32.mrf.mxu0
        %v894 = vadd.f32 %v286, %v893
        %895 = vmatmul.bf16.gmra.mxu0 %v540
        %v896 = vpop.f32.mrf.mxu0
        %v897 = vadd.f32 %v286, %v896
        %v898 = vpop.f32.mrf.mxu0
        %v899 = vadd.f32 %v286, %v898
        %900 = vmatmul.bf16.gmra.mxu0 %v542
        %v901 = vpop.f32.mrf.mxu0
        %v902 = vadd.f32 %v286, %v901
        %v903 = vpop.f32.mrf.mxu0
        %v904 = vadd.f32 %v286, %v903
        %905 = vdwg.mxu0
        %906 = vmatpush.bf16.msra.mxu0 0
        %907 = vmatpush.bf16.msra.mxu0 0
        %908 = vmatpush.bf16.msra.mxu0 0
        %909 = vmatpush.bf16.msra.mxu0 0
        %910 = vmatpush.bf16.msra.mxu0 0
        %911 = vmatpush.bf16.msra.mxu0 0
        %912 = vmatpush.bf16.msra.mxu0 %v735
        %913 = vmatpush.bf16.msra.mxu0 %v622
        %914 = vmatmul.bf16.gmra.mxu0 %v635
        %v915 = vpop.f32.mrf.mxu0
        %v916 = vadd.f32 %v747, %v915
        %v917 = vpop.f32.mrf.mxu0
        %v918 = vadd.f32 %v749, %v917
        %919 = vmatmul.bf16.gmra.mxu0 %v638
        %v920 = vpop.f32.mrf.mxu0
        %v921 = vadd.f32 %v752, %v920
        %v922 = vpop.f32.mrf.mxu0
        %v923 = vadd.f32 %v754, %v922
        %924 = vmatmul.bf16.gmra.mxu0 %v641
        %v925 = vpop.f32.mrf.mxu0
        %v926 = vadd.f32 %v757, %v925
        %v927 = vpop.f32.mrf.mxu0
        %v928 = vadd.f32 %v759, %v927
        %929 = vmatmul.bf16.gmra.mxu0 %v644
        %v930 = vpop.f32.mrf.mxu0
        %v931 = vadd.f32 %v762, %v930
        %v932 = vpop.f32.mrf.mxu0
        %v933 = vadd.f32 %v764, %v932
        %934 = vmatmul.bf16.gmra.mxu0 %v647
        %v935 = vpop.f32.mrf.mxu0
        %v936 = vadd.f32 %v767, %v935
        %v937 = vpop.f32.mrf.mxu0
        %v938 = vadd.f32 %v769, %v937
        %939 = vmatmul.bf16.gmra.mxu0 %v650
        %v940 = vpop.f32.mrf.mxu0
        %v941 = vadd.f32 %v772, %v940
        %v942 = vpop.f32.mrf.mxu0
        %v943 = vadd.f32 %v774, %v942
        %944 = vmatmul.bf16.gmra.mxu0 %v653
        %v945 = vpop.f32.mrf.mxu0
        %v946 = vadd.f32 %v777, %v945
        %v947 = vpop.f32.mrf.mxu0
        %v948 = vadd.f32 %v779, %v947
        %949 = vmatmul.bf16.gmra.mxu0 %v656
        %v950 = vpop.f32.mrf.mxu0
        %v951 = vadd.f32 %v782, %v950
        %v952 = vpop.f32.mrf.mxu0
        %v953 = vadd.f32 %v784, %v952
        %954 = vmatmul.bf16.gmra.mxu0 %v659
        %v955 = vpop.f32.mrf.mxu0
        %v956 = vadd.f32 %v787, %v955
        %v957 = vpop.f32.mrf.mxu0
        %v958 = vadd.f32 %v789, %v957
        %959 = vmatmul.bf16.gmra.mxu0 %v662
        %v960 = vpop.f32.mrf.mxu0
        %v961 = vadd.f32 %v792, %v960
        %v962 = vpop.f32.mrf.mxu0
        %v963 = vadd.f32 %v794, %v962
        %964 = vmatmul.bf16.gmra.mxu0 %v665
        %v965 = vpop.f32.mrf.mxu0
        %v966 = vadd.f32 %v797, %v965
        %v967 = vpop.f32.mrf.mxu0
        %v968 = vadd.f32 %v799, %v967
        %969 = vmatmul.bf16.gmra.mxu0 %v668
        %v970 = vpop.f32.mrf.mxu0
        %v971 = vadd.f32 %v802, %v970
        %v972 = vpop.f32.mrf.mxu0
        %v973 = vadd.f32 %v804, %v972
        %974 = vmatmul.bf16.gmra.mxu0 %v671
        %v975 = vpop.f32.mrf.mxu0
        %v976 = vadd.f32 %v807, %v975
        %v977 = vpop.f32.mrf.mxu0
        %v978 = vadd.f32 %v809, %v977
        %979 = vmatmul.bf16.gmra.mxu0 %v674
        %v980 = vpop.f32.mrf.mxu0
        %v981 = vadd.f32 %v812, %v980
        %v982 = vpop.f32.mrf.mxu0
        %v983 = vadd.f32 %v814, %v982
        %984 = vmatmul.bf16.gmra.mxu0 %v677
        %v985 = vpop.f32.mrf.mxu0
        %v986 = vadd.f32 %v817, %v985
        %v987 = vpop.f32.mrf.mxu0
        %v988 = vadd.f32 %v819, %v987
        %989 = vmatmul.bf16.gmra.mxu0 %v680
        %v990 = vpop.f32.mrf.mxu0
        %v991 = vadd.f32 %v822, %v990
        %v992 = vpop.f32.mrf.mxu0
        %v993 = vadd.f32 %v824, %v992
        %994 = vmatmul.bf16.gmra.mxu0 %v683
        %v995 = vpop.f32.mrf.mxu0
        %v996 = vadd.f32 %v827, %v995
        %v997 = vpop.f32.mrf.mxu0
        %v998 = vadd.f32 %v829, %v997
        %999 = vmatmul.bf16.gmra.mxu0 %v686
        %v1000 = vpop.f32.mrf.mxu0
        %v1001 = vadd.f32 %v832, %v1000
        %v1002 = vpop.f32.mrf.mxu0
        %v1003 = vadd.f32 %v834, %v1002
        %1004 = vmatmul.bf16.gmra.mxu0 %v689
        %v1005 = vpop.f32.mrf.mxu0
        %v1006 = vadd.f32 %v837, %v1005
        %v1007 = vpop.f32.mrf.mxu0
        %v1008 = vadd.f32 %v839, %v1007
        %1009 = vmatmul.bf16.gmra.mxu0 %v692
        %v1010 = vpop.f32.mrf.mxu0
        %v1011 = vadd.f32 %v842, %v1010
        %v1012 = vpop.f32.mrf.mxu0
        %v1013 = vadd.f32 %v844, %v1012
        %1014 = vmatmul.bf16.gmra.mxu0 %v695
        %v1015 = vpop.f32.mrf.mxu0
        %v1016 = vadd.f32 %v847, %v1015
        %v1017 = vpop.f32.mrf.mxu0
        %v1018 = vadd.f32 %v849, %v1017
        %1019 = vmatmul.bf16.gmra.mxu0 %v698
        %v1020 = vpop.f32.mrf.mxu0
        %v1021 = vadd.f32 %v852, %v1020
        %v1022 = vpop.f32.mrf.mxu0
        %v1023 = vadd.f32 %v854, %v1022
        %1024 = vmatmul.bf16.gmra.mxu0 %v701
        %v1025 = vpop.f32.mrf.mxu0
        %v1026 = vadd.f32 %v857, %v1025
        %v1027 = vpop.f32.mrf.mxu0
        %v1028 = vadd.f32 %v859, %v1027
        %1029 = vmatmul.bf16.gmra.mxu0 %v704
        %v1030 = vpop.f32.mrf.mxu0
        %v1031 = vadd.f32 %v862, %v1030
        %v1032 = vpop.f32.mrf.mxu0
        %v1033 = vadd.f32 %v864, %v1032
        %1034 = vmatmul.bf16.gmra.mxu0 %v707
        %v1035 = vpop.f32.mrf.mxu0
        %v1036 = vadd.f32 %v867, %v1035
        %v1037 = vpop.f32.mrf.mxu0
        %v1038 = vadd.f32 %v869, %v1037
        %1039 = vmatmul.bf16.gmra.mxu0 %v710
        %v1040 = vpop.f32.mrf.mxu0
        %v1041 = vadd.f32 %v872, %v1040
        %v1042 = vpop.f32.mrf.mxu0
        %v1043 = vadd.f32 %v874, %v1042
        %1044 = vmatmul.bf16.gmra.mxu0 %v713
        %v1045 = vpop.f32.mrf.mxu0
        %v1046 = vadd.f32 %v877, %v1045
        %v1047 = vpop.f32.mrf.mxu0
        %v1048 = vadd.f32 %v879, %v1047
        %1049 = vmatmul.bf16.gmra.mxu0 %v716
        %v1050 = vpop.f32.mrf.mxu0
        %v1051 = vadd.f32 %v882, %v1050
        %v1052 = vpop.f32.mrf.mxu0
        %v1053 = vadd.f32 %v884, %v1052
        %1054 = vmatmul.bf16.gmra.mxu0 %v719
        %v1055 = vpop.f32.mrf.mxu0
        %v1056 = vadd.f32 %v887, %v1055
        %v1057 = vpop.f32.mrf.mxu0
        %v1058 = vadd.f32 %v889, %v1057
        %1059 = vmatmul.bf16.gmra.mxu0 %v722
        %v1060 = vpop.f32.mrf.mxu0
        %v1061 = vadd.f32 %v892, %v1060
        %v1062 = vpop.f32.mrf.mxu0
        %v1063 = vadd.f32 %v894, %v1062
        %1064 = vmatmul.bf16.gmra.mxu0 %v725
        %v1065 = vpop.f32.mrf.mxu0
        %v1066 = vadd.f32 %v897, %v1065
        %v1067 = vpop.f32.mrf.mxu0
        %v1068 = vadd.f32 %v899, %v1067
        %1069 = vmatmul.bf16.gmra.mxu0 %v728
        %v1070 = vpop.f32.mrf.mxu0
        %v1071 = vadd.f32 %v902, %v1070
        %v1072 = vpop.f32.mrf.mxu0
        %v1073 = vadd.f32 %v904, %v1072
        %1074 = vdwg.mxu0
        %v1075 = vmax.f32 %v916, 0.0
        %v1076 = vmax.f32 %v918, 0.0
        %v1077 = vmax.f32 %v921, 0.0
        %v1078 = vmax.f32 %v923, 0.0
        %v1079 = vmax.f32 %v926, 0.0
        %v1080 = vmax.f32 %v928, 0.0
        %v1081 = vmax.f32 %v931, 0.0
        %v1082 = vmax.f32 %v933, 0.0
        %v1083 = vmax.f32 %v936, 0.0
        %v1084 = vmax.f32 %v938, 0.0
        %v1085 = vmax.f32 %v941, 0.0
        %v1086 = vmax.f32 %v943, 0.0
        %v1087 = vmax.f32 %v946, 0.0
        %v1088 = vmax.f32 %v948, 0.0
        %v1089 = vmax.f32 %v951, 0.0
        %v1090 = vmax.f32 %v953, 0.0
        %v1091 = vmax.f32 %v956, 0.0
        %v1092 = vmax.f32 %v958, 0.0
        %v1093 = vmax.f32 %v961, 0.0
        %v1094 = vmax.f32 %v963, 0.0
        %v1095 = vmax.f32 %v966, 0.0
        %v1096 = vmax.f32 %v968, 0.0
        %v1097 = vmax.f32 %v971, 0.0
        %v1098 = vmax.f32 %v973, 0.0
        %v1099 = vmax.f32 %v976, 0.0
        %v1100 = vmax.f32 %v978, 0.0
        %v1101 = vmax.f32 %v981, 0.0
        %v1102 = vmax.f32 %v983, 0.0
        %v1103 = vmax.f32 %v986, 0.0
        %v1104 = vmax.f32 %v988, 0.0
        %v1105 = vmax.f32 %v991, 0.0
        %v1106 = vmax.f32 %v993, 0.0
        %v1107 = vmax.f32 %v996, 0.0
        %v1108 = vmax.f32 %v998, 0.0
        %v1109 = vmax.f32 %v1001, 0.0
        %v1110 = vmax.f32 %v1003, 0.0
        %v1111 = vmax.f32 %v1006, 0.0
        %v1112 = vmax.f32 %v1008, 0.0
        %v1113 = vmax.f32 %v1011, 0.0
        %v1114 = vmax.f32 %v1013, 0.0
        %v1115 = vmax.f32 %v1016, 0.0
        %v1116 = vmax.f32 %v1018, 0.0
        %v1117 = vmax.f32 %v1021, 0.0
        %v1118 = vmax.f32 %v1023, 0.0
        %v1119 = vmax.f32 %v1026, 0.0
        %v1120 = vmax.f32 %v1028, 0.0
        %v1121 = vmax.f32 %v1031, 0.0
        %v1122 = vmax.f32 %v1033, 0.0
        %v1123 = vmax.f32 %v1036, 0.0
        %v1124 = vmax.f32 %v1038, 0.0
        %v1125 = vmax.f32 %v1041, 0.0
        %v1126 = vmax.f32 %v1043, 0.0
        %v1127 = vmax.f32 %v1046, 0.0
        %v1128 = vmax.f32 %v1048, 0.0
        %v1129 = vmax.f32 %v1051, 0.0
        %v1130 = vmax.f32 %v1053, 0.0
        %v1131 = vmax.f32 %v1056, 0.0
        %v1132 = vmax.f32 %v1058, 0.0
        %v1133 = vmax.f32 %v1061, 0.0
        %v1134 = vmax.f32 %v1063, 0.0
        %v1135 = vmax.f32 %v1066, 0.0
        %v1136 = vmax.f32 %v1068, 0.0
        %v1137 = vmax.f32 %v1071, 0.0
        %v1138 = vmax.f32 %v1073, 0.0
        %v1139 = vpack.c.bf16 %v1075, %v1075
        %v1140 = vpack.c.bf16 %v1076, %v1076
        %v1141 = vpack.c.bf16 %v1077, %v1077
        %v1142 = vpack.c.bf16 %v1078, %v1078
        %v1143 = vpack.c.bf16 %v1079, %v1079
        %v1144 = vpack.c.bf16 %v1080, %v1080
        %v1145 = vpack.c.bf16 %v1081, %v1081
        %v1146 = vpack.c.bf16 %v1082, %v1082
        %v1147 = vpack.c.bf16 %v1083, %v1083
        %v1148 = vpack.c.bf16 %v1084, %v1084
        %v1149 = vpack.c.bf16 %v1085, %v1085
        %v1150 = vpack.c.bf16 %v1086, %v1086
        %v1151 = vpack.c.bf16 %v1087, %v1087
        %v1152 = vpack.c.bf16 %v1088, %v1088
        %v1153 = vpack.c.bf16 %v1089, %v1089
        %v1154 = vpack.c.bf16 %v1090, %v1090
        %v1155 = vpack.c.bf16 %v1091, %v1091
        %v1156 = vpack.c.bf16 %v1092, %v1092
        %v1157 = vpack.c.bf16 %v1093, %v1093
        %v1158 = vpack.c.bf16 %v1094, %v1094
        %v1159 = vpack.c.bf16 %v1095, %v1095
        %v1160 = vpack.c.bf16 %v1096, %v1096
        %v1161 = vpack.c.bf16 %v1097, %v1097
        %v1162 = vpack.c.bf16 %v1098, %v1098
        %v1163 = vpack.c.bf16 %v1099, %v1099
        %v1164 = vpack.c.bf16 %v1100, %v1100
        %v1165 = vpack.c.bf16 %v1101, %v1101
        %v1166 = vpack.c.bf16 %v1102, %v1102
        %v1167 = vpack.c.bf16 %v1103, %v1103
        %v1168 = vpack.c.bf16 %v1104, %v1104
        %v1169 = vpack.c.bf16 %v1105, %v1105
        %v1170 = vpack.c.bf16 %v1106, %v1106
        %v1171 = vpack.c.bf16 %v1107, %v1107
        %v1172 = vpack.c.bf16 %v1108, %v1108
        %v1173 = vpack.c.bf16 %v1109, %v1109
        %v1174 = vpack.c.bf16 %v1110, %v1110
        %v1175 = vpack.c.bf16 %v1111, %v1111
        %v1176 = vpack.c.bf16 %v1112, %v1112
        %v1177 = vpack.c.bf16 %v1113, %v1113
        %v1178 = vpack.c.bf16 %v1114, %v1114
        %v1179 = vpack.c.bf16 %v1115, %v1115
        %v1180 = vpack.c.bf16 %v1116, %v1116
        %v1181 = vpack.c.bf16 %v1117, %v1117
        %v1182 = vpack.c.bf16 %v1118, %v1118
        %v1183 = vpack.c.bf16 %v1119, %v1119
        %v1184 = vpack.c.bf16 %v1120, %v1120
        %v1185 = vpack.c.bf16 %v1121, %v1121
        %v1186 = vpack.c.bf16 %v1122, %v1122
        %v1187 = vpack.c.bf16 %v1123, %v1123
        %v1188 = vpack.c.bf16 %v1124, %v1124
        %v1189 = vpack.c.bf16 %v1125, %v1125
        %v1190 = vpack.c.bf16 %v1126, %v1126
        %v1191 = vpack.c.bf16 %v1127, %v1127
        %v1192 = vpack.c.bf16 %v1128, %v1128
        %v1193 = vpack.c.bf16 %v1129, %v1129
        %v1194 = vpack.c.bf16 %v1130, %v1130
        %v1195 = vpack.c.bf16 %v1131, %v1131
        %v1196 = vpack.c.bf16 %v1132, %v1132
        %v1197 = vpack.c.bf16 %v1133, %v1133
        %v1198 = vpack.c.bf16 %v1134, %v1134
        %v1199 = vpack.c.bf16 %v1135, %v1135
        %v1200 = vpack.c.bf16 %v1136, %v1136
        %v1201 = vpack.c.bf16 %v1137, %v1137
        %v1202 = vpack.c.bf16 %v1138, %v1138
        %1203 = vst [vmem:[%s177] sm:$0xf] %v1139
        %1204 = vst [vmem:[%s177 + $0x4] sm:$0xf] %v1140
        %1205 = vst [vmem:[%s177 + $0x8] sm:$0xf] %v1141
        %1206 = vst [vmem:[%s177 + $0xc] sm:$0xf] %v1142
        %1207 = vst [vmem:[%s177 + $0x10] sm:$0xf] %v1143
        %1208 = vst [vmem:[%s177 + $0x14] sm:$0xf] %v1144
        %1209 = vst [vmem:[%s177 + $0x18] sm:$0xf] %v1145
        %1210 = vst [vmem:[%s177 + $0x1c] sm:$0xf] %v1146
        %1211 = vst [vmem:[%s177 + $0x20] sm:$0xf] %v1147
        %1212 = vst [vmem:[%s177 + $0x24] sm:$0xf] %v1148
        %1213 = vst [vmem:[%s177 + $0x28] sm:$0xf] %v1149
        %1214 = vst [vmem:[%s177 + $0x2c] sm:$0xf] %v1150
        %1215 = vst [vmem:[%s177 + $0x30] sm:$0xf] %v1151
        %1216 = vst [vmem:[%s177 + $0x34] sm:$0xf] %v1152
        %1217 = vst [vmem:[%s177 + $0x38] sm:$0xf] %v1153
        %1218 = vst [vmem:[%s177 + $0x3c] sm:$0xf] %v1154
        %1219 = vst [vmem:[%s177 + $0x40] sm:$0xf] %v1155
        %1220 = vst [vmem:[%s177 + $0x44] sm:$0xf] %v1156
        %1221 = vst [vmem:[%s177 + $0x48] sm:$0xf] %v1157
        %1222 = vst [vmem:[%s177 + $0x4c] sm:$0xf] %v1158
        %1223 = vst [vmem:[%s177 + $0x50] sm:$0xf] %v1159
        %1224 = vst [vmem:[%s177 + $0x54] sm:$0xf] %v1160
        %1225 = vst [vmem:[%s177 + $0x58] sm:$0xf] %v1161
        %1226 = vst [vmem:[%s177 + $0x5c] sm:$0xf] %v1162
        %1227 = vst [vmem:[%s177 + $0x60] sm:$0xf] %v1163
        %1228 = vst [vmem:[%s177 + $0x64] sm:$0xf] %v1164
        %1229 = vst [vmem:[%s177 + $0x68] sm:$0xf] %v1165
        %1230 = vst [vmem:[%s177 + $0x6c] sm:$0xf] %v1166
        %1231 = vst [vmem:[%s177 + $0x70] sm:$0xf] %v1167
        %1232 = vst [vmem:[%s177 + $0x74] sm:$0xf] %v1168
        %1233 = vst [vmem:[%s177 + $0x78] sm:$0xf] %v1169
        %1234 = vst [vmem:[%s177 + $0x7c] sm:$0xf] %v1170
        %1235 = vst [vmem:[%s177 + $0x80] sm:$0xf] %v1171
        %1236 = vst [vmem:[%s177 + $0x84] sm:$0xf] %v1172
        %1237 = vst [vmem:[%s177 + $0x88] sm:$0xf] %v1173
        %1238 = vst [vmem:[%s177 + $0x8c] sm:$0xf] %v1174
        %1239 = vst [vmem:[%s177 + $0x90] sm:$0xf] %v1175
        %1240 = vst [vmem:[%s177 + $0x94] sm:$0xf] %v1176
        %1241 = vst [vmem:[%s177 + $0x98] sm:$0xf] %v1177
        %1242 = vst [vmem:[%s177 + $0x9c] sm:$0xf] %v1178
        %1243 = vst [vmem:[%s177 + $0xa0] sm:$0xf] %v1179
        %1244 = vst [vmem:[%s177 + $0xa4] sm:$0xf] %v1180
        %1245 = vst [vmem:[%s177 + $0xa8] sm:$0xf] %v1181
        %1246 = vst [vmem:[%s177 + $0xac] sm:$0xf] %v1182
        %1247 = vst [vmem:[%s177 + $0xb0] sm:$0xf] %v1183
        %1248 = vst [vmem:[%s177 + $0xb4] sm:$0xf] %v1184
        %1249 = vst [vmem:[%s177 + $0xb8] sm:$0xf] %v1185
        %1250 = vst [vmem:[%s177 + $0xbc] sm:$0xf] %v1186
        %1251 = vst [vmem:[%s177 + $0xc0] sm:$0xf] %v1187
        %1252 = vst [vmem:[%s177 + $0xc4] sm:$0xf] %v1188
        %1253 = vst [vmem:[%s177 + $0xc8] sm:$0xf] %v1189
        %1254 = vst [vmem:[%s177 + $0xcc] sm:$0xf] %v1190
        %1255 = vst [vmem:[%s177 + $0xd0] sm:$0xf] %v1191
        %1256 = vst [vmem:[%s177 + $0xd4] sm:$0xf] %v1192
        %1257 = vst [vmem:[%s177 + $0xd8] sm:$0xf] %v1193
        %1258 = vst [vmem:[%s177 + $0xdc] sm:$0xf] %v1194
        %1259 = vst [vmem:[%s177 + $0xe0] sm:$0xf] %v1195
        %1260 = vst [vmem:[%s177 + $0xe4] sm:$0xf] %v1196
        %1261 = vst [vmem:[%s177 + $0xe8] sm:$0xf] %v1197
        %1262 = vst [vmem:[%s177 + $0xec] sm:$0xf] %v1198
        %1263 = vst [vmem:[%s177 + $0xf0] sm:$0xf] %v1199
        %1264 = vst [vmem:[%s177 + $0xf4] sm:$0xf] %v1200
        %1265 = vst [vmem:[%s177 + $0xf8] sm:$0xf] %v1201
        %1266 = vst [vmem:[%s177 + $0xfc] sm:$0xf] %v1202
        %s1267 = sand.u32 %s90, 1
        %s1268 = sand.u32 %s90, 1
        %s1269 = smul.addr %s1268, 256
        %s1270 = scalar_lea.vmem [#allocation2], %s1269
        // Predicated region
        $region33: #{dqn_forward.3} parent=31 // pred_check
          %p1271 = pneg %p100
        $region34: #{dqn_forward.3} parent=31 // pred_check_branch
          %1273 = sbr.rel (%p1271) target = $region36
        $region35: #{dqn_forward.3} parent=31 // pred_region
          %s1274 = smul.u32 64, %s14
          %s1275 = ssub.s32 211, %s1274
          %p1276 = scmp.lt.s32.totalorder %s1275, 64
          %s1277 = scalar_select %p1276, %s1275, 64
          %s1278 = smul.u32 4, %s1277
          %p1279 = scmp.ne.s32.totalorder 0, %s1278
          %s1280 = smul.addr %s1274, 4
          %s1281 = scalar_lea.vmem %s3, %s1280
          // Predicated region
          $region37: #{dqn_forward.3} parent=35 // pred_check
            %p1282 = pneg %p1279
          $region38: #{dqn_forward.3} parent=35 // pred_check_branch
            %1284 = sbr.rel (%p1282) target = $region40
          $region39: #{dqn_forward.3} parent=35 // pred_region
            // Predicated region
            $region41: #{dqn_forward.3} parent=39 // pred_check
              _
            $region42: #{dqn_forward.3} parent=39 // pred_check_branch
              %1286 = sbr.rel target = $region44
            $region43: #{dqn_forward.3} parent=39 // pred_region
              // Predicated region
              $region63: #{dqn_forward.3} parent=43 // pred_check
                _
              $region64: #{dqn_forward.3} parent=43 // pred_check_branch
                %1398 = sbr.rel (0) target = $region66
              $region65: #{dqn_forward.3} parent=43 // pred_region
                %s1400 = ssub.s32 16, 1
                %s1401 = sshrl.u32 %s1277, 5
                // While loop
                $region67: #{dqn_forward.3} parent=65 // loop_pre_header
                  _
                $region68: #{dqn_forward.3} parent=65 // loop_header
                  %s1403 = sphi 0, %s1405
                  %p1404 = scmp.ge.s32.totalorder %s1403, %s1401
                  %s1408 = sphi 0, %s1477
                  %s1409 = sphi %s1270, %s1480
                  %s1410 = sphi %s1281, %s1481
                $region69: #{dqn_forward.3} parent=65 // loop_header_branch
                  %1407 = sbr.rel (%p1404) target = $region73
                $region70: #{dqn_forward.3} parent=65 // loop_body
                  %v1411 = vld [vmem:[%s1409] sm:%s1400]
                  %1412 = vst [vmem:[%s1410] sm:%s1400] %v1411
                  %v1413 = vld [vmem:[%s1409 + $0x4] sm:%s1400]
                  %1414 = vst [vmem:[%s1410 + $0x4] sm:%s1400] %v1413
                  %v1415 = vld [vmem:[%s1409 + $0x8] sm:%s1400]
                  %1416 = vst [vmem:[%s1410 + $0x8] sm:%s1400] %v1415
                  %v1417 = vld [vmem:[%s1409 + $0xc] sm:%s1400]
                  %1418 = vst [vmem:[%s1410 + $0xc] sm:%s1400] %v1417
                  %v1419 = vld [vmem:[%s1409 + $0x10] sm:%s1400]
                  %1420 = vst [vmem:[%s1410 + $0x10] sm:%s1400] %v1419
                  %v1421 = vld [vmem:[%s1409 + $0x14] sm:%s1400]
                  %1422 = vst [vmem:[%s1410 + $0x14] sm:%s1400] %v1421
                  %v1423 = vld [vmem:[%s1409 + $0x18] sm:%s1400]
                  %1424 = vst [vmem:[%s1410 + $0x18] sm:%s1400] %v1423
                  %v1425 = vld [vmem:[%s1409 + $0x1c] sm:%s1400]
                  %1426 = vst [vmem:[%s1410 + $0x1c] sm:%s1400] %v1425
                  %v1427 = vld [vmem:[%s1409 + $0x20] sm:%s1400]
                  %1428 = vst [vmem:[%s1410 + $0x20] sm:%s1400] %v1427
                  %v1429 = vld [vmem:[%s1409 + $0x24] sm:%s1400]
                  %1430 = vst [vmem:[%s1410 + $0x24] sm:%s1400] %v1429
                  %v1431 = vld [vmem:[%s1409 + $0x28] sm:%s1400]
                  %1432 = vst [vmem:[%s1410 + $0x28] sm:%s1400] %v1431
                  %v1433 = vld [vmem:[%s1409 + $0x2c] sm:%s1400]
                  %1434 = vst [vmem:[%s1410 + $0x2c] sm:%s1400] %v1433
                  %v1435 = vld [vmem:[%s1409 + $0x30] sm:%s1400]
                  %1436 = vst [vmem:[%s1410 + $0x30] sm:%s1400] %v1435
                  %v1437 = vld [vmem:[%s1409 + $0x34] sm:%s1400]
                  %1438 = vst [vmem:[%s1410 + $0x34] sm:%s1400] %v1437
                  %v1439 = vld [vmem:[%s1409 + $0x38] sm:%s1400]
                  %1440 = vst [vmem:[%s1410 + $0x38] sm:%s1400] %v1439
                  %v1441 = vld [vmem:[%s1409 + $0x3c] sm:%s1400]
                  %1442 = vst [vmem:[%s1410 + $0x3c] sm:%s1400] %v1441
                  %v1443 = vld [vmem:[%s1409 + $0x40] sm:%s1400]
                  %1444 = vst [vmem:[%s1410 + $0x40] sm:%s1400] %v1443
                  %v1445 = vld [vmem:[%s1409 + $0x44] sm:%s1400]
                  %1446 = vst [vmem:[%s1410 + $0x44] sm:%s1400] %v1445
                  %v1447 = vld [vmem:[%s1409 + $0x48] sm:%s1400]
                  %1448 = vst [vmem:[%s1410 + $0x48] sm:%s1400] %v1447
                  %v1449 = vld [vmem:[%s1409 + $0x4c] sm:%s1400]
                  %1450 = vst [vmem:[%s1410 + $0x4c] sm:%s1400] %v1449
                  %v1451 = vld [vmem:[%s1409 + $0x50] sm:%s1400]
                  %1452 = vst [vmem:[%s1410 + $0x50] sm:%s1400] %v1451
                  %v1453 = vld [vmem:[%s1409 + $0x54] sm:%s1400]
                  %1454 = vst [vmem:[%s1410 + $0x54] sm:%s1400] %v1453
                  %v1455 = vld [vmem:[%s1409 + $0x58] sm:%s1400]
                  %1456 = vst [vmem:[%s1410 + $0x58] sm:%s1400] %v1455
                  %v1457 = vld [vmem:[%s1409 + $0x5c] sm:%s1400]
                  %1458 = vst [vmem:[%s1410 + $0x5c] sm:%s1400] %v1457
                  %v1459 = vld [vmem:[%s1409 + $0x60] sm:%s1400]
                  %1460 = vst [vmem:[%s1410 + $0x60] sm:%s1400] %v1459
                  %v1461 = vld [vmem:[%s1409 + $0x64] sm:%s1400]
                  %1462 = vst [vmem:[%s1410 + $0x64] sm:%s1400] %v1461
                  %v1463 = vld [vmem:[%s1409 + $0x68] sm:%s1400]
                  %1464 = vst [vmem:[%s1410 + $0x68] sm:%s1400] %v1463
                  %v1465 = vld [vmem:[%s1409 + $0x6c] sm:%s1400]
                  %1466 = vst [vmem:[%s1410 + $0x6c] sm:%s1400] %v1465
                  %v1467 = vld [vmem:[%s1409 + $0x70] sm:%s1400]
                  %1468 = vst [vmem:[%s1410 + $0x70] sm:%s1400] %v1467
                  %v1469 = vld [vmem:[%s1409 + $0x74] sm:%s1400]
                  %1470 = vst [vmem:[%s1410 + $0x74] sm:%s1400] %v1469
                  %v1471 = vld [vmem:[%s1409 + $0x78] sm:%s1400]
                  %1472 = vst [vmem:[%s1410 + $0x78] sm:%s1400] %v1471
                  %v1473 = vld [vmem:[%s1409 + $0x7c] sm:%s1400]
                  %1474 = vst [vmem:[%s1410 + $0x7c] sm:%s1400] %v1473
                  %s1475 = sadd.s32 1, %s1408
                  %p1476 = scmp.ge.s32.totalorder %s1475, %s1401
                  %s1477 = scalar_select %p1476, 0, %s1475
                  %s1478 = smul.u32 %s1477, 128
                  %s1479 = smul.u32 %s1477, 128
                  %s1480 = scalar_lea.vmem %s1270, %s1478 [#allocation2]
                  %s1481 = scalar_lea.vmem %s1281, %s1479
                $region71: #{dqn_forward.3} parent=65 // loop_footer
                  %s1405 = sadd.s32 %s1403, 1
                $region72: #{dqn_forward.3} parent=65 // loop_footer_branch
                  %1402 = sbr.rel target = $region68
                $region73: #{dqn_forward.3} parent=65 // loop_exit
                  _
                %s1482 = sshrl.u32 %s1277, 5
                %s1483 = sand.u32 %s1277, 31
                %s1484 = smul.u32 %s1482, 32
                %s1485 = smul.u32 4, %s1484
                %s1486 = scalar_lea.vmem %s1270, %s1485 [#allocation2]
                %s1487 = smul.u32 4, %s1484
                %s1488 = scalar_lea.vmem %s1281, %s1487
                // While loop
                $region74: #{dqn_forward.3} parent=65 // loop_pre_header
                  _
                $region75: #{dqn_forward.3} parent=65 // loop_header
                  %s1490 = sphi 0, %s1492
                  %p1491 = scmp.ge.s32.totalorder %s1490, %s1483
                  %s1495 = sphi 0, %s1502
                  %s1496 = sphi %s1486, %s1505
                  %s1497 = sphi %s1488, %s1506
                $region76: #{dqn_forward.3} parent=65 // loop_header_branch
                  %1494 = sbr.rel (%p1491) target = $region80
                $region77: #{dqn_forward.3} parent=65 // loop_body
                  %v1498 = vld [vmem:[%s1496] sm:%s1400]
                  %1499 = vst [vmem:[%s1497] sm:%s1400] %v1498
                  %s1500 = sadd.s32 1, %s1495
                  %p1501 = scmp.ge.s32.totalorder %s1500, %s1483
                  %s1502 = scalar_select %p1501, 0, %s1500
                  %s1503 = smul.u32 %s1502, 4
                  %s1504 = smul.u32 %s1502, 4
                  %s1505 = scalar_lea.vmem %s1486, %s1503 [#allocation2]
                  %s1506 = scalar_lea.vmem %s1488, %s1504
                $region78: #{dqn_forward.3} parent=65 // loop_footer
                  %s1492 = sadd.s32 %s1490, 1
                $region79: #{dqn_forward.3} parent=65 // loop_footer_branch
                  %1489 = sbr.rel target = $region75
                $region80: #{dqn_forward.3} parent=65 // loop_exit
                  _
              $region66: #{dqn_forward.3} parent=43 // pred_fallthru
                _
            $region44: #{dqn_forward.3} parent=39 // pred_fallthru
              _
            // Predicated region
            $region45: #{dqn_forward.3} parent=39 // pred_check
              _
            $region46: #{dqn_forward.3} parent=39 // pred_check_branch
              %1288 = sbr.rel (0) target = $region48
            $region47: #{dqn_forward.3} parent=39 // pred_region
              %s1290 = ssub.s32 16, 1
              %s1291 = sshrl.u32 %s1277, 5
              // While loop
              $region49: #{dqn_forward.3} parent=47 // loop_pre_header
                _
              $region50: #{dqn_forward.3} parent=47 // loop_header
                %s1293 = sphi 0, %s1295
                %p1294 = scmp.ge.s32.totalorder %s1293, %s1291
                %s1298 = sphi 0, %s1367
                %s1299 = sphi %s1270, %s1370
                %s1300 = sphi %s1281, %s1371
              $region51: #{dqn_forward.3} parent=47 // loop_header_branch
                %1297 = sbr.rel (%p1294) target = $region55
              $region52: #{dqn_forward.3} parent=47 // loop_body
                %v1301 = vld [vmem:[%s1299] sm:%s1290]
                %1302 = vst [vmem:[%s1300] sm:%s1290] %v1301
                %v1303 = vld [vmem:[%s1299 + $0x4] sm:%s1290]
                %1304 = vst [vmem:[%s1300 + $0x4] sm:%s1290] %v1303
                %v1305 = vld [vmem:[%s1299 + $0x8] sm:%s1290]
                %1306 = vst [vmem:[%s1300 + $0x8] sm:%s1290] %v1305
                %v1307 = vld [vmem:[%s1299 + $0xc] sm:%s1290]
                %1308 = vst [vmem:[%s1300 + $0xc] sm:%s1290] %v1307
                %v1309 = vld [vmem:[%s1299 + $0x10] sm:%s1290]
                %1310 = vst [vmem:[%s1300 + $0x10] sm:%s1290] %v1309
                %v1311 = vld [vmem:[%s1299 + $0x14] sm:%s1290]
                %1312 = vst [vmem:[%s1300 + $0x14] sm:%s1290] %v1311
                %v1313 = vld [vmem:[%s1299 + $0x18] sm:%s1290]
                %1314 = vst [vmem:[%s1300 + $0x18] sm:%s1290] %v1313
                %v1315 = vld [vmem:[%s1299 + $0x1c] sm:%s1290]
                %1316 = vst [vmem:[%s1300 + $0x1c] sm:%s1290] %v1315
                %v1317 = vld [vmem:[%s1299 + $0x20] sm:%s1290]
                %1318 = vst [vmem:[%s1300 + $0x20] sm:%s1290] %v1317
                %v1319 = vld [vmem:[%s1299 + $0x24] sm:%s1290]
                %1320 = vst [vmem:[%s1300 + $0x24] sm:%s1290] %v1319
                %v1321 = vld [vmem:[%s1299 + $0x28] sm:%s1290]
                %1322 = vst [vmem:[%s1300 + $0x28] sm:%s1290] %v1321
                %v1323 = vld [vmem:[%s1299 + $0x2c] sm:%s1290]
                %1324 = vst [vmem:[%s1300 + $0x2c] sm:%s1290] %v1323
                %v1325 = vld [vmem:[%s1299 + $0x30] sm:%s1290]
                %1326 = vst [vmem:[%s1300 + $0x30] sm:%s1290] %v1325
                %v1327 = vld [vmem:[%s1299 + $0x34] sm:%s1290]
                %1328 = vst [vmem:[%s1300 + $0x34] sm:%s1290] %v1327
                %v1329 = vld [vmem:[%s1299 + $0x38] sm:%s1290]
                %1330 = vst [vmem:[%s1300 + $0x38] sm:%s1290] %v1329
                %v1331 = vld [vmem:[%s1299 + $0x3c] sm:%s1290]
                %1332 = vst [vmem:[%s1300 + $0x3c] sm:%s1290] %v1331
                %v1333 = vld [vmem:[%s1299 + $0x40] sm:%s1290]
                %1334 = vst [vmem:[%s1300 + $0x40] sm:%s1290] %v1333
                %v1335 = vld [vmem:[%s1299 + $0x44] sm:%s1290]
                %1336 = vst [vmem:[%s1300 + $0x44] sm:%s1290] %v1335
                %v1337 = vld [vmem:[%s1299 + $0x48] sm:%s1290]
                %1338 = vst [vmem:[%s1300 + $0x48] sm:%s1290] %v1337
                %v1339 = vld [vmem:[%s1299 + $0x4c] sm:%s1290]
                %1340 = vst [vmem:[%s1300 + $0x4c] sm:%s1290] %v1339
                %v1341 = vld [vmem:[%s1299 + $0x50] sm:%s1290]
                %1342 = vst [vmem:[%s1300 + $0x50] sm:%s1290] %v1341
                %v1343 = vld [vmem:[%s1299 + $0x54] sm:%s1290]
                %1344 = vst [vmem:[%s1300 + $0x54] sm:%s1290] %v1343
                %v1345 = vld [vmem:[%s1299 + $0x58] sm:%s1290]
                %1346 = vst [vmem:[%s1300 + $0x58] sm:%s1290] %v1345
                %v1347 = vld [vmem:[%s1299 + $0x5c] sm:%s1290]
                %1348 = vst [vmem:[%s1300 + $0x5c] sm:%s1290] %v1347
                %v1349 = vld [vmem:[%s1299 + $0x60] sm:%s1290]
                %1350 = vst [vmem:[%s1300 + $0x60] sm:%s1290] %v1349
                %v1351 = vld [vmem:[%s1299 + $0x64] sm:%s1290]
                %1352 = vst [vmem:[%s1300 + $0x64] sm:%s1290] %v1351
                %v1353 = vld [vmem:[%s1299 + $0x68] sm:%s1290]
                %1354 = vst [vmem:[%s1300 + $0x68] sm:%s1290] %v1353
                %v1355 = vld [vmem:[%s1299 + $0x6c] sm:%s1290]
                %1356 = vst [vmem:[%s1300 + $0x6c] sm:%s1290] %v1355
                %v1357 = vld [vmem:[%s1299 + $0x70] sm:%s1290]
                %1358 = vst [vmem:[%s1300 + $0x70] sm:%s1290] %v1357
                %v1359 = vld [vmem:[%s1299 + $0x74] sm:%s1290]
                %1360 = vst [vmem:[%s1300 + $0x74] sm:%s1290] %v1359
                %v1361 = vld [vmem:[%s1299 + $0x78] sm:%s1290]
                %1362 = vst [vmem:[%s1300 + $0x78] sm:%s1290] %v1361
                %v1363 = vld [vmem:[%s1299 + $0x7c] sm:%s1290]
                %1364 = vst [vmem:[%s1300 + $0x7c] sm:%s1290] %v1363
                %s1365 = sadd.s32 1, %s1298
                %p1366 = scmp.ge.s32.totalorder %s1365, %s1291
                %s1367 = scalar_select %p1366, 0, %s1365
                %s1368 = smul.u32 %s1367, 128
                %s1369 = smul.u32 %s1367, 128
                %s1370 = scalar_lea.vmem %s1270, %s1368 [#allocation2]
                %s1371 = scalar_lea.vmem %s1281, %s1369
              $region53: #{dqn_forward.3} parent=47 // loop_footer
                %s1295 = sadd.s32 %s1293, 1
              $region54: #{dqn_forward.3} parent=47 // loop_footer_branch
                %1292 = sbr.rel target = $region50
              $region55: #{dqn_forward.3} parent=47 // loop_exit
                _
              %s1372 = sshrl.u32 %s1277, 5
              %s1373 = sand.u32 %s1277, 31
              %s1374 = smul.u32 %s1372, 32
              %s1375 = smul.u32 4, %s1374
              %s1376 = scalar_lea.vmem %s1270, %s1375 [#allocation2]
              %s1377 = smul.u32 4, %s1374
              %s1378 = scalar_lea.vmem %s1281, %s1377
              // While loop
              $region56: #{dqn_forward.3} parent=47 // loop_pre_header
                _
              $region57: #{dqn_forward.3} parent=47 // loop_header
                %s1380 = sphi 0, %s1382
                %p1381 = scmp.ge.s32.totalorder %s1380, %s1373
                %s1385 = sphi 0, %s1392
                %s1386 = sphi %s1376, %s1395
                %s1387 = sphi %s1378, %s1396
              $region58: #{dqn_forward.3} parent=47 // loop_header_branch
                %1384 = sbr.rel (%p1381) target = $region62
              $region59: #{dqn_forward.3} parent=47 // loop_body
                %v1388 = vld [vmem:[%s1386] sm:%s1290]
                %1389 = vst [vmem:[%s1387] sm:%s1290] %v1388
                %s1390 = sadd.s32 1, %s1385
                %p1391 = scmp.ge.s32.totalorder %s1390, %s1373
                %s1392 = scalar_select %p1391, 0, %s1390
                %s1393 = smul.u32 %s1392, 4
                %s1394 = smul.u32 %s1392, 4
                %s1395 = scalar_lea.vmem %s1376, %s1393 [#allocation2]
                %s1396 = scalar_lea.vmem %s1378, %s1394
              $region60: #{dqn_forward.3} parent=47 // loop_footer
                %s1382 = sadd.s32 %s1380, 1
              $region61: #{dqn_forward.3} parent=47 // loop_footer_branch
                %1379 = sbr.rel target = $region57
              $region62: #{dqn_forward.3} parent=47 // loop_exit
                _
            $region48: #{dqn_forward.3} parent=39 // pred_fallthru
              _
          $region40: #{dqn_forward.3} parent=35 // pred_fallthru
            _
          %1507 = vnop
        $region36: #{dqn_forward.3} parent=31 // pred_fallthru
          _
      $region32: #{dqn_forward.3} parent=5 // pred_fallthru
        _
      %p1508 = scmp.le.s32.totalorder 2, %s9
      // Predicated region
      $region81: #{dqn_forward.3} parent=5 // pred_check
        %p1509 = pneg %p1508
      $region82: #{dqn_forward.3} parent=5 // pred_check_branch
        %1511 = sbr.rel (%p1509) target = $region84
      $region83: #{dqn_forward.3} parent=5 // pred_region
        %s1512 = ssub.s32 %s9, 2
        // Predicated region
        $region85: #{dqn_forward.3} parent=83 // pred_check
          %p1513 = pneg %p106
        $region86: #{dqn_forward.3} parent=83 // pred_check_branch
          %1515 = sbr.rel (%p1513) target = $region88
        $region87: #{dqn_forward.3} parent=83 // pred_region
          %s1516 = sand.u32 %s91, 1
          %s1517 = sand.u32 %s91, 1
          %s1518 = smul.addr %s1517, 256
          %s1519 = scalar_lea.vmem [#allocation2], %s1518
        $region88: #{dqn_forward.3} parent=83 // pred_fallthru
          _
      $region84: #{dqn_forward.3} parent=5 // pred_fallthru
        _
    $region6: #{dqn_forward.3} parent=1 // loop_footer
      %s13 = sadd.s32 1, %s9
    $region7: #{dqn_forward.3} parent=1 // loop_footer_branch
      %8 = sbr.rel target = $region3
    $region8: #{dqn_forward.3} parent=1 // loop_exit
      _

// kernel: dqn_forward.4
$region0: #{dqn_forward.4}
  #allocation0 [shape = 'u32[]', space=smem, size = 0x4, offset = 0x4, fixed_abs, tag = 'smem constant byte address 0x4 - core index']
  #allocation1 [shape = 'u32[72,128]{1,0:T(1,128)}', space=vmem, size = 0x9000, scoped, tag = 'internal scratch']
  %s0 = inlined_call_operand.vmem [shape: bf16[288,896], index: 0, kind: input, shape index: {}]
  %s1 = inlined_call_operand.vmem [shape: bf16[896,128], index: 1, kind: input, shape index: {}]
  %s2 = inlined_call_operand.vmem [shape: f32[1,128], index: 2, kind: input, shape index: {}]
  %s3 = inlined_call_operand.vmem [shape: bf16[288,128], index: 3, kind: output, shape index: {}]
  %s4 = sld [smem:[#allocation0]]
  $region45: #{dqn_forward.4} parent=0
    _
  %s6 = ssub.s32 1, %s4
  %s7 = scalar_select 0, %s6, %s4
  loop: start=0, step=1, limit=4
  $region2: #{dqn_forward.4} parent=0 // loop_pre_header
    _
  $region3: #{dqn_forward.4} parent=0 // loop_header
    %s9 = sphi 0, %s13
    %p10 = scmp.ge.s32.totalorder %s9, 4
    %s19 = sphi 0, %s21
    %s22 = sphi 0, %s19
    %s23 = sphi 0, %s22
    %s39 = sphi 0, %s23
    %s43 = sphi 0, %s43
    %s45 = sphi 0, %s43
    %s46 = sphi 0, %s45
    %s60 = sphi 0, %s46
    %s64 = sphi 0, %s64
    %s66 = sphi 0, %s64
    %s67 = sphi 0, %s66
    %s81 = sphi 0, %s67
    %s87 = sphi 0, %s89
    %s90 = sphi 0, %s87
    %s91 = sphi 0, %s90
    %s107 = sphi 0, %s91
  $region4: #{dqn_forward.4} parent=0 // loop_header_branch
    %12 = sbr.rel (%p10) target = $region8
  $region5: #{dqn_forward.4} parent=0 // loop_body
    %s14 = ssub.s32 %s9, 1
    %s15 = ssub.s32 %s9, 2
    %s16 = sadd.s32 %s9, 1
    %s17 = ssub.s32 %s9, %s16
    %p18 = scmp.eq.s32.totalorder %s17, 0
    %s20 = sadd.s32 %s19, 1
    %s21 = scalar_select %p18, %s19, %s20
    %p24 = pneg %p18
    %p25 = scmp.eq.s32.totalorder %s9, 1
    %p26 = por %p24, %p25
    %p27 = scmp.ne.s32.totalorder %s19, %s22
    %p28 = scmp.eq.s32.totalorder %s9, 0
    %p29 = por %p27, %p28
    %p30 = scmp.ne.s32.totalorder %s19, %s22
    %p31 = scmp.eq.s32.totalorder %s14, 1
    %p32 = por %p30, %p31
    %p33 = scmp.ne.s32.totalorder %s22, %s23
    %p34 = scmp.eq.s32.totalorder %s14, 0
    %p35 = por %p33, %p34
    %p36 = scmp.ne.s32.totalorder %s22, %s23
    %p37 = scmp.eq.s32.totalorder %s15, 1
    %p38 = por %p36, %p37
    %p40 = scmp.ne.s32.totalorder %s23, %s39
    %p41 = scmp.eq.s32.totalorder %s15, 0
    %p42 = por %p40, %p41
    %s44 = sadd.s32 %s43, 1
    %p47 = scmp.eq.s32.totalorder %s9, 1
    %p48 = scmp.ne.s32.totalorder %s43, %s45
    %p49 = scmp.eq.s32.totalorder %s9, 0
    %p50 = por %p48, %p49
    %p51 = scmp.ne.s32.totalorder %s43, %s45
    %p52 = scmp.eq.s32.totalorder %s14, 1
    %p53 = por %p51, %p52
    %p54 = scmp.ne.s32.totalorder %s45, %s46
    %p55 = scmp.eq.s32.totalorder %s14, 0
    %p56 = por %p54, %p55
    %p57 = scmp.ne.s32.totalorder %s45, %s46
    %p58 = scmp.eq.s32.totalorder %s15, 1
    %p59 = por %p57, %p58
    %p61 = scmp.ne.s32.totalorder %s46, %s60
    %p62 = scmp.eq.s32.totalorder %s15, 0
    %p63 = por %p61, %p62
    %s65 = sadd.s32 %s64, 1
    %p68 = scmp.eq.s32.totalorder %s9, 1
    %p69 = scmp.ne.s32.totalorder %s64, %s66
    %p70 = scmp.eq.s32.totalorder %s9, 0
    %p71 = por %p69, %p70
    %p72 = scmp.ne.s32.totalorder %s64, %s66
    %p73 = scmp.eq.s32.totalorder %s14, 1
    %p74 = por %p72, %p73
    %p75 = scmp.ne.s32.totalorder %s66, %s67
    %p76 = scmp.eq.s32.totalorder %s14, 0
    %p77 = por %p75, %p76
    %p78 = scmp.ne.s32.totalorder %s66, %s67
    %p79 = scmp.eq.s32.totalorder %s15, 1
    %p80 = por %p78, %p79
    %p82 = scmp.ne.s32.totalorder %s67, %s81
    %p83 = scmp.eq.s32.totalorder %s15, 0
    %p84 = por %p82, %p83
    %s85 = ssub.s32 %s9, %s16
    %p86 = scmp.eq.s32.totalorder %s85, 0
    %s88 = sadd.s32 %s87, 1
    %s89 = scalar_select %p86, %s87, %s88
    %p92 = pneg %p86
    %p93 = scmp.eq.s32.totalorder %s9, 1
    %p94 = por %p92, %p93
    %p95 = scmp.ne.s32.totalorder %s87, %s90
    %p96 = scmp.eq.s32.totalorder %s9, 0
    %p97 = por %p95, %p96
    %p98 = scmp.ne.s32.totalorder %s87, %s90
    %p99 = scmp.eq.s32.totalorder %s14, 1
    %p100 = por %p98, %p99
    %p101 = scmp.ne.s32.totalorder %s90, %s91
    %p102 = scmp.eq.s32.totalorder %s14, 0
    %p103 = por %p101, %p102
    %p104 = scmp.ne.s32.totalorder %s90, %s91
    %p105 = scmp.eq.s32.totalorder %s15, 1
    %p106 = por %p104, %p105
    %p108 = scmp.ne.s32.totalorder %s91, %s107
    %p109 = scmp.eq.s32.totalorder %s15, 0
    %p110 = por %p108, %p109
    %p111 = scmp.le.s32.totalorder 1, %s9
    %p112 = scmp.lt.s32.totalorder %s9, 3
    %p113 = pnand %p111, %p112
    %p114 = pneg %p113
    // Predicated region
    $region9: #{dqn_forward.4} parent=5 // pred_check
      _
    $region10: #{dqn_forward.4} parent=5 // pred_check_branch
      %116 = sbr.rel (%p113) target = $region12
    $region11: #{dqn_forward.4} parent=5 // pred_region
      %s117 = ssub.s32 %s9, 1
      // Predicated region
      $region13: #{dqn_forward.4} parent=11 // pred_check
        %p118 = pneg %p56
      $region14: #{dqn_forward.4} parent=11 // pred_check_branch
        %120 = sbr.rel (%p118) target = $region16
      $region15: #{dqn_forward.4} parent=11 // pred_region
        _
      $region16: #{dqn_forward.4} parent=11 // pred_fallthru
        _
      // Predicated region
      $region17: #{dqn_forward.4} parent=11 // pred_check
        %p121 = pneg %p77
      $region18: #{dqn_forward.4} parent=11 // pred_check_branch
        %123 = sbr.rel (%p121) target = $region20
      $region19: #{dqn_forward.4} parent=11 // pred_region
        _
      $region20: #{dqn_forward.4} parent=11 // pred_fallthru
        _
    $region12: #{dqn_forward.4} parent=5 // pred_fallthru
      _
    %p124 = scmp.lt.s32.totalorder %s9, 2
    // Predicated region
    $region21: #{dqn_forward.4} parent=5 // pred_check
      %p125 = pneg %p124
    $region22: #{dqn_forward.4} parent=5 // pred_check_branch
      %127 = sbr.rel (%p125) target = $region24
    $region23: #{dqn_forward.4} parent=5 // pred_region
      // Predicated region
      $region25: #{dqn_forward.4} parent=23 // pred_check
        %p128 = pneg %p29
      $region26: #{dqn_forward.4} parent=23 // pred_check_branch
        %130 = sbr.rel (%p128) target = $region28
      $region27: #{dqn_forward.4} parent=23 // pred_region
        %s131 = smul.u32 18, %s9
        %p132 = scmp.lt.s32.totalorder %s131, 35
        %s133 = scalar_select %p132, %s131, 35
        %s134 = smul.addr %s133, 7
        %s135 = smul.addr %s134, 4
        %s136 = scalar_lea.vmem %s0, %s135
        %s137 = smul.u32 18, %s9
      $region28: #{dqn_forward.4} parent=23 // pred_fallthru
        _
    $region24: #{dqn_forward.4} parent=5 // pred_fallthru
      _
    %p138 = scmp.le.s32.totalorder 1, %s9
    %p139 = scmp.lt.s32.totalorder %s9, 3
    %p140 = pnand %p138, %p139
    %p141 = pneg %p140
    // Predicated region
    $region29: #{dqn_forward.4} parent=5 // pred_check
      _
    $region30: #{dqn_forward.4} parent=5 // pred_check_branch
      %143 = sbr.rel (%p140) target = $region32
    $region31: #{dqn_forward.4} parent=5 // pred_region
      %s144 = ssub.s32 %s9, 1
      %s145 = smul.u32 18, %s14
      %p146 = scmp.lt.s32.totalorder %s145, 35
      %s147 = scalar_select %p146, %s145, 35
      %s148 = smul.addr %s147, 7
      %s149 = smul.addr %s148, 4
      %s150 = scalar_lea.vmem %s0, %s149
      %p151 = pneg %p35
      %p152 = pneg %p32
      %p153 = pneg %p56
      %p154 = pneg %p53
      %p155 = pneg %p77
      %p156 = pneg %p74
      %p157 = pneg %p103
      %p158 = pneg %p100
      %s159 = smul.u32 18, %s14
      %p160 = scmp.lt.s32.totalorder %s159, 35
      %s161 = scalar_select %p160, %s159, 35
      %s162 = smul.addr %s161, 4
      %s163 = scalar_lea.vmem %s3, %s162
      %s164 = smul.u32 18, %s14
      %p165 = scmp.lt.s32.totalorder %s164, 35
      %s166 = scalar_select %p165, %s164, 35
      %s167 = smul.addr %s166, 7
      %s168 = smul.addr %s167, 4
      %s169 = scalar_lea.vmem %s0, %s168
      %s170 = smul.u32 18, %s14
      %s171 = smul.u32 18, %s14
      %p172 = scmp.lt.s32.totalorder %s171, 35
      %s173 = scalar_select %p172, %s171, 35
      %s174 = smul.addr %s173, 4
      %s175 = scalar_lea.vmem %s3, %s174
      %s176 = smul.u32 18, %s14
      %v177 = vld [vmem:[%s169] sm:$0xff]
      %v178 = vld [vmem:[%s169 + $0x8] sm:$0xff]
      %v179 = vld [vmem:[%s169 + $0x10] sm:$0xff]
      %v180 = vld [vmem:[%s169 + $0x18] sm:$0xf]
      %v181 = vld [vmem:[%s169 + $0x1c] sm:$0xff]
      %v182 = vld [vmem:[%s169 + $0x24] sm:$0xff]
      %v183 = vld [vmem:[%s169 + $0x2c] sm:$0xff]
      %v184 = vld [vmem:[%s169 + $0x34] sm:$0xf]
      %v185 = vld [vmem:[%s169 + $0x38] sm:$0xff]
      %v186 = vld [vmem:[%s169 + $0x40] sm:$0xff]
      %v187 = vld [vmem:[%s169 + $0x48] sm:$0xff]
      %v188 = vld [vmem:[%s169 + $0x50] sm:$0xf]
      %v189 = vld [vmem:[%s169 + $0x54] sm:$0xff]
      %v190 = vld [vmem:[%s169 + $0x5c] sm:$0xff]
      %v191 = vld [vmem:[%s169 + $0x64] sm:$0xff]
      %v192 = vld [vmem:[%s169 + $0x6c] sm:$0xf]
      %v193 = vld [vmem:[%s169 + $0x70] sm:$0xff]
      %v194 = vld [vmem:[%s169 + $0x78] sm:$0xff]
      %v195 = vld [vmem:[%s169 + $0x80] sm:$0xff]
      %v196 = vld [vmem:[%s169 + $0x88] sm:$0xf]
      %v197 = vld [vmem:[%s169 + $0x8c] sm:$0xff]
      %v198 = vld [vmem:[%s169 + $0x94] sm:$0xff]
      %v199 = vld [vmem:[%s169 + $0x9c] sm:$0xff]
      %v200 = vld [vmem:[%s169 + $0xa4] sm:$0xf]
      %v201 = vld [vmem:[%s169 + $0xa8] sm:$0xff]
      %v202 = vld [vmem:[%s169 + $0xb0] sm:$0xff]
      %v203 = vld [vmem:[%s169 + $0xb8] sm:$0xff]
      %v204 = vld [vmem:[%s169 + $0xc0] sm:$0xf]
      %v205 = vld [vmem:[%s169 + $0xc4] sm:$0xff]
      %v206 = vld [vmem:[%s169 + $0xcc] sm:$0xff]
      %v207 = vld [vmem:[%s169 + $0xd4] sm:$0xff]
      %v208 = vld [vmem:[%s169 + $0xdc] sm:$0xf]
      %v209 = vld [vmem:[%s169 + $0xe0] sm:$0xff]
      %v210 = vld [vmem:[%s169 + $0xe8] sm:$0xff]
      %v211 = vld [vmem:[%s169 + $0xf0] sm:$0xff]
      %v212 = vld [vmem:[%s169 + $0xf8] sm:$0xf]
      %v213 = vld [vmem:[%s169 + $0xfc] sm:$0xff]
      %v214 = vld [vmem:[%s169 + $0x104] sm:$0xff]
      %v215 = vld [vmem:[%s169 + $0x10c] sm:$0xff]
      %v216 = vld [vmem:[%s169 + $0x114] sm:$0xf]
      %v217 = vld [vmem:[%s169 + $0x118] sm:$0xff]
      %v218 = vld [vmem:[%s169 + $0x120] sm:$0xff]
      %v219 = vld [vmem:[%s169 + $0x128] sm:$0xff]
      %v220 = vld [vmem:[%s169 + $0x130] sm:$0xf]
      %v221 = vld [vmem:[%s169 + $0x134] sm:$0xff]
      %v222 = vld [vmem:[%s169 + $0x13c] sm:$0xff]
      %v223 = vld [vmem:[%s169 + $0x144] sm:$0xff]
      %v224 = vld [vmem:[%s169 + $0x14c] sm:$0xf]
      %v225 = vld [vmem:[%s169 + $0x150] sm:$0xff]
      %v226 = vld [vmem:[%s169 + $0x158] sm:$0xff]
      %v227 = vld [vmem:[%s169 + $0x160] sm:$0xff]
      %v228 = vld [vmem:[%s169 + $0x168] sm:$0xf]
      %v229 = vld [vmem:[%s169 + $0x16c] sm:$0xff]
      %v230 = vld [vmem:[%s169 + $0x174] sm:$0xff]
      %v231 = vld [vmem:[%s169 + $0x17c] sm:$0xff]
      %v232 = vld [vmem:[%s169 + $0x184] sm:$0xf]
      %v233 = vld [vmem:[%s169 + $0x188] sm:$0xff]
      %v234 = vld [vmem:[%s169 + $0x190] sm:$0xff]
      %v235 = vld [vmem:[%s169 + $0x198] sm:$0xff]
      %v236 = vld [vmem:[%s169 + $0x1a0] sm:$0xf]
      %v237 = vld [vmem:[%s169 + $0x1a4] sm:$0xff]
      %v238 = vld [vmem:[%s169 + $0x1ac] sm:$0xff]
      %v239 = vld [vmem:[%s169 + $0x1b4] sm:$0xff]
      %v240 = vld [vmem:[%s169 + $0x1bc] sm:$0xf]
      %v241 = vld [vmem:[%s169 + $0x1c0] sm:$0xff]
      %v242 = vld [vmem:[%s169 + $0x1c8] sm:$0xff]
      %v243 = vld [vmem:[%s169 + $0x1d0] sm:$0xff]
      %v244 = vld [vmem:[%s169 + $0x1d8] sm:$0xf]
      %v245 = vld [vmem:[%s169 + $0x1dc] sm:$0xff]
      %v246 = vld [vmem:[%s169 + $0x1e4] sm:$0xff]
      %v247 = vld [vmem:[%s169 + $0x1ec] sm:$0xff]
      %v248 = vld [vmem:[%s169 + $0x1f4] sm:$0xf]
      %v249 = vld [vmem:[%s1] sm:$0xf]
      %v250 = vld [vmem:[%s1 + $0x4] sm:$0xf]
      %v251 = vld [vmem:[%s1 + $0x8] sm:$0xf]
      %v252 = vld [vmem:[%s1 + $0xc] sm:$0xf]
      %v253 = vld [vmem:[%s1 + $0x10] sm:$0xf]
      %v254 = vld [vmem:[%s1 + $0x14] sm:$0xf]
      %v255 = vld [vmem:[%s1 + $0x18] sm:$0xf]
      %v256 = vld [vmem:[%s1 + $0x1c] sm:$0xf]
      %v257 = vld [vmem:[%s1 + $0x20] sm:$0xf]
      %v258 = vld [vmem:[%s1 + $0x24] sm:$0xf]
      %v259 = vld [vmem:[%s1 + $0x28] sm:$0xf]
      %v260 = vld [vmem:[%s1 + $0x2c] sm:$0xf]
      %v261 = vld [vmem:[%s1 + $0x30] sm:$0xf]
      %v262 = vld [vmem:[%s1 + $0x34] sm:$0xf]
      %v263 = vld [vmem:[%s1 + $0x38] sm:$0xf]
      %v264 = vld [vmem:[%s1 + $0x3c] sm:$0xf]
      %v265 = vld [vmem:[%s1 + $0x40] sm:$0xf]
      %v266 = vld [vmem:[%s1 + $0x44] sm:$0xf]
      %v267 = vld [vmem:[%s1 + $0x48] sm:$0xf]
      %v268 = vld [vmem:[%s1 + $0x4c] sm:$0xf]
      %v269 = vld [vmem:[%s1 + $0x50] sm:$0xf]
      %v270 = vld [vmem:[%s1 + $0x54] sm:$0xf]
      %v271 = vld [vmem:[%s1 + $0x58] sm:$0xf]
      %v272 = vld [vmem:[%s1 + $0x5c] sm:$0xf]
      %v273 = vld [vmem:[%s1 + $0x60] sm:$0xf]
      %v274 = vld [vmem:[%s1 + $0x64] sm:$0xf]
      %v275 = vld [vmem:[%s1 + $0x68] sm:$0xf]
      %v276 = vld [vmem:[%s1 + $0x6c] sm:$0xf]
      %v277 = vld [vmem:[%s1 + $0x70] sm:$0xf]
      %v278 = vld [vmem:[%s1 + $0x74] sm:$0xf]
      %v279 = vld [vmem:[%s1 + $0x78] sm:$0xf]
      %v280 = vld [vmem:[%s1 + $0x7c] sm:$0xf]
      %v281 = vld [vmem:[%s1 + $0x80] sm:$0xf]
      %v282 = vld [vmem:[%s1 + $0x84] sm:$0xf]
      %v283 = vld [vmem:[%s1 + $0x88] sm:$0xf]
      %v284 = vld [vmem:[%s1 + $0x8c] sm:$0xf]
      %v285 = vld [vmem:[%s1 + $0x90] sm:$0xf]
      %v286 = vld [vmem:[%s1 + $0x94] sm:$0xf]
      %v287 = vld [vmem:[%s1 + $0x98] sm:$0xf]
      %v288 = vld [vmem:[%s1 + $0x9c] sm:$0xf]
      %v289 = vld [vmem:[%s1 + $0xa0] sm:$0xf]
      %v290 = vld [vmem:[%s1 + $0xa4] sm:$0xf]
      %v291 = vld [vmem:[%s1 + $0xa8] sm:$0xf]
      %v292 = vld [vmem:[%s1 + $0xac] sm:$0xf]
      %v293 = vld [vmem:[%s1 + $0xb0] sm:$0xf]
      %v294 = vld [vmem:[%s1 + $0xb4] sm:$0xf]
      %v295 = vld [vmem:[%s1 + $0xb8] sm:$0xf]
      %v296 = vld [vmem:[%s1 + $0xbc] sm:$0xf]
      %v297 = vld [vmem:[%s1 + $0xc0] sm:$0xf]
      %v298 = vld [vmem:[%s1 + $0xc4] sm:$0xf]
      %v299 = vld [vmem:[%s1 + $0xc8] sm:$0xf]
      %v300 = vld [vmem:[%s1 + $0xcc] sm:$0xf]
      %v301 = vld [vmem:[%s1 + $0xd0] sm:$0xf]
      %v302 = vld [vmem:[%s1 + $0xd4] sm:$0xf]
      %v303 = vld [vmem:[%s1 + $0xd8] sm:$0xf]
      %v304 = vld [vmem:[%s1 + $0xdc] sm:$0xf]
      %v305 = vld [vmem:[%s1 + $0xe0] sm:$0xf]
      %v306 = vld [vmem:[%s1 + $0xe4] sm:$0xf]
      %v307 = vld [vmem:[%s1 + $0xe8] sm:$0xf]
      %v308 = vld [vmem:[%s1 + $0xec] sm:$0xf]
      %v309 = vld [vmem:[%s1 + $0xf0] sm:$0xf]
      %v310 = vld [vmem:[%s1 + $0xf4] sm:$0xf]
      %v311 = vld [vmem:[%s1 + $0xf8] sm:$0xf]
      %v312 = vld [vmem:[%s1 + $0xfc] sm:$0xf]
      %v313 = vld [vmem:[%s1 + $0x100] sm:$0xf]
      %v314 = vld [vmem:[%s1 + $0x104] sm:$0xf]
      %v315 = vld [vmem:[%s1 + $0x108] sm:$0xf]
      %v316 = vld [vmem:[%s1 + $0x10c] sm:$0xf]
      %v317 = vld [vmem:[%s1 + $0x110] sm:$0xf]
      %v318 = vld [vmem:[%s1 + $0x114] sm:$0xf]
      %v319 = vld [vmem:[%s1 + $0x118] sm:$0xf]
      %v320 = vld [vmem:[%s1 + $0x11c] sm:$0xf]
      %v321 = vld [vmem:[%s1 + $0x120] sm:$0xf]
      %v322 = vld [vmem:[%s1 + $0x124] sm:$0xf]
      %v323 = vld [vmem:[%s1 + $0x128] sm:$0xf]
      %v324 = vld [vmem:[%s1 + $0x12c] sm:$0xf]
      %v325 = vld [vmem:[%s1 + $0x130] sm:$0xf]
      %v326 = vld [vmem:[%s1 + $0x134] sm:$0xf]
      %v327 = vld [vmem:[%s1 + $0x138] sm:$0xf]
      %v328 = vld [vmem:[%s1 + $0x13c] sm:$0xf]
      %v329 = vld [vmem:[%s1 + $0x140] sm:$0xf]
      %v330 = vld [vmem:[%s1 + $0x144] sm:$0xf]
      %v331 = vld [vmem:[%s1 + $0x148] sm:$0xf]
      %v332 = vld [vmem:[%s1 + $0x14c] sm:$0xf]
      %v333 = vld [vmem:[%s1 + $0x150] sm:$0xf]
      %v334 = vld [vmem:[%s1 + $0x154] sm:$0xf]
      %v335 = vld [vmem:[%s1 + $0x158] sm:$0xf]
      %v336 = vld [vmem:[%s1 + $0x15c] sm:$0xf]
      %v337 = vld [vmem:[%s1 + $0x160] sm:$0xf]
      %v338 = vld [vmem:[%s1 + $0x164] sm:$0xf]
      %v339 = vld [vmem:[%s1 + $0x168] sm:$0xf]
      %v340 = vld [vmem:[%s1 + $0x16c] sm:$0xf]
      %v341 = vld [vmem:[%s1 + $0x170] sm:$0xf]
      %v342 = vld [vmem:[%s1 + $0x174] sm:$0xf]
      %v343 = vld [vmem:[%s1 + $0x178] sm:$0xf]
      %v344 = vld [vmem:[%s1 + $0x17c] sm:$0xf]
      %v345 = vld [vmem:[%s1 + $0x180] sm:$0xf]
      %v346 = vld [vmem:[%s1 + $0x184] sm:$0xf]
      %v347 = vld [vmem:[%s1 + $0x188] sm:$0xf]
      %v348 = vld [vmem:[%s1 + $0x18c] sm:$0xf]
      %v349 = vld [vmem:[%s1 + $0x190] sm:$0xf]
      %v350 = vld [vmem:[%s1 + $0x194] sm:$0xf]
      %v351 = vld [vmem:[%s1 + $0x198] sm:$0xf]
      %v352 = vld [vmem:[%s1 + $0x19c] sm:$0xf]
      %v353 = vld [vmem:[%s1 + $0x1a0] sm:$0xf]
      %v354 = vld [vmem:[%s1 + $0x1a4] sm:$0xf]
      %v355 = vld [vmem:[%s1 + $0x1a8] sm:$0xf]
      %v356 = vld [vmem:[%s1 + $0x1ac] sm:$0xf]
      %v357 = vld [vmem:[%s1 + $0x1b0] sm:$0xf]
      %v358 = vld [vmem:[%s1 + $0x1b4] sm:$0xf]
      %v359 = vld [vmem:[%s1 + $0x1b8] sm:$0xf]
      %v360 = vld [vmem:[%s1 + $0x1bc] sm:$0xf]
      %v361 = vld [vmem:[%s2] sm:$0x1]
      %v363 = vperm.slane %v361, 0
      %v437 = vunpack.c.l.b16 %v177
      %v438 = vunpack.c.h.b16 %v177
      %v439 = vunpack.c.l.b16 %v178
      %v440 = vunpack.c.h.b16 %v178
      %v441 = vunpack.c.l.b16 %v179
      %v442 = vunpack.c.h.b16 %v179
      %v443 = vunpack.c.l.b16 %v180
      %v444 = vunpack.c.l.b16 %v181
      %v445 = vunpack.c.h.b16 %v181
      %v446 = vunpack.c.l.b16 %v182
      %v447 = vunpack.c.h.b16 %v182
      %v448 = vunpack.c.l.b16 %v183
      %v449 = vunpack.c.h.b16 %v183
      %v450 = vunpack.c.l.b16 %v184
      %v451 = vunpack.c.l.b16 %v185
      %v452 = vunpack.c.h.b16 %v185
      %v453 = vunpack.c.l.b16 %v186
      %v454 = vunpack.c.h.b16 %v186
      %v455 = vunpack.c.l.b16 %v187
      %v456 = vunpack.c.h.b16 %v187
      %v457 = vunpack.c.l.b16 %v188
      %v458 = vunpack.c.l.b16 %v189
      %v459 = vunpack.c.h.b16 %v189
      %v460 = vunpack.c.l.b16 %v190
      %v461 = vunpack.c.h.b16 %v190
      %v462 = vunpack.c.l.b16 %v191
      %v463 = vunpack.c.h.b16 %v191
      %v464 = vunpack.c.l.b16 %v192
      %v465 = vunpack.c.l.b16 %v193
      %v466 = vunpack.c.h.b16 %v193
      %v467 = vunpack.c.l.b16 %v194
      %v468 = vunpack.c.h.b16 %v194
      %v469 = vunpack.c.l.b16 %v195
      %v470 = vunpack.c.h.b16 %v195
      %v471 = vunpack.c.l.b16 %v196
      %v472 = vunpack.c.l.b16 %v197
      %v473 = vunpack.c.h.b16 %v197
      %v474 = vunpack.c.l.b16 %v198
      %v475 = vunpack.c.h.b16 %v198
      %v476 = vunpack.c.l.b16 %v199
      %v477 = vunpack.c.h.b16 %v199
      %v478 = vunpack.c.l.b16 %v200
      %v479 = vunpack.c.l.b16 %v201
      %v480 = vunpack.c.h.b16 %v201
      %v481 = vunpack.c.l.b16 %v202
      %v482 = vunpack.c.h.b16 %v202
      %v483 = vunpack.c.l.b16 %v203
      %v484 = vunpack.c.h.b16 %v203
      %v485 = vunpack.c.l.b16 %v204
      %v486 = vunpack.c.l.b16 %v205
      %v487 = vunpack.c.h.b16 %v205
      %v488 = vunpack.c.l.b16 %v206
      %v489 = vunpack.c.h.b16 %v206
      %v490 = vunpack.c.l.b16 %v207
      %v491 = vunpack.c.h.b16 %v207
      %v492 = vunpack.c.l.b16 %v208
      %v493 = vunpack.c.l.b16 %v209
      %v494 = vunpack.c.h.b16 %v209
      %v495 = vunpack.c.l.b16 %v210
      %v496 = vunpack.c.h.b16 %v210
      %v497 = vunpack.c.l.b16 %v211
      %v498 = vunpack.c.h.b16 %v211
      %v499 = vunpack.c.l.b16 %v212
      %v500 = vunpack.c.l.b16 %v213
      %v501 = vunpack.c.h.b16 %v213
      %v502 = vunpack.c.l.b16 %v214
      %v503 = vunpack.c.h.b16 %v214
      %v504 = vunpack.c.l.b16 %v215
      %v505 = vunpack.c.h.b16 %v215
      %v506 = vunpack.c.l.b16 %v216
      %v507 = vunpack.c.l.b16 %v217
      %v508 = vunpack.c.h.b16 %v217
      %v509 = vunpack.c.l.b16 %v218
      %v510 = vunpack.c.h.b16 %v218
      %v511 = vunpack.c.l.b16 %v219
      %v512 = vunpack.c.h.b16 %v219
      %v513 = vunpack.c.l.b16 %v220
      %v514 = vunpack.c.l.b16 %v221
      %v515 = vunpack.c.h.b16 %v221
      %v516 = vunpack.c.l.b16 %v222
      %v517 = vunpack.c.h.b16 %v222
      %v518 = vunpack.c.l.b16 %v223
      %v519 = vunpack.c.h.b16 %v223
      %v520 = vunpack.c.l.b16 %v224
      %v521 = vunpack.c.l.b16 %v225
      %v522 = vunpack.c.h.b16 %v225
      %v523 = vunpack.c.l.b16 %v226
      %v524 = vunpack.c.h.b16 %v226
      %v525 = vunpack.c.l.b16 %v227
      %v526 = vunpack.c.h.b16 %v227
      %v527 = vunpack.c.l.b16 %v228
      %v528 = vunpack.c.l.b16 %v229
      %v529 = vunpack.c.h.b16 %v229
      %v530 = vunpack.c.l.b16 %v230
      %v531 = vunpack.c.h.b16 %v230
      %v532 = vunpack.c.l.b16 %v231
      %v533 = vunpack.c.h.b16 %v231
      %v534 = vunpack.c.l.b16 %v232
      %v535 = vunpack.c.l.b16 %v233
      %v536 = vunpack.c.h.b16 %v233
      %v537 = vunpack.c.l.b16 %v234
      %v538 = vunpack.c.h.b16 %v234
      %v539 = vunpack.c.l.b16 %v235
      %v540 = vunpack.c.h.b16 %v235
      %v541 = vunpack.c.l.b16 %v236
      %v542 = vunpack.c.l.b16 %v237
      %v543 = vunpack.c.h.b16 %v237
      %v544 = vunpack.c.l.b16 %v238
      %v545 = vunpack.c.h.b16 %v238
      %v546 = vunpack.c.l.b16 %v239
      %v547 = vunpack.c.h.b16 %v239
      %v548 = vunpack.c.l.b16 %v240
      %v549 = vunpack.c.l.b16 %v241
      %v550 = vunpack.c.h.b16 %v241
      %v551 = vunpack.c.l.b16 %v242
      %v552 = vunpack.c.h.b16 %v242
      %v553 = vunpack.c.l.b16 %v243
      %v554 = vunpack.c.h.b16 %v243
      %v555 = vunpack.c.l.b16 %v244
      %v556 = vunpack.c.l.b16 %v245
      %v557 = vunpack.c.h.b16 %v245
      %v558 = vunpack.c.l.b16 %v246
      %v559 = vunpack.c.h.b16 %v246
      %v560 = vunpack.c.l.b16 %v247
      %v561 = vunpack.c.h.b16 %v247
      %v562 = vunpack.c.l.b16 %v248
      %v563 = vpack.c.b16 %v444, %v437
      %v564 = vpack.c.b16 %v445, %v438
      %v565 = vpack.c.b16 %v446, %v439
      %v566 = vpack.c.b16 %v447, %v440
      %v567 = vpack.c.b16 %v448, %v441
      %v568 = vpack.c.b16 %v449, %v442
      %v569 = vpack.c.b16 %v450, %v443
      %v570 = vpack.c.b16 %v458, %v451
      %v571 = vpack.c.b16 %v459, %v452
      %v572 = vpack.c.b16 %v460, %v453
      %v573 = vpack.c.b16 %v461, %v454
      %v574 = vpack.c.b16 %v462, %v455
      %v575 = vpack.c.b16 %v463, %v456
      %v576 = vpack.c.b16 %v464, %v457
      %v577 = vpack.c.b16 %v472, %v465
      %v578 = vpack.c.b16 %v473, %v466
      %v579 = vpack.c.b16 %v474, %v467
      %v580 = vpack.c.b16 %v475, %v468
      %v581 = vpack.c.b16 %v476, %v469
      %v582 = vpack.c.b16 %v477, %v470
      %v583 = vpack.c.b16 %v478, %v471
      %v584 = vpack.c.b16 %v486, %v479
      %v585 = vpack.c.b16 %v487, %v480
      %v586 = vpack.c.b16 %v488, %v481
      %v587 = vpack.c.b16 %v489, %v482
      %v588 = vpack.c.b16 %v490, %v483
      %v589 = vpack.c.b16 %v491, %v484
      %v590 = vpack.c.b16 %v492, %v485
      %v591 = vpack.c.b16 %v500, %v493
      %v592 = vpack.c.b16 %v501, %v494
      %v593 = vpack.c.b16 %v502, %v495
      %v594 = vpack.c.b16 %v503, %v496
      %v595 = vpack.c.b16 %v504, %v497
      %v596 = vpack.c.b16 %v505, %v498
      %v597 = vpack.c.b16 %v506, %v499
      %v598 = vpack.c.b16 %v514, %v507
      %v599 = vpack.c.b16 %v515, %v508
      %v600 = vpack.c.b16 %v516, %v509
      %v601 = vpack.c.b16 %v517, %v510
      %v602 = vpack.c.b16 %v518, %v511
      %v603 = vpack.c.b16 %v519, %v512
      %v604 = vpack.c.b16 %v520, %v513
      %v605 = vpack.c.b16 %v528, %v521
      %v606 = vpack.c.b16 %v529, %v522
      %v607 = vpack.c.b16 %v530, %v523
      %v608 = vpack.c.b16 %v531, %v524
      %v609 = vpack.c.b16 %v532, %v525
      %v610 = vpack.c.b16 %v533, %v526
      %v611 = vpack.c.b16 %v534, %v527
      %v612 = vpack.c.b16 %v542, %v535
      %v613 = vpack.c.b16 %v543, %v536
      %v614 = vpack.c.b16 %v544, %v537
      %v615 = vpack.c.b16 %v545, %v538
      %v616 = vpack.c.b16 %v546, %v539
      %v617 = vpack.c.b16 %v547, %v540
      %v618 = vpack.c.b16 %v548, %v541
      %v619 = vpack.c.b16 %v556, %v549
      %v620 = vpack.c.b16 %v557, %v550
      %v621 = vpack.c.b16 %v558, %v551
      %v622 = vpack.c.b16 %v559, %v552
      %v623 = vpack.c.b16 %v560, %v553
      %v624 = vpack.c.b16 %v561, %v554
      %v625 = vpack.c.b16 %v562, %v555
      %v801 = vunpack.c.l.b16 %v249
      %v802 = vunpack.c.l.b16 %v250
      %v803 = vunpack.c.l.b16 %v251
      %v804 = vunpack.c.l.b16 %v252
      %v805 = vunpack.c.l.b16 %v253
      %v806 = vunpack.c.l.b16 %v254
      %v807 = vunpack.c.l.b16 %v255
      %v808 = vunpack.c.l.b16 %v256
      %v809 = vunpack.c.l.b16 %v257
      %v810 = vunpack.c.l.b16 %v258
      %v811 = vunpack.c.l.b16 %v259
      %v812 = vunpack.c.l.b16 %v260
      %v813 = vunpack.c.l.b16 %v261
      %v814 = vunpack.c.l.b16 %v262
      %v815 = vunpack.c.l.b16 %v263
      %v816 = vunpack.c.l.b16 %v264
      %v817 = vunpack.c.l.b16 %v265
      %v818 = vunpack.c.l.b16 %v266
      %v819 = vunpack.c.l.b16 %v267
      %v820 = vunpack.c.l.b16 %v268
      %v821 = vunpack.c.l.b16 %v269
      %v822 = vunpack.c.l.b16 %v270
      %v823 = vunpack.c.l.b16 %v271
      %v824 = vunpack.c.l.b16 %v272
      %v825 = vunpack.c.l.b16 %v273
      %v826 = vunpack.c.l.b16 %v274
      %v827 = vunpack.c.l.b16 %v275
      %v828 = vunpack.c.l.b16 %v276
      %v829 = vunpack.c.l.b16 %v277
      %v830 = vunpack.c.l.b16 %v278
      %v831 = vunpack.c.l.b16 %v279
      %v832 = vunpack.c.l.b16 %v280
      %v833 = vunpack.c.l.b16 %v281
      %v834 = vunpack.c.l.b16 %v282
      %v835 = vunpack.c.l.b16 %v283
      %v836 = vunpack.c.l.b16 %v284
      %v837 = vunpack.c.l.b16 %v285
      %v838 = vunpack.c.l.b16 %v286
      %v839 = vunpack.c.l.b16 %v287
      %v840 = vunpack.c.l.b16 %v288
      %v841 = vunpack.c.l.b16 %v289
      %v842 = vunpack.c.l.b16 %v290
      %v843 = vunpack.c.l.b16 %v291
      %v844 = vunpack.c.l.b16 %v292
      %v845 = vunpack.c.l.b16 %v293
      %v846 = vunpack.c.l.b16 %v294
      %v847 = vunpack.c.l.b16 %v295
      %v848 = vunpack.c.l.b16 %v296
      %v849 = vunpack.c.l.b16 %v297
      %v850 = vunpack.c.l.b16 %v298
      %v851 = vunpack.c.l.b16 %v299
      %v852 = vunpack.c.l.b16 %v300
      %v853 = vunpack.c.l.b16 %v301
      %v854 = vunpack.c.l.b16 %v302
      %v855 = vunpack.c.l.b16 %v303
      %v856 = vunpack.c.l.b16 %v304
      %v857 = vunpack.c.l.b16 %v305
      %v858 = vunpack.c.l.b16 %v306
      %v859 = vunpack.c.l.b16 %v307
      %v860 = vunpack.c.l.b16 %v308
      %v861 = vunpack.c.l.b16 %v309
      %v862 = vunpack.c.l.b16 %v310
      %v863 = vunpack.c.l.b16 %v311
      %v864 = vunpack.c.l.b16 %v312
      %v865 = vunpack.c.l.b16 %v313
      %v866 = vunpack.c.l.b16 %v314
      %v867 = vunpack.c.l.b16 %v315
      %v868 = vunpack.c.l.b16 %v316
      %v869 = vunpack.c.l.b16 %v317
      %v870 = vunpack.c.l.b16 %v318
      %v871 = vunpack.c.l.b16 %v319
      %v872 = vunpack.c.l.b16 %v320
      %v873 = vunpack.c.l.b16 %v321
      %v874 = vunpack.c.l.b16 %v322
      %v875 = vunpack.c.l.b16 %v323
      %v876 = vunpack.c.l.b16 %v324
      %v877 = vunpack.c.l.b16 %v325
      %v878 = vunpack.c.l.b16 %v326
      %v879 = vunpack.c.l.b16 %v327
      %v880 = vunpack.c.l.b16 %v328
      %v881 = vunpack.c.l.b16 %v329
      %v882 = vunpack.c.l.b16 %v330
      %v883 = vunpack.c.l.b16 %v331
      %v884 = vunpack.c.l.b16 %v332
      %v885 = vunpack.c.l.b16 %v333
      %v886 = vunpack.c.l.b16 %v334
      %v887 = vunpack.c.l.b16 %v335
      %v888 = vunpack.c.l.b16 %v336
      %v889 = vunpack.c.l.b16 %v337
      %v890 = vunpack.c.l.b16 %v338
      %v891 = vunpack.c.l.b16 %v339
      %v892 = vunpack.c.l.b16 %v340
      %v893 = vunpack.c.l.b16 %v341
      %v894 = vunpack.c.l.b16 %v342
      %v895 = vunpack.c.l.b16 %v343
      %v896 = vunpack.c.l.b16 %v344
      %v897 = vunpack.c.l.b16 %v345
      %v898 = vunpack.c.l.b16 %v346
      %v899 = vunpack.c.l.b16 %v347
      %v900 = vunpack.c.l.b16 %v348
      %v901 = vunpack.c.l.b16 %v349
      %v902 = vunpack.c.l.b16 %v350
      %v903 = vunpack.c.l.b16 %v351
      %v904 = vunpack.c.l.b16 %v352
      %v905 = vunpack.c.l.b16 %v353
      %v906 = vunpack.c.l.b16 %v354
      %v907 = vunpack.c.l.b16 %v355
      %v908 = vunpack.c.l.b16 %v356
      %v909 = vunpack.c.l.b16 %v357
      %v910 = vunpack.c.l.b16 %v358
      %v911 = vunpack.c.l.b16 %v359
      %v912 = vunpack.c.l.b16 %v360
      %v913 = vpack.c.b16 %v802, %v801
      %v914 = vpack.c.b16 %v804, %v803
      %v915 = vpack.c.b16 %v806, %v805
      %v916 = vpack.c.b16 %v808, %v807
      %v917 = vpack.c.b16 %v810, %v809
      %v918 = vpack.c.b16 %v812, %v811
      %v919 = vpack.c.b16 %v814, %v813
      %v920 = vpack.c.b16 %v816, %v815
      %v921 = vpack.c.b16 %v818, %v817
      %v922 = vpack.c.b16 %v820, %v819
      %v923 = vpack.c.b16 %v822, %v821
      %v924 = vpack.c.b16 %v824, %v823
      %v925 = vpack.c.b16 %v826, %v825
      %v926 = vpack.c.b16 %v828, %v827
      %v927 = vpack.c.b16 %v830, %v829
      %v928 = vpack.c.b16 %v832, %v831
      %v929 = vpack.c.b16 %v834, %v833
      %v930 = vpack.c.b16 %v836, %v835
      %v931 = vpack.c.b16 %v838, %v837
      %v932 = vpack.c.b16 %v840, %v839
      %v933 = vpack.c.b16 %v842, %v841
      %v934 = vpack.c.b16 %v844, %v843
      %v935 = vpack.c.b16 %v846, %v845
      %v936 = vpack.c.b16 %v848, %v847
      %v937 = vpack.c.b16 %v850, %v849
      %v938 = vpack.c.b16 %v852, %v851
      %v939 = vpack.c.b16 %v854, %v853
      %v940 = vpack.c.b16 %v856, %v855
      %v941 = vpack.c.b16 %v858, %v857
      %v942 = vpack.c.b16 %v860, %v859
      %v943 = vpack.c.b16 %v862, %v861
      %v944 = vpack.c.b16 %v864, %v863
      %v945 = vpack.c.b16 %v866, %v865
      %v946 = vpack.c.b16 %v868, %v867
      %v947 = vpack.c.b16 %v870, %v869
      %v948 = vpack.c.b16 %v872, %v871
      %v949 = vpack.c.b16 %v874, %v873
      %v950 = vpack.c.b16 %v876, %v875
      %v951 = vpack.c.b16 %v878, %v877
      %v952 = vpack.c.b16 %v880, %v879
      %v953 = vpack.c.b16 %v882, %v881
      %v954 = vpack.c.b16 %v884, %v883
      %v955 = vpack.c.b16 %v886, %v885
      %v956 = vpack.c.b16 %v888, %v887
      %v957 = vpack.c.b16 %v890, %v889
      %v958 = vpack.c.b16 %v892, %v891
      %v959 = vpack.c.b16 %v894, %v893
      %v960 = vpack.c.b16 %v896, %v895
      %v961 = vpack.c.b16 %v898, %v897
      %v962 = vpack.c.b16 %v900, %v899
      %v963 = vpack.c.b16 %v902, %v901
      %v964 = vpack.c.b16 %v904, %v903
      %v965 = vpack.c.b16 %v906, %v905
      %v966 = vpack.c.b16 %v908, %v907
      %v967 = vpack.c.b16 %v910, %v909
      %v968 = vpack.c.b16 %v912, %v911
      %1025 = vmatpush.bf16.msra.mxu0 %v920
      %1026 = vmatpush.bf16.msra.mxu0 %v919
      %1027 = vmatpush.bf16.msra.mxu0 %v918
      %1028 = vmatpush.bf16.msra.mxu0 %v917
      %1029 = vmatpush.bf16.msra.mxu0 %v916
      %1030 = vmatpush.bf16.msra.mxu0 %v915
      %1031 = vmatpush.bf16.msra.mxu0 %v914
      %1032 = vmatpush.bf16.msra.mxu0 %v913
      %1033 = vmatmul.bf16.gmra.mxu0 %v563
      %v1034 = vpop.f32.mrf.mxu0
      %v1035 = vadd.f32 %v363, %v1034
      %v1036 = vpop.f32.mrf.mxu0
      %v1037 = vadd.f32 %v363, %v1036
      %1038 = vmatmul.bf16.gmra.mxu0 %v570
      %v1039 = vpop.f32.mrf.mxu0
      %v1040 = vadd.f32 %v363, %v1039
      %v1041 = vpop.f32.mrf.mxu0
      %v1042 = vadd.f32 %v363, %v1041
      %1043 = vmatmul.bf16.gmra.mxu0 %v577
      %v1044 = vpop.f32.mrf.mxu0
      %v1045 = vadd.f32 %v363, %v1044
      %v1046 = vpop.f32.mrf.mxu0
      %v1047 = vadd.f32 %v363, %v1046
      %1048 = vmatmul.bf16.gmra.mxu0 %v584
      %v1049 = vpop.f32.mrf.mxu0
      %v1050 = vadd.f32 %v363, %v1049
      %v1051 = vpop.f32.mrf.mxu0
      %v1052 = vadd.f32 %v363, %v1051
      %1053 = vmatmul.bf16.gmra.mxu0 %v591
      %v1054 = vpop.f32.mrf.mxu0
      %v1055 = vadd.f32 %v363, %v1054
      %v1056 = vpop.f32.mrf.mxu0
      %v1057 = vadd.f32 %v363, %v1056
      %1058 = vmatmul.bf16.gmra.mxu0 %v598
      %v1059 = vpop.f32.mrf.mxu0
      %v1060 = vadd.f32 %v363, %v1059
      %v1061 = vpop.f32.mrf.mxu0
      %v1062 = vadd.f32 %v363, %v1061
      %1063 = vmatmul.bf16.gmra.mxu0 %v605
      %v1064 = vpop.f32.mrf.mxu0
      %v1065 = vadd.f32 %v363, %v1064
      %v1066 = vpop.f32.mrf.mxu0
      %v1067 = vadd.f32 %v363, %v1066
      %1068 = vmatmul.bf16.gmra.mxu0 %v612
      %v1069 = vpop.f32.mrf.mxu0
      %v1070 = vadd.f32 %v363, %v1069
      %v1071 = vpop.f32.mrf.mxu0
      %v1072 = vadd.f32 %v363, %v1071
      %1073 = vmatmul.bf16.gmra.mxu0 %v619
      %v1074 = vpop.f32.mrf.mxu0
      %v1075 = vadd.f32 %v363, %v1074
      %v1076 = vpop.f32.mrf.mxu0
      %v1077 = vadd.f32 %v363, %v1076
      %1078 = vdwg.mxu0
      %1079 = vmatpush.bf16.msra.mxu0 %v928
      %1080 = vmatpush.bf16.msra.mxu0 %v927
      %1081 = vmatpush.bf16.msra.mxu0 %v926
      %1082 = vmatpush.bf16.msra.mxu0 %v925
      %1083 = vmatpush.bf16.msra.mxu0 %v924
      %1084 = vmatpush.bf16.msra.mxu0 %v923
      %1085 = vmatpush.bf16.msra.mxu0 %v922
      %1086 = vmatpush.bf16.msra.mxu0 %v921
      %1087 = vmatmul.bf16.gmra.mxu0 %v564
      %v1088 = vpop.f32.mrf.mxu0
      %v1089 = vadd.f32 %v1035, %v1088
      %v1090 = vpop.f32.mrf.mxu0
      %v1091 = vadd.f32 %v1037, %v1090
      %1092 = vmatmul.bf16.gmra.mxu0 %v571
      %v1093 = vpop.f32.mrf.mxu0
      %v1094 = vadd.f32 %v1040, %v1093
      %v1095 = vpop.f32.mrf.mxu0
      %v1096 = vadd.f32 %v1042, %v1095
      %1097 = vmatmul.bf16.gmra.mxu0 %v578
      %v1098 = vpop.f32.mrf.mxu0
      %v1099 = vadd.f32 %v1045, %v1098
      %v1100 = vpop.f32.mrf.mxu0
      %v1101 = vadd.f32 %v1047, %v1100
      %1102 = vmatmul.bf16.gmra.mxu0 %v585
      %v1103 = vpop.f32.mrf.mxu0
      %v1104 = vadd.f32 %v1050, %v1103
      %v1105 = vpop.f32.mrf.mxu0
      %v1106 = vadd.f32 %v1052, %v1105
      %1107 = vmatmul.bf16.gmra.mxu0 %v592
      %v1108 = vpop.f32.mrf.mxu0
      %v1109 = vadd.f32 %v1055, %v1108
      %v1110 = vpop.f32.mrf.mxu0
      %v1111 = vadd.f32 %v1057, %v1110
      %1112 = vmatmul.bf16.gmra.mxu0 %v599
      %v1113 = vpop.f32.mrf.mxu0
      %v1114 = vadd.f32 %v1060, %v1113
      %v1115 = vpop.f32.mrf.mxu0
      %v1116 = vadd.f32 %v1062, %v1115
      %1117 = vmatmul.bf16.gmra.mxu0 %v606
      %v1118 = vpop.f32.mrf.mxu0
      %v1119 = vadd.f32 %v1065, %v1118
      %v1120 = vpop.f32.mrf.mxu0
      %v1121 = vadd.f32 %v1067, %v1120
      %1122 = vmatmul.bf16.gmra.mxu0 %v613
      %v1123 = vpop.f32.mrf.mxu0
      %v1124 = vadd.f32 %v1070, %v1123
      %v1125 = vpop.f32.mrf.mxu0
      %v1126 = vadd.f32 %v1072, %v1125
      %1127 = vmatmul.bf16.gmra.mxu0 %v620
      %v1128 = vpop.f32.mrf.mxu0
      %v1129 = vadd.f32 %v1075, %v1128
      %v1130 = vpop.f32.mrf.mxu0
      %v1131 = vadd.f32 %v1077, %v1130
      %1132 = vdwg.mxu0
      %1133 = vmatpush.bf16.msra.mxu0 %v936
      %1134 = vmatpush.bf16.msra.mxu0 %v935
      %1135 = vmatpush.bf16.msra.mxu0 %v934
      %1136 = vmatpush.bf16.msra.mxu0 %v933
      %1137 = vmatpush.bf16.msra.mxu0 %v932
      %1138 = vmatpush.bf16.msra.mxu0 %v931
      %1139 = vmatpush.bf16.msra.mxu0 %v930
      %1140 = vmatpush.bf16.msra.mxu0 %v929
      %1141 = vmatmul.bf16.gmra.mxu0 %v565
      %v1142 = vpop.f32.mrf.mxu0
      %v1143 = vadd.f32 %v1089, %v1142
      %v1144 = vpop.f32.mrf.mxu0
      %v1145 = vadd.f32 %v1091, %v1144
      %1146 = vmatmul.bf16.gmra.mxu0 %v572
      %v1147 = vpop.f32.mrf.mxu0
      %v1148 = vadd.f32 %v1094, %v1147
      %v1149 = vpop.f32.mrf.mxu0
      %v1150 = vadd.f32 %v1096, %v1149
      %1151 = vmatmul.bf16.gmra.mxu0 %v579
      %v1152 = vpop.f32.mrf.mxu0
      %v1153 = vadd.f32 %v1099, %v1152
      %v1154 = vpop.f32.mrf.mxu0
      %v1155 = vadd.f32 %v1101, %v1154
      %1156 = vmatmul.bf16.gmra.mxu0 %v586
      %v1157 = vpop.f32.mrf.mxu0
      %v1158 = vadd.f32 %v1104, %v1157
      %v1159 = vpop.f32.mrf.mxu0
      %v1160 = vadd.f32 %v1106, %v1159
      %1161 = vmatmul.bf16.gmra.mxu0 %v593
      %v1162 = vpop.f32.mrf.mxu0
      %v1163 = vadd.f32 %v1109, %v1162
      %v1164 = vpop.f32.mrf.mxu0
      %v1165 = vadd.f32 %v1111, %v1164
      %1166 = vmatmul.bf16.gmra.mxu0 %v600
      %v1167 = vpop.f32.mrf.mxu0
      %v1168 = vadd.f32 %v1114, %v1167
      %v1169 = vpop.f32.mrf.mxu0
      %v1170 = vadd.f32 %v1116, %v1169
      %1171 = vmatmul.bf16.gmra.mxu0 %v607
      %v1172 = vpop.f32.mrf.mxu0
      %v1173 = vadd.f32 %v1119, %v1172
      %v1174 = vpop.f32.mrf.mxu0
      %v1175 = vadd.f32 %v1121, %v1174
      %1176 = vmatmul.bf16.gmra.mxu0 %v614
      %v1177 = vpop.f32.mrf.mxu0
      %v1178 = vadd.f32 %v1124, %v1177
      %v1179 = vpop.f32.mrf.mxu0
      %v1180 = vadd.f32 %v1126, %v1179
      %1181 = vmatmul.bf16.gmra.mxu0 %v621
      %v1182 = vpop.f32.mrf.mxu0
      %v1183 = vadd.f32 %v1129, %v1182
      %v1184 = vpop.f32.mrf.mxu0
      %v1185 = vadd.f32 %v1131, %v1184
      %1186 = vdwg.mxu0
      %1187 = vmatpush.bf16.msra.mxu0 %v944
      %1188 = vmatpush.bf16.msra.mxu0 %v943
      %1189 = vmatpush.bf16.msra.mxu0 %v942
      %1190 = vmatpush.bf16.msra.mxu0 %v941
      %1191 = vmatpush.bf16.msra.mxu0 %v940
      %1192 = vmatpush.bf16.msra.mxu0 %v939
      %1193 = vmatpush.bf16.msra.mxu0 %v938
      %1194 = vmatpush.bf16.msra.mxu0 %v937
      %1195 = vmatmul.bf16.gmra.mxu0 %v566
      %v1196 = vpop.f32.mrf.mxu0
      %v1197 = vadd.f32 %v1143, %v1196
      %v1198 = vpop.f32.mrf.mxu0
      %v1199 = vadd.f32 %v1145, %v1198
      %1200 = vmatmul.bf16.gmra.mxu0 %v573
      %v1201 = vpop.f32.mrf.mxu0
      %v1202 = vadd.f32 %v1148, %v1201
      %v1203 = vpop.f32.mrf.mxu0
      %v1204 = vadd.f32 %v1150, %v1203
      %1205 = vmatmul.bf16.gmra.mxu0 %v580
      %v1206 = vpop.f32.mrf.mxu0
      %v1207 = vadd.f32 %v1153, %v1206
      %v1208 = vpop.f32.mrf.mxu0
      %v1209 = vadd.f32 %v1155, %v1208
      %1210 = vmatmul.bf16.gmra.mxu0 %v587
      %v1211 = vpop.f32.mrf.mxu0
      %v1212 = vadd.f32 %v1158, %v1211
      %v1213 = vpop.f32.mrf.mxu0
      %v1214 = vadd.f32 %v1160, %v1213
      %1215 = vmatmul.bf16.gmra.mxu0 %v594
      %v1216 = vpop.f32.mrf.mxu0
      %v1217 = vadd.f32 %v1163, %v1216
      %v1218 = vpop.f32.mrf.mxu0
      %v1219 = vadd.f32 %v1165, %v1218
      %1220 = vmatmul.bf16.gmra.mxu0 %v601
      %v1221 = vpop.f32.mrf.mxu0
      %v1222 = vadd.f32 %v1168, %v1221
      %v1223 = vpop.f32.mrf.mxu0
      %v1224 = vadd.f32 %v1170, %v1223
      %1225 = vmatmul.bf16.gmra.mxu0 %v608
      %v1226 = vpop.f32.mrf.mxu0
      %v1227 = vadd.f32 %v1173, %v1226
      %v1228 = vpop.f32.mrf.mxu0
      %v1229 = vadd.f32 %v1175, %v1228
      %1230 = vmatmul.bf16.gmra.mxu0 %v615
      %v1231 = vpop.f32.mrf.mxu0
      %v1232 = vadd.f32 %v1178, %v1231
      %v1233 = vpop.f32.mrf.mxu0
      %v1234 = vadd.f32 %v1180, %v1233
      %1235 = vmatmul.bf16.gmra.mxu0 %v622
      %v1236 = vpop.f32.mrf.mxu0
      %v1237 = vadd.f32 %v1183, %v1236
      %v1238 = vpop.f32.mrf.mxu0
      %v1239 = vadd.f32 %v1185, %v1238
      %1240 = vdwg.mxu0
      %1241 = vmatpush.bf16.msra.mxu0 %v952
      %1242 = vmatpush.bf16.msra.mxu0 %v951
      %1243 = vmatpush.bf16.msra.mxu0 %v950
      %1244 = vmatpush.bf16.msra.mxu0 %v949
      %1245 = vmatpush.bf16.msra.mxu0 %v948
      %1246 = vmatpush.bf16.msra.mxu0 %v947
      %1247 = vmatpush.bf16.msra.mxu0 %v946
      %1248 = vmatpush.bf16.msra.mxu0 %v945
      %1249 = vmatmul.bf16.gmra.mxu0 %v567
      %v1250 = vpop.f32.mrf.mxu0
      %v1251 = vadd.f32 %v1197, %v1250
      %v1252 = vpop.f32.mrf.mxu0
      %v1253 = vadd.f32 %v1199, %v1252
      %1254 = vmatmul.bf16.gmra.mxu0 %v574
      %v1255 = vpop.f32.mrf.mxu0
      %v1256 = vadd.f32 %v1202, %v1255
      %v1257 = vpop.f32.mrf.mxu0
      %v1258 = vadd.f32 %v1204, %v1257
      %1259 = vmatmul.bf16.gmra.mxu0 %v581
      %v1260 = vpop.f32.mrf.mxu0
      %v1261 = vadd.f32 %v1207, %v1260
      %v1262 = vpop.f32.mrf.mxu0
      %v1263 = vadd.f32 %v1209, %v1262
      %1264 = vmatmul.bf16.gmra.mxu0 %v588
      %v1265 = vpop.f32.mrf.mxu0
      %v1266 = vadd.f32 %v1212, %v1265
      %v1267 = vpop.f32.mrf.mxu0
      %v1268 = vadd.f32 %v1214, %v1267
      %1269 = vmatmul.bf16.gmra.mxu0 %v595
      %v1270 = vpop.f32.mrf.mxu0
      %v1271 = vadd.f32 %v1217, %v1270
      %v1272 = vpop.f32.mrf.mxu0
      %v1273 = vadd.f32 %v1219, %v1272
      %1274 = vmatmul.bf16.gmra.mxu0 %v602
      %v1275 = vpop.f32.mrf.mxu0
      %v1276 = vadd.f32 %v1222, %v1275
      %v1277 = vpop.f32.mrf.mxu0
      %v1278 = vadd.f32 %v1224, %v1277
      %1279 = vmatmul.bf16.gmra.mxu0 %v609
      %v1280 = vpop.f32.mrf.mxu0
      %v1281 = vadd.f32 %v1227, %v1280
      %v1282 = vpop.f32.mrf.mxu0
      %v1283 = vadd.f32 %v1229, %v1282
      %1284 = vmatmul.bf16.gmra.mxu0 %v616
      %v1285 = vpop.f32.mrf.mxu0
      %v1286 = vadd.f32 %v1232, %v1285
      %v1287 = vpop.f32.mrf.mxu0
      %v1288 = vadd.f32 %v1234, %v1287
      %1289 = vmatmul.bf16.gmra.mxu0 %v623
      %v1290 = vpop.f32.mrf.mxu0
      %v1291 = vadd.f32 %v1237, %v1290
      %v1292 = vpop.f32.mrf.mxu0
      %v1293 = vadd.f32 %v1239, %v1292
      %1294 = vdwg.mxu0
      %1295 = vmatpush.bf16.msra.mxu0 %v960
      %1296 = vmatpush.bf16.msra.mxu0 %v959
      %1297 = vmatpush.bf16.msra.mxu0 %v958
      %1298 = vmatpush.bf16.msra.mxu0 %v957
      %1299 = vmatpush.bf16.msra.mxu0 %v956
      %1300 = vmatpush.bf16.msra.mxu0 %v955
      %1301 = vmatpush.bf16.msra.mxu0 %v954
      %1302 = vmatpush.bf16.msra.mxu0 %v953
      %1303 = vmatmul.bf16.gmra.mxu0 %v568
      %v1304 = vpop.f32.mrf.mxu0
      %v1305 = vadd.f32 %v1251, %v1304
      %v1306 = vpop.f32.mrf.mxu0
      %v1307 = vadd.f32 %v1253, %v1306
      %1308 = vmatmul.bf16.gmra.mxu0 %v575
      %v1309 = vpop.f32.mrf.mxu0
      %v1310 = vadd.f32 %v1256, %v1309
      %v1311 = vpop.f32.mrf.mxu0
      %v1312 = vadd.f32 %v1258, %v1311
      %1313 = vmatmul.bf16.gmra.mxu0 %v582
      %v1314 = vpop.f32.mrf.mxu0
      %v1315 = vadd.f32 %v1261, %v1314
      %v1316 = vpop.f32.mrf.mxu0
      %v1317 = vadd.f32 %v1263, %v1316
      %1318 = vmatmul.bf16.gmra.mxu0 %v589
      %v1319 = vpop.f32.mrf.mxu0
      %v1320 = vadd.f32 %v1266, %v1319
      %v1321 = vpop.f32.mrf.mxu0
      %v1322 = vadd.f32 %v1268, %v1321
      %1323 = vmatmul.bf16.gmra.mxu0 %v596
      %v1324 = vpop.f32.mrf.mxu0
      %v1325 = vadd.f32 %v1271, %v1324
      %v1326 = vpop.f32.mrf.mxu0
      %v1327 = vadd.f32 %v1273, %v1326
      %1328 = vmatmul.bf16.gmra.mxu0 %v603
      %v1329 = vpop.f32.mrf.mxu0
      %v1330 = vadd.f32 %v1276, %v1329
      %v1331 = vpop.f32.mrf.mxu0
      %v1332 = vadd.f32 %v1278, %v1331
      %1333 = vmatmul.bf16.gmra.mxu0 %v610
      %v1334 = vpop.f32.mrf.mxu0
      %v1335 = vadd.f32 %v1281, %v1334
      %v1336 = vpop.f32.mrf.mxu0
      %v1337 = vadd.f32 %v1283, %v1336
      %1338 = vmatmul.bf16.gmra.mxu0 %v617
      %v1339 = vpop.f32.mrf.mxu0
      %v1340 = vadd.f32 %v1286, %v1339
      %v1341 = vpop.f32.mrf.mxu0
      %v1342 = vadd.f32 %v1288, %v1341
      %1343 = vmatmul.bf16.gmra.mxu0 %v624
      %v1344 = vpop.f32.mrf.mxu0
      %v1345 = vadd.f32 %v1291, %v1344
      %v1346 = vpop.f32.mrf.mxu0
      %v1347 = vadd.f32 %v1293, %v1346
      %1348 = vdwg.mxu0
      %1349 = vmatpush.bf16.msra.mxu0 %v968
      %1350 = vmatpush.bf16.msra.mxu0 %v967
      %1351 = vmatpush.bf16.msra.mxu0 %v966
      %1352 = vmatpush.bf16.msra.mxu0 %v965
      %1353 = vmatpush.bf16.msra.mxu0 %v964
      %1354 = vmatpush.bf16.msra.mxu0 %v963
      %1355 = vmatpush.bf16.msra.mxu0 %v962
      %1356 = vmatpush.bf16.msra.mxu0 %v961
      %1357 = vmatmul.bf16.gmra.mxu0 %v569
      %v1358 = vpop.f32.mrf.mxu0
      %v1359 = vadd.f32 %v1305, %v1358
      %v1360 = vpop.f32.mrf.mxu0
      %v1361 = vadd.f32 %v1307, %v1360
      %1362 = vmatmul.bf16.gmra.mxu0 %v576
      %v1363 = vpop.f32.mrf.mxu0
      %v1364 = vadd.f32 %v1310, %v1363
      %v1365 = vpop.f32.mrf.mxu0
      %v1366 = vadd.f32 %v1312, %v1365
      %1367 = vmatmul.bf16.gmra.mxu0 %v583
      %v1368 = vpop.f32.mrf.mxu0
      %v1369 = vadd.f32 %v1315, %v1368
      %v1370 = vpop.f32.mrf.mxu0
      %v1371 = vadd.f32 %v1317, %v1370
      %1372 = vmatmul.bf16.gmra.mxu0 %v590
      %v1373 = vpop.f32.mrf.mxu0
      %v1374 = vadd.f32 %v1320, %v1373
      %v1375 = vpop.f32.mrf.mxu0
      %v1376 = vadd.f32 %v1322, %v1375
      %1377 = vmatmul.bf16.gmra.mxu0 %v597
      %v1378 = vpop.f32.mrf.mxu0
      %v1379 = vadd.f32 %v1325, %v1378
      %v1380 = vpop.f32.mrf.mxu0
      %v1381 = vadd.f32 %v1327, %v1380
      %1382 = vmatmul.bf16.gmra.mxu0 %v604
      %v1383 = vpop.f32.mrf.mxu0
      %v1384 = vadd.f32 %v1330, %v1383
      %v1385 = vpop.f32.mrf.mxu0
      %v1386 = vadd.f32 %v1332, %v1385
      %1387 = vmatmul.bf16.gmra.mxu0 %v611
      %v1388 = vpop.f32.mrf.mxu0
      %v1389 = vadd.f32 %v1335, %v1388
      %v1390 = vpop.f32.mrf.mxu0
      %v1391 = vadd.f32 %v1337, %v1390
      %1392 = vmatmul.bf16.gmra.mxu0 %v618
      %v1393 = vpop.f32.mrf.mxu0
      %v1394 = vadd.f32 %v1340, %v1393
      %v1395 = vpop.f32.mrf.mxu0
      %v1396 = vadd.f32 %v1342, %v1395
      %1397 = vmatmul.bf16.gmra.mxu0 %v625
      %v1398 = vpop.f32.mrf.mxu0
      %v1399 = vadd.f32 %v1345, %v1398
      %v1400 = vpop.f32.mrf.mxu0
      %v1401 = vadd.f32 %v1347, %v1400
      %1402 = vdwg.mxu0
      %v1403 = vmax.f32 %v1359, 0.0
      %v1404 = vmax.f32 %v1361, 0.0
      %v1405 = vmax.f32 %v1364, 0.0
      %v1406 = vmax.f32 %v1366, 0.0
      %v1407 = vmax.f32 %v1369, 0.0
      %v1408 = vmax.f32 %v1371, 0.0
      %v1409 = vmax.f32 %v1374, 0.0
      %v1410 = vmax.f32 %v1376, 0.0
      %v1411 = vmax.f32 %v1379, 0.0
      %v1412 = vmax.f32 %v1381, 0.0
      %v1413 = vmax.f32 %v1384, 0.0
      %v1414 = vmax.f32 %v1386, 0.0
      %v1415 = vmax.f32 %v1389, 0.0
      %v1416 = vmax.f32 %v1391, 0.0
      %v1417 = vmax.f32 %v1394, 0.0
      %v1418 = vmax.f32 %v1396, 0.0
      %v1419 = vmax.f32 %v1399, 0.0
      %v1420 = vmax.f32 %v1401, 0.0
      %v1421 = vpack.c.bf16 %v1403, %v1403
      %v1422 = vpack.c.bf16 %v1404, %v1404
      %v1423 = vpack.c.bf16 %v1405, %v1405
      %v1424 = vpack.c.bf16 %v1406, %v1406
      %v1425 = vpack.c.bf16 %v1407, %v1407
      %v1426 = vpack.c.bf16 %v1408, %v1408
      %v1427 = vpack.c.bf16 %v1409, %v1409
      %v1428 = vpack.c.bf16 %v1410, %v1410
      %v1429 = vpack.c.bf16 %v1411, %v1411
      %v1430 = vpack.c.bf16 %v1412, %v1412
      %v1431 = vpack.c.bf16 %v1413, %v1413
      %v1432 = vpack.c.bf16 %v1414, %v1414
      %v1433 = vpack.c.bf16 %v1415, %v1415
      %v1434 = vpack.c.bf16 %v1416, %v1416
      %v1435 = vpack.c.bf16 %v1417, %v1417
      %v1436 = vpack.c.bf16 %v1418, %v1418
      %v1437 = vpack.c.bf16 %v1419, %v1419
      %v1438 = vpack.c.bf16 %v1420, %v1420
      %1439 = vst [vmem:[%s175] sm:$0xf] %v1421
      %1440 = vst [vmem:[%s175 + $0x4] sm:$0xf] %v1422
      %1441 = vst [vmem:[%s175 + $0x8] sm:$0xf] %v1423
      %1442 = vst [vmem:[%s175 + $0xc] sm:$0xf] %v1424
      %1443 = vst [vmem:[%s175 + $0x10] sm:$0xf] %v1425
      %1444 = vst [vmem:[%s175 + $0x14] sm:$0xf] %v1426
      %1445 = vst [vmem:[%s175 + $0x18] sm:$0xf] %v1427
      %1446 = vst [vmem:[%s175 + $0x1c] sm:$0xf] %v1428
      %1447 = vst [vmem:[%s175 + $0x20] sm:$0xf] %v1429
      %1448 = vst [vmem:[%s175 + $0x24] sm:$0xf] %v1430
      %1449 = vst [vmem:[%s175 + $0x28] sm:$0xf] %v1431
      %1450 = vst [vmem:[%s175 + $0x2c] sm:$0xf] %v1432
      %1451 = vst [vmem:[%s175 + $0x30] sm:$0xf] %v1433
      %1452 = vst [vmem:[%s175 + $0x34] sm:$0xf] %v1434
      %1453 = vst [vmem:[%s175 + $0x38] sm:$0xf] %v1435
      %1454 = vst [vmem:[%s175 + $0x3c] sm:$0xf] %v1436
      %1455 = vst [vmem:[%s175 + $0x40] sm:$0xf] %v1437
      %1456 = vst [vmem:[%s175 + $0x44] sm:$0xf] %v1438
      %s1457 = smul.u32 18, %s14
      %p1458 = scmp.lt.s32.totalorder %s1457, 35
      %s1459 = scalar_select %p1458, %s1457, 35
      %s1460 = smul.addr %s1459, 4
      %s1461 = scalar_lea.vmem %s3, %s1460
      // Predicated region
      $region33: #{dqn_forward.4} parent=31 // pred_check
        %p1462 = pneg %p100
      $region34: #{dqn_forward.4} parent=31 // pred_check_branch
        %1464 = sbr.rel (%p1462) target = $region36
      $region35: #{dqn_forward.4} parent=31 // pred_region
        %s1465 = smul.u32 18, %s14
      $region36: #{dqn_forward.4} parent=31 // pred_fallthru
        _
    $region32: #{dqn_forward.4} parent=5 // pred_fallthru
      _
    %p1466 = scmp.le.s32.totalorder 2, %s9
    // Predicated region
    $region37: #{dqn_forward.4} parent=5 // pred_check
      %p1467 = pneg %p1466
    $region38: #{dqn_forward.4} parent=5 // pred_check_branch
      %1469 = sbr.rel (%p1467) target = $region40
    $region39: #{dqn_forward.4} parent=5 // pred_region
      %s1470 = ssub.s32 %s9, 2
      // Predicated region
      $region41: #{dqn_forward.4} parent=39 // pred_check
        %p1471 = pneg %p106
      $region42: #{dqn_forward.4} parent=39 // pred_check_branch
        %1473 = sbr.rel (%p1471) target = $region44
      $region43: #{dqn_forward.4} parent=39 // pred_region
        %s1474 = smul.u32 18, %s15
        %p1475 = scmp.lt.s32.totalorder %s1474, 35
        %s1476 = scalar_select %p1475, %s1474, 35
        %s1477 = smul.addr %s1476, 4
        %s1478 = scalar_lea.vmem %s3, %s1477
      $region44: #{dqn_forward.4} parent=39 // pred_fallthru
        _
    $region40: #{dqn_forward.4} parent=5 // pred_fallthru
      _
  $region6: #{dqn_forward.4} parent=0 // loop_footer
    %s13 = sadd.s32 1, %s9
  $region7: #{dqn_forward.4} parent=0 // loop_footer_branch
    %8 = sbr.rel target = $region3
  $region8: #{dqn_forward.4} parent=0 // loop_exit
    _

// kernel: dqn_forward.5
$region0: #{dqn_forward.5}
  #allocation0 [shape = 'u32[]', space=smem, size = 0x4, offset = 0x4, fixed_abs, tag = 'smem constant byte address 0x4 - core index']
  #allocation1 [shape = 'u32[72,128]{1,0:T(1,128)}', space=vmem, size = 0x9000, scoped, tag = 'internal scratch']
  %s0 = inlined_call_operand.vmem [shape: bf16[72,1664], index: 0, kind: input, shape index: {}]
  %s1 = inlined_call_operand.vmem [shape: bf16[1664,128], index: 1, kind: input, shape index: {}]
  %s2 = inlined_call_operand.vmem [shape: f32[1,128], index: 2, kind: input, shape index: {}]
  %s3 = inlined_call_operand.vmem [shape: bf16[9,128,128], index: 3, kind: input, shape index: {}]
  %s4 = inlined_call_operand.vmem [shape: f32[1,128], index: 4, kind: input, shape index: {}]
  %s5 = inlined_call_operand.vmem [shape: f32[8,128], index: 5, kind: output, shape index: {}]
  %s6 = sld [smem:[#allocation0]]
  $region30: #{dqn_forward.5} parent=0
    _
  %s8 = ssub.s32 1, %s6
  %s9 = scalar_select 0, %s8, %s6
  // Predicated region
  $region2: #{dqn_forward.5} parent=0 // pred_check
    _
  $region3: #{dqn_forward.5} parent=0 // pred_check_branch
    %11 = sbr.rel (0) target = $region5
  $region4: #{dqn_forward.5} parent=0 // pred_region
    _
  $region5: #{dqn_forward.5} parent=0 // pred_fallthru
    _
  // Predicated region
  $region6: #{dqn_forward.5} parent=0 // pred_check
    _
  $region7: #{dqn_forward.5} parent=0 // pred_check_branch
    %13 = sbr.rel (0) target = $region9
  $region8: #{dqn_forward.5} parent=0 // pred_region
    _
  $region9: #{dqn_forward.5} parent=0 // pred_fallthru
    _
  // Predicated region
  $region10: #{dqn_forward.5} parent=0 // pred_check
    _
  $region11: #{dqn_forward.5} parent=0 // pred_check_branch
    %15 = sbr.rel (0) target = $region13
  $region12: #{dqn_forward.5} parent=0 // pred_region
    _
  $region13: #{dqn_forward.5} parent=0 // pred_fallthru
    _
  // Predicated region
  $region14: #{dqn_forward.5} parent=0 // pred_check
    _
  $region15: #{dqn_forward.5} parent=0 // pred_check_branch
    %17 = sbr.rel (0) target = $region17
  $region16: #{dqn_forward.5} parent=0 // pred_region
    _
  $region17: #{dqn_forward.5} parent=0 // pred_fallthru
    _
  // Predicated region
  $region18: #{dqn_forward.5} parent=0 // pred_check
    _
  $region19: #{dqn_forward.5} parent=0 // pred_check_branch
    %19 = sbr.rel (0) target = $region21
  $region20: #{dqn_forward.5} parent=0 // pred_region
    _
  $region21: #{dqn_forward.5} parent=0 // pred_fallthru
    _
  %v20 = vld [vmem:[%s0] sm:$0xff]
  %v21 = vld [vmem:[%s0 + $0x8] sm:$0xff]
  %v22 = vld [vmem:[%s0 + $0x10] sm:$0xff]
  %v23 = vld [vmem:[%s0 + $0x18] sm:$0xff]
  %v24 = vld [vmem:[%s0 + $0x20] sm:$0xff]
  %v25 = vld [vmem:[%s0 + $0x28] sm:$0xff]
  %v26 = vld [vmem:[%s0 + $0x30] sm:$0xf]
  %v27 = vld [vmem:[%s0 + $0x34] sm:$0xff]
  %v28 = vld [vmem:[%s0 + $0x3c] sm:$0xff]
  %v29 = vld [vmem:[%s0 + $0x44] sm:$0xff]
  %v30 = vld [vmem:[%s0 + $0x4c] sm:$0xff]
  %v31 = vld [vmem:[%s0 + $0x54] sm:$0xff]
  %v32 = vld [vmem:[%s0 + $0x5c] sm:$0xff]
  %v33 = vld [vmem:[%s0 + $0x64] sm:$0xf]
  %v34 = vld [vmem:[%s0 + $0x68] sm:$0xff]
  %v35 = vld [vmem:[%s0 + $0x70] sm:$0xff]
  %v36 = vld [vmem:[%s0 + $0x78] sm:$0xff]
  %v37 = vld [vmem:[%s0 + $0x80] sm:$0xff]
  %v38 = vld [vmem:[%s0 + $0x88] sm:$0xff]
  %v39 = vld [vmem:[%s0 + $0x90] sm:$0xff]
  %v40 = vld [vmem:[%s0 + $0x98] sm:$0xf]
  %v41 = vld [vmem:[%s0 + $0x9c] sm:$0xff]
  %v42 = vld [vmem:[%s0 + $0xa4] sm:$0xff]
  %v43 = vld [vmem:[%s0 + $0xac] sm:$0xff]
  %v44 = vld [vmem:[%s0 + $0xb4] sm:$0xff]
  %v45 = vld [vmem:[%s0 + $0xbc] sm:$0xff]
  %v46 = vld [vmem:[%s0 + $0xc4] sm:$0xff]
  %v47 = vld [vmem:[%s0 + $0xcc] sm:$0xf]
  %v48 = vld [vmem:[%s0 + $0xd0] sm:$0xff]
  %v49 = vld [vmem:[%s0 + $0xd8] sm:$0xff]
  %v50 = vld [vmem:[%s0 + $0xe0] sm:$0xff]
  %v51 = vld [vmem:[%s0 + $0xe8] sm:$0xff]
  %v52 = vld [vmem:[%s0 + $0xf0] sm:$0xff]
  %v53 = vld [vmem:[%s0 + $0xf8] sm:$0xff]
  %v54 = vld [vmem:[%s0 + $0x100] sm:$0xf]
  %v55 = vld [vmem:[%s0 + $0x104] sm:$0xff]
  %v56 = vld [vmem:[%s0 + $0x10c] sm:$0xff]
  %v57 = vld [vmem:[%s0 + $0x114] sm:$0xff]
  %v58 = vld [vmem:[%s0 + $0x11c] sm:$0xff]
  %v59 = vld [vmem:[%s0 + $0x124] sm:$0xff]
  %v60 = vld [vmem:[%s0 + $0x12c] sm:$0xff]
  %v61 = vld [vmem:[%s0 + $0x134] sm:$0xf]
  %v62 = vld [vmem:[%s0 + $0x138] sm:$0xff]
  %v63 = vld [vmem:[%s0 + $0x140] sm:$0xff]
  %v64 = vld [vmem:[%s0 + $0x148] sm:$0xff]
  %v65 = vld [vmem:[%s0 + $0x150] sm:$0xff]
  %v66 = vld [vmem:[%s0 + $0x158] sm:$0xff]
  %v67 = vld [vmem:[%s0 + $0x160] sm:$0xff]
  %v68 = vld [vmem:[%s0 + $0x168] sm:$0xf]
  %v69 = vld [vmem:[%s0 + $0x16c] sm:$0xff]
  %v70 = vld [vmem:[%s0 + $0x174] sm:$0xff]
  %v71 = vld [vmem:[%s0 + $0x17c] sm:$0xff]
  %v72 = vld [vmem:[%s0 + $0x184] sm:$0xff]
  %v73 = vld [vmem:[%s0 + $0x18c] sm:$0xff]
  %v74 = vld [vmem:[%s0 + $0x194] sm:$0xff]
  %v75 = vld [vmem:[%s0 + $0x19c] sm:$0xf]
  %v76 = vld [vmem:[%s0 + $0x1a0] sm:$0xff]
  %v77 = vld [vmem:[%s0 + $0x1a8] sm:$0xff]
  %v78 = vld [vmem:[%s0 + $0x1b0] sm:$0xff]
  %v79 = vld [vmem:[%s0 + $0x1b8] sm:$0xff]
  %v80 = vld [vmem:[%s0 + $0x1c0] sm:$0xff]
  %v81 = vld [vmem:[%s0 + $0x1c8] sm:$0xff]
  %v82 = vld [vmem:[%s0 + $0x1d0] sm:$0xf]
  %v83 = vld [vmem:[%s1] sm:$0xf]
  %v84 = vld [vmem:[%s1 + $0x4] sm:$0xf]
  %v85 = vld [vmem:[%s1 + $0x8] sm:$0xf]
  %v86 = vld [vmem:[%s1 + $0xc] sm:$0xf]
  %v87 = vld [vmem:[%s1 + $0x10] sm:$0xf]
  %v88 = vld [vmem:[%s1 + $0x14] sm:$0xf]
  %v89 = vld [vmem:[%s1 + $0x18] sm:$0xf]
  %v90 = vld [vmem:[%s1 + $0x1c] sm:$0xf]
  %v91 = vld [vmem:[%s1 + $0x20] sm:$0xf]
  %v92 = vld [vmem:[%s1 + $0x24] sm:$0xf]
  %v93 = vld [vmem:[%s1 + $0x28] sm:$0xf]
  %v94 = vld [vmem:[%s1 + $0x2c] sm:$0xf]
  %v95 = vld [vmem:[%s1 + $0x30] sm:$0xf]
  %v96 = vld [vmem:[%s1 + $0x34] sm:$0xf]
  %v97 = vld [vmem:[%s1 + $0x38] sm:$0xf]
  %v98 = vld [vmem:[%s1 + $0x3c] sm:$0xf]
  %v99 = vld [vmem:[%s1 + $0x40] sm:$0xf]
  %v100 = vld [vmem:[%s1 + $0x44] sm:$0xf]
  %v101 = vld [vmem:[%s1 + $0x48] sm:$0xf]
  %v102 = vld [vmem:[%s1 + $0x4c] sm:$0xf]
  %v103 = vld [vmem:[%s1 + $0x50] sm:$0xf]
  %v104 = vld [vmem:[%s1 + $0x54] sm:$0xf]
  %v105 = vld [vmem:[%s1 + $0x58] sm:$0xf]
  %v106 = vld [vmem:[%s1 + $0x5c] sm:$0xf]
  %v107 = vld [vmem:[%s1 + $0x60] sm:$0xf]
  %v108 = vld [vmem:[%s1 + $0x64] sm:$0xf]
  %v109 = vld [vmem:[%s1 + $0x68] sm:$0xf]
  %v110 = vld [vmem:[%s1 + $0x6c] sm:$0xf]
  %v111 = vld [vmem:[%s1 + $0x70] sm:$0xf]
  %v112 = vld [vmem:[%s1 + $0x74] sm:$0xf]
  %v113 = vld [vmem:[%s1 + $0x78] sm:$0xf]
  %v114 = vld [vmem:[%s1 + $0x7c] sm:$0xf]
  %v115 = vld [vmem:[%s1 + $0x80] sm:$0xf]
  %v116 = vld [vmem:[%s1 + $0x84] sm:$0xf]
  %v117 = vld [vmem:[%s1 + $0x88] sm:$0xf]
  %v118 = vld [vmem:[%s1 + $0x8c] sm:$0xf]
  %v119 = vld [vmem:[%s1 + $0x90] sm:$0xf]
  %v120 = vld [vmem:[%s1 + $0x94] sm:$0xf]
  %v121 = vld [vmem:[%s1 + $0x98] sm:$0xf]
  %v122 = vld [vmem:[%s1 + $0x9c] sm:$0xf]
  %v123 = vld [vmem:[%s1 + $0xa0] sm:$0xf]
  %v124 = vld [vmem:[%s1 + $0xa4] sm:$0xf]
  %v125 = vld [vmem:[%s1 + $0xa8] sm:$0xf]
  %v126 = vld [vmem:[%s1 + $0xac] sm:$0xf]
  %v127 = vld [vmem:[%s1 + $0xb0] sm:$0xf]
  %v128 = vld [vmem:[%s1 + $0xb4] sm:$0xf]
  %v129 = vld [vmem:[%s1 + $0xb8] sm:$0xf]
  %v130 = vld [vmem:[%s1 + $0xbc] sm:$0xf]
  %v131 = vld [vmem:[%s1 + $0xc0] sm:$0xf]
  %v132 = vld [vmem:[%s1 + $0xc4] sm:$0xf]
  %v133 = vld [vmem:[%s1 + $0xc8] sm:$0xf]
  %v134 = vld [vmem:[%s1 + $0xcc] sm:$0xf]
  %v135 = vld [vmem:[%s1 + $0xd0] sm:$0xf]
  %v136 = vld [vmem:[%s1 + $0xd4] sm:$0xf]
  %v137 = vld [vmem:[%s1 + $0xd8] sm:$0xf]
  %v138 = vld [vmem:[%s1 + $0xdc] sm:$0xf]
  %v139 = vld [vmem:[%s1 + $0xe0] sm:$0xf]
  %v140 = vld [vmem:[%s1 + $0xe4] sm:$0xf]
  %v141 = vld [vmem:[%s1 + $0xe8] sm:$0xf]
  %v142 = vld [vmem:[%s1 + $0xec] sm:$0xf]
  %v143 = vld [vmem:[%s1 + $0xf0] sm:$0xf]
  %v144 = vld [vmem:[%s1 + $0xf4] sm:$0xf]
  %v145 = vld [vmem:[%s1 + $0xf8] sm:$0xf]
  %v146 = vld [vmem:[%s1 + $0xfc] sm:$0xf]
  %v147 = vld [vmem:[%s1 + $0x100] sm:$0xf]
  %v148 = vld [vmem:[%s1 + $0x104] sm:$0xf]
  %v149 = vld [vmem:[%s1 + $0x108] sm:$0xf]
  %v150 = vld [vmem:[%s1 + $0x10c] sm:$0xf]
  %v151 = vld [vmem:[%s1 + $0x110] sm:$0xf]
  %v152 = vld [vmem:[%s1 + $0x114] sm:$0xf]
  %v153 = vld [vmem:[%s1 + $0x118] sm:$0xf]
  %v154 = vld [vmem:[%s1 + $0x11c] sm:$0xf]
  %v155 = vld [vmem:[%s1 + $0x120] sm:$0xf]
  %v156 = vld [vmem:[%s1 + $0x124] sm:$0xf]
  %v157 = vld [vmem:[%s1 + $0x128] sm:$0xf]
  %v158 = vld [vmem:[%s1 + $0x12c] sm:$0xf]
  %v159 = vld [vmem:[%s1 + $0x130] sm:$0xf]
  %v160 = vld [vmem:[%s1 + $0x134] sm:$0xf]
  %v161 = vld [vmem:[%s1 + $0x138] sm:$0xf]
  %v162 = vld [vmem:[%s1 + $0x13c] sm:$0xf]
  %v163 = vld [vmem:[%s1 + $0x140] sm:$0xf]
  %v164 = vld [vmem:[%s1 + $0x144] sm:$0xf]
  %v165 = vld [vmem:[%s1 + $0x148] sm:$0xf]
  %v166 = vld [vmem:[%s1 + $0x14c] sm:$0xf]
  %v167 = vld [vmem:[%s1 + $0x150] sm:$0xf]
  %v168 = vld [vmem:[%s1 + $0x154] sm:$0xf]
  %v169 = vld [vmem:[%s1 + $0x158] sm:$0xf]
  %v170 = vld [vmem:[%s1 + $0x15c] sm:$0xf]
  %v171 = vld [vmem:[%s1 + $0x160] sm:$0xf]
  %v172 = vld [vmem:[%s1 + $0x164] sm:$0xf]
  %v173 = vld [vmem:[%s1 + $0x168] sm:$0xf]
  %v174 = vld [vmem:[%s1 + $0x16c] sm:$0xf]
  %v175 = vld [vmem:[%s1 + $0x170] sm:$0xf]
  %v176 = vld [vmem:[%s1 + $0x174] sm:$0xf]
  %v177 = vld [vmem:[%s1 + $0x178] sm:$0xf]
  %v178 = vld [vmem:[%s1 + $0x17c] sm:$0xf]
  %v179 = vld [vmem:[%s1 + $0x180] sm:$0xf]
  %v180 = vld [vmem:[%s1 + $0x184] sm:$0xf]
  %v181 = vld [vmem:[%s1 + $0x188] sm:$0xf]
  %v182 = vld [vmem:[%s1 + $0x18c] sm:$0xf]
  %v183 = vld [vmem:[%s1 + $0x190] sm:$0xf]
  %v184 = vld [vmem:[%s1 + $0x194] sm:$0xf]
  %v185 = vld [vmem:[%s1 + $0x198] sm:$0xf]
  %v186 = vld [vmem:[%s1 + $0x19c] sm:$0xf]
  %v187 = vld [vmem:[%s1 + $0x1a0] sm:$0xf]
  %v188 = vld [vmem:[%s1 + $0x1a4] sm:$0xf]
  %v189 = vld [vmem:[%s1 + $0x1a8] sm:$0xf]
  %v190 = vld [vmem:[%s1 + $0x1ac] sm:$0xf]
  %v191 = vld [vmem:[%s1 + $0x1b0] sm:$0xf]
  %v192 = vld [vmem:[%s1 + $0x1b4] sm:$0xf]
  %v193 = vld [vmem:[%s1 + $0x1b8] sm:$0xf]
  %v194 = vld [vmem:[%s1 + $0x1bc] sm:$0xf]
  %v195 = vld [vmem:[%s1 + $0x1c0] sm:$0xf]
  %v196 = vld [vmem:[%s1 + $0x1c4] sm:$0xf]
  %v197 = vld [vmem:[%s1 + $0x1c8] sm:$0xf]
  %v198 = vld [vmem:[%s1 + $0x1cc] sm:$0xf]
  %v199 = vld [vmem:[%s1 + $0x1d0] sm:$0xf]
  %v200 = vld [vmem:[%s1 + $0x1d4] sm:$0xf]
  %v201 = vld [vmem:[%s1 + $0x1d8] sm:$0xf]
  %v202 = vld [vmem:[%s1 + $0x1dc] sm:$0xf]
  %v203 = vld [vmem:[%s1 + $0x1e0] sm:$0xf]
  %v204 = vld [vmem:[%s1 + $0x1e4] sm:$0xf]
  %v205 = vld [vmem:[%s1 + $0x1e8] sm:$0xf]
  %v206 = vld [vmem:[%s1 + $0x1ec] sm:$0xf]
  %v207 = vld [vmem:[%s1 + $0x1f0] sm:$0xf]
  %v208 = vld [vmem:[%s1 + $0x1f4] sm:$0xf]
  %v209 = vld [vmem:[%s1 + $0x1f8] sm:$0xf]
  %v210 = vld [vmem:[%s1 + $0x1fc] sm:$0xf]
  %v211 = vld [vmem:[%s1 + $0x200] sm:$0xf]
  %v212 = vld [vmem:[%s1 + $0x204] sm:$0xf]
  %v213 = vld [vmem:[%s1 + $0x208] sm:$0xf]
  %v214 = vld [vmem:[%s1 + $0x20c] sm:$0xf]
  %v215 = vld [vmem:[%s1 + $0x210] sm:$0xf]
  %v216 = vld [vmem:[%s1 + $0x214] sm:$0xf]
  %v217 = vld [vmem:[%s1 + $0x218] sm:$0xf]
  %v218 = vld [vmem:[%s1 + $0x21c] sm:$0xf]
  %v219 = vld [vmem:[%s1 + $0x220] sm:$0xf]
  %v220 = vld [vmem:[%s1 + $0x224] sm:$0xf]
  %v221 = vld [vmem:[%s1 + $0x228] sm:$0xf]
  %v222 = vld [vmem:[%s1 + $0x22c] sm:$0xf]
  %v223 = vld [vmem:[%s1 + $0x230] sm:$0xf]
  %v224 = vld [vmem:[%s1 + $0x234] sm:$0xf]
  %v225 = vld [vmem:[%s1 + $0x238] sm:$0xf]
  %v226 = vld [vmem:[%s1 + $0x23c] sm:$0xf]
  %v227 = vld [vmem:[%s1 + $0x240] sm:$0xf]
  %v228 = vld [vmem:[%s1 + $0x244] sm:$0xf]
  %v229 = vld [vmem:[%s1 + $0x248] sm:$0xf]
  %v230 = vld [vmem:[%s1 + $0x24c] sm:$0xf]
  %v231 = vld [vmem:[%s1 + $0x250] sm:$0xf]
  %v232 = vld [vmem:[%s1 + $0x254] sm:$0xf]
  %v233 = vld [vmem:[%s1 + $0x258] sm:$0xf]
  %v234 = vld [vmem:[%s1 + $0x25c] sm:$0xf]
  %v235 = vld [vmem:[%s1 + $0x260] sm:$0xf]
  %v236 = vld [vmem:[%s1 + $0x264] sm:$0xf]
  %v237 = vld [vmem:[%s1 + $0x268] sm:$0xf]
  %v238 = vld [vmem:[%s1 + $0x26c] sm:$0xf]
  %v239 = vld [vmem:[%s1 + $0x270] sm:$0xf]
  %v240 = vld [vmem:[%s1 + $0x274] sm:$0xf]
  %v241 = vld [vmem:[%s1 + $0x278] sm:$0xf]
  %v242 = vld [vmem:[%s1 + $0x27c] sm:$0xf]
  %v243 = vld [vmem:[%s1 + $0x280] sm:$0xf]
  %v244 = vld [vmem:[%s1 + $0x284] sm:$0xf]
  %v245 = vld [vmem:[%s1 + $0x288] sm:$0xf]
  %v246 = vld [vmem:[%s1 + $0x28c] sm:$0xf]
  %v247 = vld [vmem:[%s1 + $0x290] sm:$0xf]
  %v248 = vld [vmem:[%s1 + $0x294] sm:$0xf]
  %v249 = vld [vmem:[%s1 + $0x298] sm:$0xf]
  %v250 = vld [vmem:[%s1 + $0x29c] sm:$0xf]
  %v251 = vld [vmem:[%s1 + $0x2a0] sm:$0xf]
  %v252 = vld [vmem:[%s1 + $0x2a4] sm:$0xf]
  %v253 = vld [vmem:[%s1 + $0x2a8] sm:$0xf]
  %v254 = vld [vmem:[%s1 + $0x2ac] sm:$0xf]
  %v255 = vld [vmem:[%s1 + $0x2b0] sm:$0xf]
  %v256 = vld [vmem:[%s1 + $0x2b4] sm:$0xf]
  %v257 = vld [vmem:[%s1 + $0x2b8] sm:$0xf]
  %v258 = vld [vmem:[%s1 + $0x2bc] sm:$0xf]
  %v259 = vld [vmem:[%s1 + $0x2c0] sm:$0xf]
  %v260 = vld [vmem:[%s1 + $0x2c4] sm:$0xf]
  %v261 = vld [vmem:[%s1 + $0x2c8] sm:$0xf]
  %v262 = vld [vmem:[%s1 + $0x2cc] sm:$0xf]
  %v263 = vld [vmem:[%s1 + $0x2d0] sm:$0xf]
  %v264 = vld [vmem:[%s1 + $0x2d4] sm:$0xf]
  %v265 = vld [vmem:[%s1 + $0x2d8] sm:$0xf]
  %v266 = vld [vmem:[%s1 + $0x2dc] sm:$0xf]
  %v267 = vld [vmem:[%s1 + $0x2e0] sm:$0xf]
  %v268 = vld [vmem:[%s1 + $0x2e4] sm:$0xf]
  %v269 = vld [vmem:[%s1 + $0x2e8] sm:$0xf]
  %v270 = vld [vmem:[%s1 + $0x2ec] sm:$0xf]
  %v271 = vld [vmem:[%s1 + $0x2f0] sm:$0xf]
  %v272 = vld [vmem:[%s1 + $0x2f4] sm:$0xf]
  %v273 = vld [vmem:[%s1 + $0x2f8] sm:$0xf]
  %v274 = vld [vmem:[%s1 + $0x2fc] sm:$0xf]
  %v275 = vld [vmem:[%s1 + $0x300] sm:$0xf]
  %v276 = vld [vmem:[%s1 + $0x304] sm:$0xf]
  %v277 = vld [vmem:[%s1 + $0x308] sm:$0xf]
  %v278 = vld [vmem:[%s1 + $0x30c] sm:$0xf]
  %v279 = vld [vmem:[%s1 + $0x310] sm:$0xf]
  %v280 = vld [vmem:[%s1 + $0x314] sm:$0xf]
  %v281 = vld [vmem:[%s1 + $0x318] sm:$0xf]
  %v282 = vld [vmem:[%s1 + $0x31c] sm:$0xf]
  %v283 = vld [vmem:[%s1 + $0x320] sm:$0xf]
  %v284 = vld [vmem:[%s1 + $0x324] sm:$0xf]
  %v285 = vld [vmem:[%s1 + $0x328] sm:$0xf]
  %v286 = vld [vmem:[%s1 + $0x32c] sm:$0xf]
  %v287 = vld [vmem:[%s1 + $0x330] sm:$0xf]
  %v288 = vld [vmem:[%s1 + $0x334] sm:$0xf]
  %v289 = vld [vmem:[%s1 + $0x338] sm:$0xf]
  %v290 = vld [vmem:[%s1 + $0x33c] sm:$0xf]
  %v291 = vld [vmem:[%s2] sm:$0x1]
  %v293 = vperm.slane %v291, 0
  %v358 = vunpack.c.l.b16 %v20
  %v359 = vunpack.c.h.b16 %v20
  %v360 = vunpack.c.l.b16 %v21
  %v361 = vunpack.c.h.b16 %v21
  %v362 = vunpack.c.l.b16 %v22
  %v363 = vunpack.c.h.b16 %v22
  %v364 = vunpack.c.l.b16 %v23
  %v365 = vunpack.c.h.b16 %v23
  %v366 = vunpack.c.l.b16 %v24
  %v367 = vunpack.c.h.b16 %v24
  %v368 = vunpack.c.l.b16 %v25
  %v369 = vunpack.c.h.b16 %v25
  %v370 = vunpack.c.l.b16 %v26
  %v371 = vunpack.c.l.b16 %v27
  %v372 = vunpack.c.h.b16 %v27
  %v373 = vunpack.c.l.b16 %v28
  %v374 = vunpack.c.h.b16 %v28
  %v375 = vunpack.c.l.b16 %v29
  %v376 = vunpack.c.h.b16 %v29
  %v377 = vunpack.c.l.b16 %v30
  %v378 = vunpack.c.h.b16 %v30
  %v379 = vunpack.c.l.b16 %v31
  %v380 = vunpack.c.h.b16 %v31
  %v381 = vunpack.c.l.b16 %v32
  %v382 = vunpack.c.h.b16 %v32
  %v383 = vunpack.c.l.b16 %v33
  %v384 = vunpack.c.l.b16 %v34
  %v385 = vunpack.c.h.b16 %v34
  %v386 = vunpack.c.l.b16 %v35
  %v387 = vunpack.c.h.b16 %v35
  %v388 = vunpack.c.l.b16 %v36
  %v389 = vunpack.c.h.b16 %v36
  %v390 = vunpack.c.l.b16 %v37
  %v391 = vunpack.c.h.b16 %v37
  %v392 = vunpack.c.l.b16 %v38
  %v393 = vunpack.c.h.b16 %v38
  %v394 = vunpack.c.l.b16 %v39
  %v395 = vunpack.c.h.b16 %v39
  %v396 = vunpack.c.l.b16 %v40
  %v397 = vunpack.c.l.b16 %v41
  %v398 = vunpack.c.h.b16 %v41
  %v399 = vunpack.c.l.b16 %v42
  %v400 = vunpack.c.h.b16 %v42
  %v401 = vunpack.c.l.b16 %v43
  %v402 = vunpack.c.h.b16 %v43
  %v403 = vunpack.c.l.b16 %v44
  %v404 = vunpack.c.h.b16 %v44
  %v405 = vunpack.c.l.b16 %v45
  %v406 = vunpack.c.h.b16 %v45
  %v407 = vunpack.c.l.b16 %v46
  %v408 = vunpack.c.h.b16 %v46
  %v409 = vunpack.c.l.b16 %v47
  %v410 = vunpack.c.l.b16 %v48
  %v411 = vunpack.c.h.b16 %v48
  %v412 = vunpack.c.l.b16 %v49
  %v413 = vunpack.c.h.b16 %v49
  %v414 = vunpack.c.l.b16 %v50
  %v415 = vunpack.c.h.b16 %v50
  %v416 = vunpack.c.l.b16 %v51
  %v417 = vunpack.c.h.b16 %v51
  %v418 = vunpack.c.l.b16 %v52
  %v419 = vunpack.c.h.b16 %v52
  %v420 = vunpack.c.l.b16 %v53
  %v421 = vunpack.c.h.b16 %v53
  %v422 = vunpack.c.l.b16 %v54
  %v423 = vunpack.c.l.b16 %v55
  %v424 = vunpack.c.h.b16 %v55
  %v425 = vunpack.c.l.b16 %v56
  %v426 = vunpack.c.h.b16 %v56
  %v427 = vunpack.c.l.b16 %v57
  %v428 = vunpack.c.h.b16 %v57
  %v429 = vunpack.c.l.b16 %v58
  %v430 = vunpack.c.h.b16 %v58
  %v431 = vunpack.c.l.b16 %v59
  %v432 = vunpack.c.h.b16 %v59
  %v433 = vunpack.c.l.b16 %v60
  %v434 = vunpack.c.h.b16 %v60
  %v435 = vunpack.c.l.b16 %v61
  %v436 = vunpack.c.l.b16 %v62
  %v437 = vunpack.c.h.b16 %v62
  %v438 = vunpack.c.l.b16 %v63
  %v439 = vunpack.c.h.b16 %v63
  %v440 = vunpack.c.l.b16 %v64
  %v441 = vunpack.c.h.b16 %v64
  %v442 = vunpack.c.l.b16 %v65
  %v443 = vunpack.c.h.b16 %v65
  %v444 = vunpack.c.l.b16 %v66
  %v445 = vunpack.c.h.b16 %v66
  %v446 = vunpack.c.l.b16 %v67
  %v447 = vunpack.c.h.b16 %v67
  %v448 = vunpack.c.l.b16 %v68
  %v449 = vunpack.c.l.b16 %v69
  %v450 = vunpack.c.h.b16 %v69
  %v451 = vunpack.c.l.b16 %v70
  %v452 = vunpack.c.h.b16 %v70
  %v453 = vunpack.c.l.b16 %v71
  %v454 = vunpack.c.h.b16 %v71
  %v455 = vunpack.c.l.b16 %v72
  %v456 = vunpack.c.h.b16 %v72
  %v457 = vunpack.c.l.b16 %v73
  %v458 = vunpack.c.h.b16 %v73
  %v459 = vunpack.c.l.b16 %v74
  %v460 = vunpack.c.h.b16 %v74
  %v461 = vunpack.c.l.b16 %v75
  %v462 = vunpack.c.l.b16 %v76
  %v463 = vunpack.c.h.b16 %v76
  %v464 = vunpack.c.l.b16 %v77
  %v465 = vunpack.c.h.b16 %v77
  %v466 = vunpack.c.l.b16 %v78
  %v467 = vunpack.c.h.b16 %v78
  %v468 = vunpack.c.l.b16 %v79
  %v469 = vunpack.c.h.b16 %v79
  %v470 = vunpack.c.l.b16 %v80
  %v471 = vunpack.c.h.b16 %v80
  %v472 = vunpack.c.l.b16 %v81
  %v473 = vunpack.c.h.b16 %v81
  %v474 = vunpack.c.l.b16 %v82
  %v475 = vpack.c.b16 %v371, %v358
  %v476 = vpack.c.b16 %v372, %v359
  %v477 = vpack.c.b16 %v373, %v360
  %v478 = vpack.c.b16 %v374, %v361
  %v479 = vpack.c.b16 %v375, %v362
  %v480 = vpack.c.b16 %v376, %v363
  %v481 = vpack.c.b16 %v377, %v364
  %v482 = vpack.c.b16 %v378, %v365
  %v483 = vpack.c.b16 %v379, %v366
  %v484 = vpack.c.b16 %v380, %v367
  %v485 = vpack.c.b16 %v381, %v368
  %v486 = vpack.c.b16 %v382, %v369
  %v487 = vpack.c.b16 %v383, %v370
  %v488 = vpack.c.b16 %v397, %v384
  %v489 = vpack.c.b16 %v398, %v385
  %v490 = vpack.c.b16 %v399, %v386
  %v491 = vpack.c.b16 %v400, %v387
  %v492 = vpack.c.b16 %v401, %v388
  %v493 = vpack.c.b16 %v402, %v389
  %v494 = vpack.c.b16 %v403, %v390
  %v495 = vpack.c.b16 %v404, %v391
  %v496 = vpack.c.b16 %v405, %v392
  %v497 = vpack.c.b16 %v406, %v393
  %v498 = vpack.c.b16 %v407, %v394
  %v499 = vpack.c.b16 %v408, %v395
  %v500 = vpack.c.b16 %v409, %v396
  %v501 = vpack.c.b16 %v423, %v410
  %v502 = vpack.c.b16 %v424, %v411
  %v503 = vpack.c.b16 %v425, %v412
  %v504 = vpack.c.b16 %v426, %v413
  %v505 = vpack.c.b16 %v427, %v414
  %v506 = vpack.c.b16 %v428, %v415
  %v507 = vpack.c.b16 %v429, %v416
  %v508 = vpack.c.b16 %v430, %v417
  %v509 = vpack.c.b16 %v431, %v418
  %v510 = vpack.c.b16 %v432, %v419
  %v511 = vpack.c.b16 %v433, %v420
  %v512 = vpack.c.b16 %v434, %v421
  %v513 = vpack.c.b16 %v435, %v422
  %v514 = vpack.c.b16 %v449, %v436
  %v515 = vpack.c.b16 %v450, %v437
  %v516 = vpack.c.b16 %v451, %v438
  %v517 = vpack.c.b16 %v452, %v439
  %v518 = vpack.c.b16 %v453, %v440
  %v519 = vpack.c.b16 %v454, %v441
  %v520 = vpack.c.b16 %v455, %v442
  %v521 = vpack.c.b16 %v456, %v443
  %v522 = vpack.c.b16 %v457, %v444
  %v523 = vpack.c.b16 %v458, %v445
  %v524 = vpack.c.b16 %v459, %v446
  %v525 = vpack.c.b16 %v460, %v447
  %v526 = vpack.c.b16 %v461, %v448
  %v527 = vpack.c.b16 %v462, %v462
  %v528 = vpack.c.b16 %v463, %v463
  %v529 = vpack.c.b16 %v464, %v464
  %v530 = vpack.c.b16 %v465, %v465
  %v531 = vpack.c.b16 %v466, %v466
  %v532 = vpack.c.b16 %v467, %v467
  %v533 = vpack.c.b16 %v468, %v468
  %v534 = vpack.c.b16 %v469, %v469
  %v535 = vpack.c.b16 %v470, %v470
  %v536 = vpack.c.b16 %v471, %v471
  %v537 = vpack.c.b16 %v472, %v472
  %v538 = vpack.c.b16 %v473, %v473
  %v539 = vpack.c.b16 %v474, %v474
  %v813 = vunpack.c.l.b16 %v83
  %v814 = vunpack.c.l.b16 %v84
  %v815 = vunpack.c.l.b16 %v85
  %v816 = vunpack.c.l.b16 %v86
  %v817 = vunpack.c.l.b16 %v87
  %v818 = vunpack.c.l.b16 %v88
  %v819 = vunpack.c.l.b16 %v89
  %v820 = vunpack.c.l.b16 %v90
  %v821 = vunpack.c.l.b16 %v91
  %v822 = vunpack.c.l.b16 %v92
  %v823 = vunpack.c.l.b16 %v93
  %v824 = vunpack.c.l.b16 %v94
  %v825 = vunpack.c.l.b16 %v95
  %v826 = vunpack.c.l.b16 %v96
  %v827 = vunpack.c.l.b16 %v97
  %v828 = vunpack.c.l.b16 %v98
  %v829 = vunpack.c.l.b16 %v99
  %v830 = vunpack.c.l.b16 %v100
  %v831 = vunpack.c.l.b16 %v101
  %v832 = vunpack.c.l.b16 %v102
  %v833 = vunpack.c.l.b16 %v103
  %v834 = vunpack.c.l.b16 %v104
  %v835 = vunpack.c.l.b16 %v105
  %v836 = vunpack.c.l.b16 %v106
  %v837 = vunpack.c.l.b16 %v107
  %v838 = vunpack.c.l.b16 %v108
  %v839 = vunpack.c.l.b16 %v109
  %v840 = vunpack.c.l.b16 %v110
  %v841 = vunpack.c.l.b16 %v111
  %v842 = vunpack.c.l.b16 %v112
  %v843 = vunpack.c.l.b16 %v113
  %v844 = vunpack.c.l.b16 %v114
  %v845 = vunpack.c.l.b16 %v115
  %v846 = vunpack.c.l.b16 %v116
  %v847 = vunpack.c.l.b16 %v117
  %v848 = vunpack.c.l.b16 %v118
  %v849 = vunpack.c.l.b16 %v119
  %v850 = vunpack.c.l.b16 %v120
  %v851 = vunpack.c.l.b16 %v121
  %v852 = vunpack.c.l.b16 %v122
  %v853 = vunpack.c.l.b16 %v123
  %v854 = vunpack.c.l.b16 %v124
  %v855 = vunpack.c.l.b16 %v125
  %v856 = vunpack.c.l.b16 %v126
  %v857 = vunpack.c.l.b16 %v127
  %v858 = vunpack.c.l.b16 %v128
  %v859 = vunpack.c.l.b16 %v129
  %v860 = vunpack.c.l.b16 %v130
  %v861 = vunpack.c.l.b16 %v131
  %v862 = vunpack.c.l.b16 %v132
  %v863 = vunpack.c.l.b16 %v133
  %v864 = vunpack.c.l.b16 %v134
  %v865 = vunpack.c.l.b16 %v135
  %v866 = vunpack.c.l.b16 %v136
  %v867 = vunpack.c.l.b16 %v137
  %v868 = vunpack.c.l.b16 %v138
  %v869 = vunpack.c.l.b16 %v139
  %v870 = vunpack.c.l.b16 %v140
  %v871 = vunpack.c.l.b16 %v141
  %v872 = vunpack.c.l.b16 %v142
  %v873 = vunpack.c.l.b16 %v143
  %v874 = vunpack.c.l.b16 %v144
  %v875 = vunpack.c.l.b16 %v145
  %v876 = vunpack.c.l.b16 %v146
  %v877 = vunpack.c.l.b16 %v147
  %v878 = vunpack.c.l.b16 %v148
  %v879 = vunpack.c.l.b16 %v149
  %v880 = vunpack.c.l.b16 %v150
  %v881 = vunpack.c.l.b16 %v151
  %v882 = vunpack.c.l.b16 %v152
  %v883 = vunpack.c.l.b16 %v153
  %v884 = vunpack.c.l.b16 %v154
  %v885 = vunpack.c.l.b16 %v155
  %v886 = vunpack.c.l.b16 %v156
  %v887 = vunpack.c.l.b16 %v157
  %v888 = vunpack.c.l.b16 %v158
  %v889 = vunpack.c.l.b16 %v159
  %v890 = vunpack.c.l.b16 %v160
  %v891 = vunpack.c.l.b16 %v161
  %v892 = vunpack.c.l.b16 %v162
  %v893 = vunpack.c.l.b16 %v163
  %v894 = vunpack.c.l.b16 %v164
  %v895 = vunpack.c.l.b16 %v165
  %v896 = vunpack.c.l.b16 %v166
  %v897 = vunpack.c.l.b16 %v167
  %v898 = vunpack.c.l.b16 %v168
  %v899 = vunpack.c.l.b16 %v169
  %v900 = vunpack.c.l.b16 %v170
  %v901 = vunpack.c.l.b16 %v171
  %v902 = vunpack.c.l.b16 %v172
  %v903 = vunpack.c.l.b16 %v173
  %v904 = vunpack.c.l.b16 %v174
  %v905 = vunpack.c.l.b16 %v175
  %v906 = vunpack.c.l.b16 %v176
  %v907 = vunpack.c.l.b16 %v177
  %v908 = vunpack.c.l.b16 %v178
  %v909 = vunpack.c.l.b16 %v179
  %v910 = vunpack.c.l.b16 %v180
  %v911 = vunpack.c.l.b16 %v181
  %v912 = vunpack.c.l.b16 %v182
  %v913 = vunpack.c.l.b16 %v183
  %v914 = vunpack.c.l.b16 %v184
  %v915 = vunpack.c.l.b16 %v185
  %v916 = vunpack.c.l.b16 %v186
  %v917 = vunpack.c.l.b16 %v187
  %v918 = vunpack.c.l.b16 %v188
  %v919 = vunpack.c.l.b16 %v189
  %v920 = vunpack.c.l.b16 %v190
  %v921 = vunpack.c.l.b16 %v191
  %v922 = vunpack.c.l.b16 %v192
  %v923 = vunpack.c.l.b16 %v193
  %v924 = vunpack.c.l.b16 %v194
  %v925 = vunpack.c.l.b16 %v195
  %v926 = vunpack.c.l.b16 %v196
  %v927 = vunpack.c.l.b16 %v197
  %v928 = vunpack.c.l.b16 %v198
  %v929 = vunpack.c.l.b16 %v199
  %v930 = vunpack.c.l.b16 %v200
  %v931 = vunpack.c.l.b16 %v201
  %v932 = vunpack.c.l.b16 %v202
  %v933 = vunpack.c.l.b16 %v203
  %v934 = vunpack.c.l.b16 %v204
  %v935 = vunpack.c.l.b16 %v205
  %v936 = vunpack.c.l.b16 %v206
  %v937 = vunpack.c.l.b16 %v207
  %v938 = vunpack.c.l.b16 %v208
  %v939 = vunpack.c.l.b16 %v209
  %v940 = vunpack.c.l.b16 %v210
  %v941 = vunpack.c.l.b16 %v211
  %v942 = vunpack.c.l.b16 %v212
  %v943 = vunpack.c.l.b16 %v213
  %v944 = vunpack.c.l.b16 %v214
  %v945 = vunpack.c.l.b16 %v215
  %v946 = vunpack.c.l.b16 %v216
  %v947 = vunpack.c.l.b16 %v217
  %v948 = vunpack.c.l.b16 %v218
  %v949 = vunpack.c.l.b16 %v219
  %v950 = vunpack.c.l.b16 %v220
  %v951 = vunpack.c.l.b16 %v221
  %v952 = vunpack.c.l.b16 %v222
  %v953 = vunpack.c.l.b16 %v223
  %v954 = vunpack.c.l.b16 %v224
  %v955 = vunpack.c.l.b16 %v225
  %v956 = vunpack.c.l.b16 %v226
  %v957 = vunpack.c.l.b16 %v227
  %v958 = vunpack.c.l.b16 %v228
  %v959 = vunpack.c.l.b16 %v229
  %v960 = vunpack.c.l.b16 %v230
  %v961 = vunpack.c.l.b16 %v231
  %v962 = vunpack.c.l.b16 %v232
  %v963 = vunpack.c.l.b16 %v233
  %v964 = vunpack.c.l.b16 %v234
  %v965 = vunpack.c.l.b16 %v235
  %v966 = vunpack.c.l.b16 %v236
  %v967 = vunpack.c.l.b16 %v237
  %v968 = vunpack.c.l.b16 %v238
  %v969 = vunpack.c.l.b16 %v239
  %v970 = vunpack.c.l.b16 %v240
  %v971 = vunpack.c.l.b16 %v241
  %v972 = vunpack.c.l.b16 %v242
  %v973 = vunpack.c.l.b16 %v243
  %v974 = vunpack.c.l.b16 %v244
  %v975 = vunpack.c.l.b16 %v245
  %v976 = vunpack.c.l.b16 %v246
  %v977 = vunpack.c.l.b16 %v247
  %v978 = vunpack.c.l.b16 %v248
  %v979 = vunpack.c.l.b16 %v249
  %v980 = vunpack.c.l.b16 %v250
  %v981 = vunpack.c.l.b16 %v251
  %v982 = vunpack.c.l.b16 %v252
  %v983 = vunpack.c.l.b16 %v253
  %v984 = vunpack.c.l.b16 %v254
  %v985 = vunpack.c.l.b16 %v255
  %v986 = vunpack.c.l.b16 %v256
  %v987 = vunpack.c.l.b16 %v257
  %v988 = vunpack.c.l.b16 %v258
  %v989 = vunpack.c.l.b16 %v259
  %v990 = vunpack.c.l.b16 %v260
  %v991 = vunpack.c.l.b16 %v261
  %v992 = vunpack.c.l.b16 %v262
  %v993 = vunpack.c.l.b16 %v263
  %v994 = vunpack.c.l.b16 %v264
  %v995 = vunpack.c.l.b16 %v265
  %v996 = vunpack.c.l.b16 %v266
  %v997 = vunpack.c.l.b16 %v267
  %v998 = vunpack.c.l.b16 %v268
  %v999 = vunpack.c.l.b16 %v269
  %v1000 = vunpack.c.l.b16 %v270
  %v1001 = vunpack.c.l.b16 %v271
  %v1002 = vunpack.c.l.b16 %v272
  %v1003 = vunpack.c.l.b16 %v273
  %v1004 = vunpack.c.l.b16 %v274
  %v1005 = vunpack.c.l.b16 %v275
  %v1006 = vunpack.c.l.b16 %v276
  %v1007 = vunpack.c.l.b16 %v277
  %v1008 = vunpack.c.l.b16 %v278
  %v1009 = vunpack.c.l.b16 %v279
  %v1010 = vunpack.c.l.b16 %v280
  %v1011 = vunpack.c.l.b16 %v281
  %v1012 = vunpack.c.l.b16 %v282
  %v1013 = vunpack.c.l.b16 %v283
  %v1014 = vunpack.c.l.b16 %v284
  %v1015 = vunpack.c.l.b16 %v285
  %v1016 = vunpack.c.l.b16 %v286
  %v1017 = vunpack.c.l.b16 %v287
  %v1018 = vunpack.c.l.b16 %v288
  %v1019 = vunpack.c.l.b16 %v289
  %v1020 = vunpack.c.l.b16 %v290
  %v1021 = vpack.c.b16 %v814, %v813
  %v1022 = vpack.c.b16 %v816, %v815
  %v1023 = vpack.c.b16 %v818, %v817
  %v1024 = vpack.c.b16 %v820, %v819
  %v1025 = vpack.c.b16 %v822, %v821
  %v1026 = vpack.c.b16 %v824, %v823
  %v1027 = vpack.c.b16 %v826, %v825
  %v1028 = vpack.c.b16 %v828, %v827
  %v1029 = vpack.c.b16 %v830, %v829
  %v1030 = vpack.c.b16 %v832, %v831
  %v1031 = vpack.c.b16 %v834, %v833
  %v1032 = vpack.c.b16 %v836, %v835
  %v1033 = vpack.c.b16 %v838, %v837
  %v1034 = vpack.c.b16 %v840, %v839
  %v1035 = vpack.c.b16 %v842, %v841
  %v1036 = vpack.c.b16 %v844, %v843
  %v1037 = vpack.c.b16 %v846, %v845
  %v1038 = vpack.c.b16 %v848, %v847
  %v1039 = vpack.c.b16 %v850, %v849
  %v1040 = vpack.c.b16 %v852, %v851
  %v1041 = vpack.c.b16 %v854, %v853
  %v1042 = vpack.c.b16 %v856, %v855
  %v1043 = vpack.c.b16 %v858, %v857
  %v1044 = vpack.c.b16 %v860, %v859
  %v1045 = vpack.c.b16 %v862, %v861
  %v1046 = vpack.c.b16 %v864, %v863
  %v1047 = vpack.c.b16 %v866, %v865
  %v1048 = vpack.c.b16 %v868, %v867
  %v1049 = vpack.c.b16 %v870, %v869
  %v1050 = vpack.c.b16 %v872, %v871
  %v1051 = vpack.c.b16 %v874, %v873
  %v1052 = vpack.c.b16 %v876, %v875
  %v1053 = vpack.c.b16 %v878, %v877
  %v1054 = vpack.c.b16 %v880, %v879
  %v1055 = vpack.c.b16 %v882, %v881
  %v1056 = vpack.c.b16 %v884, %v883
  %v1057 = vpack.c.b16 %v886, %v885
  %v1058 = vpack.c.b16 %v888, %v887
  %v1059 = vpack.c.b16 %v890, %v889
  %v1060 = vpack.c.b16 %v892, %v891
  %v1061 = vpack.c.b16 %v894, %v893
  %v1062 = vpack.c.b16 %v896, %v895
  %v1063 = vpack.c.b16 %v898, %v897
  %v1064 = vpack.c.b16 %v900, %v899
  %v1065 = vpack.c.b16 %v902, %v901
  %v1066 = vpack.c.b16 %v904, %v903
  %v1067 = vpack.c.b16 %v906, %v905
  %v1068 = vpack.c.b16 %v908, %v907
  %v1069 = vpack.c.b16 %v910, %v909
  %v1070 = vpack.c.b16 %v912, %v911
  %v1071 = vpack.c.b16 %v914, %v913
  %v1072 = vpack.c.b16 %v916, %v915
  %v1073 = vpack.c.b16 %v918, %v917
  %v1074 = vpack.c.b16 %v920, %v919
  %v1075 = vpack.c.b16 %v922, %v921
  %v1076 = vpack.c.b16 %v924, %v923
  %v1077 = vpack.c.b16 %v926, %v925
  %v1078 = vpack.c.b16 %v928, %v927
  %v1079 = vpack.c.b16 %v930, %v929
  %v1080 = vpack.c.b16 %v932, %v931
  %v1081 = vpack.c.b16 %v934, %v933
  %v1082 = vpack.c.b16 %v936, %v935
  %v1083 = vpack.c.b16 %v938, %v937
  %v1084 = vpack.c.b16 %v940, %v939
  %v1085 = vpack.c.b16 %v942, %v941
  %v1086 = vpack.c.b16 %v944, %v943
  %v1087 = vpack.c.b16 %v946, %v945
  %v1088 = vpack.c.b16 %v948, %v947
  %v1089 = vpack.c.b16 %v950, %v949
  %v1090 = vpack.c.b16 %v952, %v951
  %v1091 = vpack.c.b16 %v954, %v953
  %v1092 = vpack.c.b16 %v956, %v955
  %v1093 = vpack.c.b16 %v958, %v957
  %v1094 = vpack.c.b16 %v960, %v959
  %v1095 = vpack.c.b16 %v962, %v961
  %v1096 = vpack.c.b16 %v964, %v963
  %v1097 = vpack.c.b16 %v966, %v965
  %v1098 = vpack.c.b16 %v968, %v967
  %v1099 = vpack.c.b16 %v970, %v969
  %v1100 = vpack.c.b16 %v972, %v971
  %v1101 = vpack.c.b16 %v974, %v973
  %v1102 = vpack.c.b16 %v976, %v975
  %v1103 = vpack.c.b16 %v978, %v977
  %v1104 = vpack.c.b16 %v980, %v979
  %v1105 = vpack.c.b16 %v982, %v981
  %v1106 = vpack.c.b16 %v984, %v983
  %v1107 = vpack.c.b16 %v986, %v985
  %v1108 = vpack.c.b16 %v988, %v987
  %v1109 = vpack.c.b16 %v990, %v989
  %v1110 = vpack.c.b16 %v992, %v991
  %v1111 = vpack.c.b16 %v994, %v993
  %v1112 = vpack.c.b16 %v996, %v995
  %v1113 = vpack.c.b16 %v998, %v997
  %v1114 = vpack.c.b16 %v1000, %v999
  %v1115 = vpack.c.b16 %v1002, %v1001
  %v1116 = vpack.c.b16 %v1004, %v1003
  %v1117 = vpack.c.b16 %v1006, %v1005
  %v1118 = vpack.c.b16 %v1008, %v1007
  %v1119 = vpack.c.b16 %v1010, %v1009
  %v1120 = vpack.c.b16 %v1012, %v1011
  %v1121 = vpack.c.b16 %v1014, %v1013
  %v1122 = vpack.c.b16 %v1016, %v1015
  %v1123 = vpack.c.b16 %v1018, %v1017
  %v1124 = vpack.c.b16 %v1020, %v1019
  %1229 = vmatpush.bf16.msra.mxu0 %v1028
  %1230 = vmatpush.bf16.msra.mxu0 %v1027
  %1231 = vmatpush.bf16.msra.mxu0 %v1026
  %1232 = vmatpush.bf16.msra.mxu0 %v1025
  %1233 = vmatpush.bf16.msra.mxu0 %v1024
  %1234 = vmatpush.bf16.msra.mxu0 %v1023
  %1235 = vmatpush.bf16.msra.mxu0 %v1022
  %1236 = vmatpush.bf16.msra.mxu0 %v1021
  %1237 = vmatmul.bf16.gmra.mxu0 %v475
  %v1238 = vpop.f32.mrf.mxu0
  %v1239 = vadd.f32 %v293, %v1238
  %v1240 = vpop.f32.mrf.mxu0
  %v1241 = vadd.f32 %v293, %v1240
  %1242 = vmatmul.bf16.gmra.mxu0 %v488
  %v1243 = vpop.f32.mrf.mxu0
  %v1244 = vadd.f32 %v293, %v1243
  %v1245 = vpop.f32.mrf.mxu0
  %v1246 = vadd.f32 %v293, %v1245
  %1247 = vmatmul.bf16.gmra.mxu0 %v501
  %v1248 = vpop.f32.mrf.mxu0
  %v1249 = vadd.f32 %v293, %v1248
  %v1250 = vpop.f32.mrf.mxu0
  %v1251 = vadd.f32 %v293, %v1250
  %1252 = vmatmul.bf16.gmra.mxu0 %v514
  %v1253 = vpop.f32.mrf.mxu0
  %v1254 = vadd.f32 %v293, %v1253
  %v1255 = vpop.f32.mrf.mxu0
  %v1256 = vadd.f32 %v293, %v1255
  %1257 = vmatmul.bf16.gmra.mxu0 %v527
  %v1258 = vpop.f32.mrf.mxu0
  %v1259 = vadd.f32 %v293, %v1258
  %v1260 = vpop.f32.mrf.mxu0
  %1261 = vdwg.mxu0
  %1262 = vmatpush.bf16.msra.mxu0 %v1036
  %1263 = vmatpush.bf16.msra.mxu0 %v1035
  %1264 = vmatpush.bf16.msra.mxu0 %v1034
  %1265 = vmatpush.bf16.msra.mxu0 %v1033
  %1266 = vmatpush.bf16.msra.mxu0 %v1032
  %1267 = vmatpush.bf16.msra.mxu0 %v1031
  %1268 = vmatpush.bf16.msra.mxu0 %v1030
  %1269 = vmatpush.bf16.msra.mxu0 %v1029
  %1270 = vmatmul.bf16.gmra.mxu0 %v476
  %v1271 = vpop.f32.mrf.mxu0
  %v1272 = vadd.f32 %v1239, %v1271
  %v1273 = vpop.f32.mrf.mxu0
  %v1274 = vadd.f32 %v1241, %v1273
  %1275 = vmatmul.bf16.gmra.mxu0 %v489
  %v1276 = vpop.f32.mrf.mxu0
  %v1277 = vadd.f32 %v1244, %v1276
  %v1278 = vpop.f32.mrf.mxu0
  %v1279 = vadd.f32 %v1246, %v1278
  %1280 = vmatmul.bf16.gmra.mxu0 %v502
  %v1281 = vpop.f32.mrf.mxu0
  %v1282 = vadd.f32 %v1249, %v1281
  %v1283 = vpop.f32.mrf.mxu0
  %v1284 = vadd.f32 %v1251, %v1283
  %1285 = vmatmul.bf16.gmra.mxu0 %v515
  %v1286 = vpop.f32.mrf.mxu0
  %v1287 = vadd.f32 %v1254, %v1286
  %v1288 = vpop.f32.mrf.mxu0
  %v1289 = vadd.f32 %v1256, %v1288
  %1290 = vmatmul.bf16.gmra.mxu0 %v528
  %v1291 = vpop.f32.mrf.mxu0
  %v1292 = vadd.f32 %v1259, %v1291
  %v1293 = vpop.f32.mrf.mxu0
  %1294 = vdwg.mxu0
  %1295 = vmatpush.bf16.msra.mxu0 %v1044
  %1296 = vmatpush.bf16.msra.mxu0 %v1043
  %1297 = vmatpush.bf16.msra.mxu0 %v1042
  %1298 = vmatpush.bf16.msra.mxu0 %v1041
  %1299 = vmatpush.bf16.msra.mxu0 %v1040
  %1300 = vmatpush.bf16.msra.mxu0 %v1039
  %1301 = vmatpush.bf16.msra.mxu0 %v1038
  %1302 = vmatpush.bf16.msra.mxu0 %v1037
  %1303 = vmatmul.bf16.gmra.mxu0 %v477
  %v1304 = vpop.f32.mrf.mxu0
  %v1305 = vadd.f32 %v1272, %v1304
  %v1306 = vpop.f32.mrf.mxu0
  %v1307 = vadd.f32 %v1274, %v1306
  %1308 = vmatmul.bf16.gmra.mxu0 %v490
  %v1309 = vpop.f32.mrf.mxu0
  %v1310 = vadd.f32 %v1277, %v1309
  %v1311 = vpop.f32.mrf.mxu0
  %v1312 = vadd.f32 %v1279, %v1311
  %1313 = vmatmul.bf16.gmra.mxu0 %v503
  %v1314 = vpop.f32.mrf.mxu0
  %v1315 = vadd.f32 %v1282, %v1314
  %v1316 = vpop.f32.mrf.mxu0
  %v1317 = vadd.f32 %v1284, %v1316
  %1318 = vmatmul.bf16.gmra.mxu0 %v516
  %v1319 = vpop.f32.mrf.mxu0
  %v1320 = vadd.f32 %v1287, %v1319
  %v1321 = vpop.f32.mrf.mxu0
  %v1322 = vadd.f32 %v1289, %v1321
  %1323 = vmatmul.bf16.gmra.mxu0 %v529
  %v1324 = vpop.f32.mrf.mxu0
  %v1325 = vadd.f32 %v1292, %v1324
  %v1326 = vpop.f32.mrf.mxu0
  %1327 = vdwg.mxu0
  %1328 = vmatpush.bf16.msra.mxu0 %v1052
  %1329 = vmatpush.bf16.msra.mxu0 %v1051
  %1330 = vmatpush.bf16.msra.mxu0 %v1050
  %1331 = vmatpush.bf16.msra.mxu0 %v1049
  %1332 = vmatpush.bf16.msra.mxu0 %v1048
  %1333 = vmatpush.bf16.msra.mxu0 %v1047
  %1334 = vmatpush.bf16.msra.mxu0 %v1046
  %1335 = vmatpush.bf16.msra.mxu0 %v1045
  %1336 = vmatmul.bf16.gmra.mxu0 %v478
  %v1337 = vpop.f32.mrf.mxu0
  %v1338 = vadd.f32 %v1305, %v1337
  %v1339 = vpop.f32.mrf.mxu0
  %v1340 = vadd.f32 %v1307, %v1339
  %1341 = vmatmul.bf16.gmra.mxu0 %v491
  %v1342 = vpop.f32.mrf.mxu0
  %v1343 = vadd.f32 %v1310, %v1342
  %v1344 = vpop.f32.mrf.mxu0
  %v1345 = vadd.f32 %v1312, %v1344
  %1346 = vmatmul.bf16.gmra.mxu0 %v504
  %v1347 = vpop.f32.mrf.mxu0
  %v1348 = vadd.f32 %v1315, %v1347
  %v1349 = vpop.f32.mrf.mxu0
  %v1350 = vadd.f32 %v1317, %v1349
  %1351 = vmatmul.bf16.gmra.mxu0 %v517
  %v1352 = vpop.f32.mrf.mxu0
  %v1353 = vadd.f32 %v1320, %v1352
  %v1354 = vpop.f32.mrf.mxu0
  %v1355 = vadd.f32 %v1322, %v1354
  %1356 = vmatmul.bf16.gmra.mxu0 %v530
  %v1357 = vpop.f32.mrf.mxu0
  %v1358 = vadd.f32 %v1325, %v1357
  %v1359 = vpop.f32.mrf.mxu0
  %1360 = vdwg.mxu0
  %1361 = vmatpush.bf16.msra.mxu0 %v1060
  %1362 = vmatpush.bf16.msra.mxu0 %v1059
  %1363 = vmatpush.bf16.msra.mxu0 %v1058
  %1364 = vmatpush.bf16.msra.mxu0 %v1057
  %1365 = vmatpush.bf16.msra.mxu0 %v1056
  %1366 = vmatpush.bf16.msra.mxu0 %v1055
  %1367 = vmatpush.bf16.msra.mxu0 %v1054
  %1368 = vmatpush.bf16.msra.mxu0 %v1053
  %1369 = vmatmul.bf16.gmra.mxu0 %v479
  %v1370 = vpop.f32.mrf.mxu0
  %v1371 = vadd.f32 %v1338, %v1370
  %v1372 = vpop.f32.mrf.mxu0
  %v1373 = vadd.f32 %v1340, %v1372
  %1374 = vmatmul.bf16.gmra.mxu0 %v492
  %v1375 = vpop.f32.mrf.mxu0
  %v1376 = vadd.f32 %v1343, %v1375
  %v1377 = vpop.f32.mrf.mxu0
  %v1378 = vadd.f32 %v1345, %v1377
  %1379 = vmatmul.bf16.gmra.mxu0 %v505
  %v1380 = vpop.f32.mrf.mxu0
  %v1381 = vadd.f32 %v1348, %v1380
  %v1382 = vpop.f32.mrf.mxu0
  %v1383 = vadd.f32 %v1350, %v1382
  %1384 = vmatmul.bf16.gmra.mxu0 %v518
  %v1385 = vpop.f32.mrf.mxu0
  %v1386 = vadd.f32 %v1353, %v1385
  %v1387 = vpop.f32.mrf.mxu0
  %v1388 = vadd.f32 %v1355, %v1387
  %1389 = vmatmul.bf16.gmra.mxu0 %v531
  %v1390 = vpop.f32.mrf.mxu0
  %v1391 = vadd.f32 %v1358, %v1390
  %v1392 = vpop.f32.mrf.mxu0
  %1393 = vdwg.mxu0
  %1394 = vmatpush.bf16.msra.mxu0 %v1068
  %1395 = vmatpush.bf16.msra.mxu0 %v1067
  %1396 = vmatpush.bf16.msra.mxu0 %v1066
  %1397 = vmatpush.bf16.msra.mxu0 %v1065
  %1398 = vmatpush.bf16.msra.mxu0 %v1064
  %1399 = vmatpush.bf16.msra.mxu0 %v1063
  %1400 = vmatpush.bf16.msra.mxu0 %v1062
  %1401 = vmatpush.bf16.msra.mxu0 %v1061
  %1402 = vmatmul.bf16.gmra.mxu0 %v480
  %v1403 = vpop.f32.mrf.mxu0
  %v1404 = vadd.f32 %v1371, %v1403
  %v1405 = vpop.f32.mrf.mxu0
  %v1406 = vadd.f32 %v1373, %v1405
  %1407 = vmatmul.bf16.gmra.mxu0 %v493
  %v1408 = vpop.f32.mrf.mxu0
  %v1409 = vadd.f32 %v1376, %v1408
  %v1410 = vpop.f32.mrf.mxu0
  %v1411 = vadd.f32 %v1378, %v1410
  %1412 = vmatmul.bf16.gmra.mxu0 %v506
  %v1413 = vpop.f32.mrf.mxu0
  %v1414 = vadd.f32 %v1381, %v1413
  %v1415 = vpop.f32.mrf.mxu0
  %v1416 = vadd.f32 %v1383, %v1415
  %1417 = vmatmul.bf16.gmra.mxu0 %v519
  %v1418 = vpop.f32.mrf.mxu0
  %v1419 = vadd.f32 %v1386, %v1418
  %v1420 = vpop.f32.mrf.mxu0
  %v1421 = vadd.f32 %v1388, %v1420
  %1422 = vmatmul.bf16.gmra.mxu0 %v532
  %v1423 = vpop.f32.mrf.mxu0
  %v1424 = vadd.f32 %v1391, %v1423
  %v1425 = vpop.f32.mrf.mxu0
  %1426 = vdwg.mxu0
  %1427 = vmatpush.bf16.msra.mxu0 %v1076
  %1428 = vmatpush.bf16.msra.mxu0 %v1075
  %1429 = vmatpush.bf16.msra.mxu0 %v1074
  %1430 = vmatpush.bf16.msra.mxu0 %v1073
  %1431 = vmatpush.bf16.msra.mxu0 %v1072
  %1432 = vmatpush.bf16.msra.mxu0 %v1071
  %1433 = vmatpush.bf16.msra.mxu0 %v1070
  %1434 = vmatpush.bf16.msra.mxu0 %v1069
  %1435 = vmatmul.bf16.gmra.mxu0 %v481
  %v1436 = vpop.f32.mrf.mxu0
  %v1437 = vadd.f32 %v1404, %v1436
  %v1438 = vpop.f32.mrf.mxu0
  %v1439 = vadd.f32 %v1406, %v1438
  %1440 = vmatmul.bf16.gmra.mxu0 %v494
  %v1441 = vpop.f32.mrf.mxu0
  %v1442 = vadd.f32 %v1409, %v1441
  %v1443 = vpop.f32.mrf.mxu0
  %v1444 = vadd.f32 %v1411, %v1443
  %1445 = vmatmul.bf16.gmra.mxu0 %v507
  %v1446 = vpop.f32.mrf.mxu0
  %v1447 = vadd.f32 %v1414, %v1446
  %v1448 = vpop.f32.mrf.mxu0
  %v1449 = vadd.f32 %v1416, %v1448
  %1450 = vmatmul.bf16.gmra.mxu0 %v520
  %v1451 = vpop.f32.mrf.mxu0
  %v1452 = vadd.f32 %v1419, %v1451
  %v1453 = vpop.f32.mrf.mxu0
  %v1454 = vadd.f32 %v1421, %v1453
  %1455 = vmatmul.bf16.gmra.mxu0 %v533
  %v1456 = vpop.f32.mrf.mxu0
  %v1457 = vadd.f32 %v1424, %v1456
  %v1458 = vpop.f32.mrf.mxu0
  %1459 = vdwg.mxu0
  %1460 = vmatpush.bf16.msra.mxu0 %v1084
  %1461 = vmatpush.bf16.msra.mxu0 %v1083
  %1462 = vmatpush.bf16.msra.mxu0 %v1082
  %1463 = vmatpush.bf16.msra.mxu0 %v1081
  %1464 = vmatpush.bf16.msra.mxu0 %v1080
  %1465 = vmatpush.bf16.msra.mxu0 %v1079
  %1466 = vmatpush.bf16.msra.mxu0 %v1078
  %1467 = vmatpush.bf16.msra.mxu0 %v1077
  %1468 = vmatmul.bf16.gmra.mxu0 %v482
  %v1469 = vpop.f32.mrf.mxu0
  %v1470 = vadd.f32 %v1437, %v1469
  %v1471 = vpop.f32.mrf.mxu0
  %v1472 = vadd.f32 %v1439, %v1471
  %1473 = vmatmul.bf16.gmra.mxu0 %v495
  %v1474 = vpop.f32.mrf.mxu0
  %v1475 = vadd.f32 %v1442, %v1474
  %v1476 = vpop.f32.mrf.mxu0
  %v1477 = vadd.f32 %v1444, %v1476
  %1478 = vmatmul.bf16.gmra.mxu0 %v508
  %v1479 = vpop.f32.mrf.mxu0
  %v1480 = vadd.f32 %v1447, %v1479
  %v1481 = vpop.f32.mrf.mxu0
  %v1482 = vadd.f32 %v1449, %v1481
  %1483 = vmatmul.bf16.gmra.mxu0 %v521
  %v1484 = vpop.f32.mrf.mxu0
  %v1485 = vadd.f32 %v1452, %v1484
  %v1486 = vpop.f32.mrf.mxu0
  %v1487 = vadd.f32 %v1454, %v1486
  %1488 = vmatmul.bf16.gmra.mxu0 %v534
  %v1489 = vpop.f32.mrf.mxu0
  %v1490 = vadd.f32 %v1457, %v1489
  %v1491 = vpop.f32.mrf.mxu0
  %1492 = vdwg.mxu0
  %1493 = vmatpush.bf16.msra.mxu0 %v1092
  %1494 = vmatpush.bf16.msra.mxu0 %v1091
  %1495 = vmatpush.bf16.msra.mxu0 %v1090
  %1496 = vmatpush.bf16.msra.mxu0 %v1089
  %1497 = vmatpush.bf16.msra.mxu0 %v1088
  %1498 = vmatpush.bf16.msra.mxu0 %v1087
  %1499 = vmatpush.bf16.msra.mxu0 %v1086
  %1500 = vmatpush.bf16.msra.mxu0 %v1085
  %1501 = vmatmul.bf16.gmra.mxu0 %v483
  %v1502 = vpop.f32.mrf.mxu0
  %v1503 = vadd.f32 %v1470, %v1502
  %v1504 = vpop.f32.mrf.mxu0
  %v1505 = vadd.f32 %v1472, %v1504
  %1506 = vmatmul.bf16.gmra.mxu0 %v496
  %v1507 = vpop.f32.mrf.mxu0
  %v1508 = vadd.f32 %v1475, %v1507
  %v1509 = vpop.f32.mrf.mxu0
  %v1510 = vadd.f32 %v1477, %v1509
  %1511 = vmatmul.bf16.gmra.mxu0 %v509
  %v1512 = vpop.f32.mrf.mxu0
  %v1513 = vadd.f32 %v1480, %v1512
  %v1514 = vpop.f32.mrf.mxu0
  %v1515 = vadd.f32 %v1482, %v1514
  %1516 = vmatmul.bf16.gmra.mxu0 %v522
  %v1517 = vpop.f32.mrf.mxu0
  %v1518 = vadd.f32 %v1485, %v1517
  %v1519 = vpop.f32.mrf.mxu0
  %v1520 = vadd.f32 %v1487, %v1519
  %1521 = vmatmul.bf16.gmra.mxu0 %v535
  %v1522 = vpop.f32.mrf.mxu0
  %v1523 = vadd.f32 %v1490, %v1522
  %v1524 = vpop.f32.mrf.mxu0
  %1525 = vdwg.mxu0
  %1526 = vmatpush.bf16.msra.mxu0 %v1100
  %1527 = vmatpush.bf16.msra.mxu0 %v1099
  %1528 = vmatpush.bf16.msra.mxu0 %v1098
  %1529 = vmatpush.bf16.msra.mxu0 %v1097
  %1530 = vmatpush.bf16.msra.mxu0 %v1096
  %1531 = vmatpush.bf16.msra.mxu0 %v1095
  %1532 = vmatpush.bf16.msra.mxu0 %v1094
  %1533 = vmatpush.bf16.msra.mxu0 %v1093
  %1534 = vmatmul.bf16.gmra.mxu0 %v484
  %v1535 = vpop.f32.mrf.mxu0
  %v1536 = vadd.f32 %v1503, %v1535
  %v1537 = vpop.f32.mrf.mxu0
  %v1538 = vadd.f32 %v1505, %v1537
  %1539 = vmatmul.bf16.gmra.mxu0 %v497
  %v1540 = vpop.f32.mrf.mxu0
  %v1541 = vadd.f32 %v1508, %v1540
  %v1542 = vpop.f32.mrf.mxu0
  %v1543 = vadd.f32 %v1510, %v1542
  %1544 = vmatmul.bf16.gmra.mxu0 %v510
  %v1545 = vpop.f32.mrf.mxu0
  %v1546 = vadd.f32 %v1513, %v1545
  %v1547 = vpop.f32.mrf.mxu0
  %v1548 = vadd.f32 %v1515, %v1547
  %1549 = vmatmul.bf16.gmra.mxu0 %v523
  %v1550 = vpop.f32.mrf.mxu0
  %v1551 = vadd.f32 %v1518, %v1550
  %v1552 = vpop.f32.mrf.mxu0
  %v1553 = vadd.f32 %v1520, %v1552
  %1554 = vmatmul.bf16.gmra.mxu0 %v536
  %v1555 = vpop.f32.mrf.mxu0
  %v1556 = vadd.f32 %v1523, %v1555
  %v1557 = vpop.f32.mrf.mxu0
  %1558 = vdwg.mxu0
  %1559 = vmatpush.bf16.msra.mxu0 %v1108
  %1560 = vmatpush.bf16.msra.mxu0 %v1107
  %1561 = vmatpush.bf16.msra.mxu0 %v1106
  %1562 = vmatpush.bf16.msra.mxu0 %v1105
  %1563 = vmatpush.bf16.msra.mxu0 %v1104
  %1564 = vmatpush.bf16.msra.mxu0 %v1103
  %1565 = vmatpush.bf16.msra.mxu0 %v1102
  %1566 = vmatpush.bf16.msra.mxu0 %v1101
  %1567 = vmatmul.bf16.gmra.mxu0 %v485
  %v1568 = vpop.f32.mrf.mxu0
  %v1569 = vadd.f32 %v1536, %v1568
  %v1570 = vpop.f32.mrf.mxu0
  %v1571 = vadd.f32 %v1538, %v1570
  %1572 = vmatmul.bf16.gmra.mxu0 %v498
  %v1573 = vpop.f32.mrf.mxu0
  %v1574 = vadd.f32 %v1541, %v1573
  %v1575 = vpop.f32.mrf.mxu0
  %v1576 = vadd.f32 %v1543, %v1575
  %1577 = vmatmul.bf16.gmra.mxu0 %v511
  %v1578 = vpop.f32.mrf.mxu0
  %v1579 = vadd.f32 %v1546, %v1578
  %v1580 = vpop.f32.mrf.mxu0
  %v1581 = vadd.f32 %v1548, %v1580
  %1582 = vmatmul.bf16.gmra.mxu0 %v524
  %v1583 = vpop.f32.mrf.mxu0
  %v1584 = vadd.f32 %v1551, %v1583
  %v1585 = vpop.f32.mrf.mxu0
  %v1586 = vadd.f32 %v1553, %v1585
  %1587 = vmatmul.bf16.gmra.mxu0 %v537
  %v1588 = vpop.f32.mrf.mxu0
  %v1589 = vadd.f32 %v1556, %v1588
  %v1590 = vpop.f32.mrf.mxu0
  %1591 = vdwg.mxu0
  %1592 = vmatpush.bf16.msra.mxu0 %v1116
  %1593 = vmatpush.bf16.msra.mxu0 %v1115
  %1594 = vmatpush.bf16.msra.mxu0 %v1114
  %1595 = vmatpush.bf16.msra.mxu0 %v1113
  %1596 = vmatpush.bf16.msra.mxu0 %v1112
  %1597 = vmatpush.bf16.msra.mxu0 %v1111
  %1598 = vmatpush.bf16.msra.mxu0 %v1110
  %1599 = vmatpush.bf16.msra.mxu0 %v1109
  %1600 = vmatmul.bf16.gmra.mxu0 %v486
  %v1601 = vpop.f32.mrf.mxu0
  %v1602 = vadd.f32 %v1569, %v1601
  %v1603 = vpop.f32.mrf.mxu0
  %v1604 = vadd.f32 %v1571, %v1603
  %1605 = vmatmul.bf16.gmra.mxu0 %v499
  %v1606 = vpop.f32.mrf.mxu0
  %v1607 = vadd.f32 %v1574, %v1606
  %v1608 = vpop.f32.mrf.mxu0
  %v1609 = vadd.f32 %v1576, %v1608
  %1610 = vmatmul.bf16.gmra.mxu0 %v512
  %v1611 = vpop.f32.mrf.mxu0
  %v1612 = vadd.f32 %v1579, %v1611
  %v1613 = vpop.f32.mrf.mxu0
  %v1614 = vadd.f32 %v1581, %v1613
  %1615 = vmatmul.bf16.gmra.mxu0 %v525
  %v1616 = vpop.f32.mrf.mxu0
  %v1617 = vadd.f32 %v1584, %v1616
  %v1618 = vpop.f32.mrf.mxu0
  %v1619 = vadd.f32 %v1586, %v1618
  %1620 = vmatmul.bf16.gmra.mxu0 %v538
  %v1621 = vpop.f32.mrf.mxu0
  %v1622 = vadd.f32 %v1589, %v1621
  %v1623 = vpop.f32.mrf.mxu0
  %1624 = vdwg.mxu0
  %1625 = vmatpush.bf16.msra.mxu0 %v1124
  %1626 = vmatpush.bf16.msra.mxu0 %v1123
  %1627 = vmatpush.bf16.msra.mxu0 %v1122
  %1628 = vmatpush.bf16.msra.mxu0 %v1121
  %1629 = vmatpush.bf16.msra.mxu0 %v1120
  %1630 = vmatpush.bf16.msra.mxu0 %v1119
  %1631 = vmatpush.bf16.msra.mxu0 %v1118
  %1632 = vmatpush.bf16.msra.mxu0 %v1117
  %1633 = vmatmul.bf16.gmra.mxu0 %v487
  %v1634 = vpop.f32.mrf.mxu0
  %v1635 = vadd.f32 %v1602, %v1634
  %v1636 = vpop.f32.mrf.mxu0
  %v1637 = vadd.f32 %v1604, %v1636
  %1638 = vmatmul.bf16.gmra.mxu0 %v500
  %v1639 = vpop.f32.mrf.mxu0
  %v1640 = vadd.f32 %v1607, %v1639
  %v1641 = vpop.f32.mrf.mxu0
  %v1642 = vadd.f32 %v1609, %v1641
  %1643 = vmatmul.bf16.gmra.mxu0 %v513
  %v1644 = vpop.f32.mrf.mxu0
  %v1645 = vadd.f32 %v1612, %v1644
  %v1646 = vpop.f32.mrf.mxu0
  %v1647 = vadd.f32 %v1614, %v1646
  %1648 = vmatmul.bf16.gmra.mxu0 %v526
  %v1649 = vpop.f32.mrf.mxu0
  %v1650 = vadd.f32 %v1617, %v1649
  %v1651 = vpop.f32.mrf.mxu0
  %v1652 = vadd.f32 %v1619, %v1651
  %1653 = vmatmul.bf16.gmra.mxu0 %v539
  %v1654 = vpop.f32.mrf.mxu0
  %v1655 = vadd.f32 %v1622, %v1654
  %v1656 = vpop.f32.mrf.mxu0
  %1657 = vdwg.mxu0
  %v1658 = vmax.f32 %v1635, 0.0
  %v1659 = vmax.f32 %v1637, 0.0
  %v1660 = vmax.f32 %v1640, 0.0
  %v1661 = vmax.f32 %v1642, 0.0
  %v1662 = vmax.f32 %v1645, 0.0
  %v1663 = vmax.f32 %v1647, 0.0
  %v1664 = vmax.f32 %v1650, 0.0
  %v1665 = vmax.f32 %v1652, 0.0
  %v1666 = vmax.f32 %v1655, 0.0
  %v1667 = vpack.c.bf16 %v1658, %v1658
  %v1668 = vpack.c.bf16 %v1659, %v1659
  %v1669 = vpack.c.bf16 %v1660, %v1660
  %v1670 = vpack.c.bf16 %v1661, %v1661
  %v1671 = vpack.c.bf16 %v1662, %v1662
  %v1672 = vpack.c.bf16 %v1663, %v1663
  %v1673 = vpack.c.bf16 %v1664, %v1664
  %v1674 = vpack.c.bf16 %v1665, %v1665
  %v1675 = vpack.c.bf16 %v1666, %v1666
  %v1676 = vld [vmem:[%s3] sm:$0xf]
  %v1677 = vld [vmem:[%s3 + $0x4] sm:$0xf]
  %v1678 = vld [vmem:[%s3 + $0x8] sm:$0xf]
  %v1679 = vld [vmem:[%s3 + $0xc] sm:$0xf]
  %v1680 = vld [vmem:[%s3 + $0x10] sm:$0xf]
  %v1681 = vld [vmem:[%s3 + $0x14] sm:$0xf]
  %v1682 = vld [vmem:[%s3 + $0x18] sm:$0xf]
  %v1683 = vld [vmem:[%s3 + $0x1c] sm:$0xf]
  %v1684 = vld [vmem:[%s3 + $0x20] sm:$0xf]
  %v1685 = vld [vmem:[%s3 + $0x24] sm:$0xf]
  %v1686 = vld [vmem:[%s3 + $0x28] sm:$0xf]
  %v1687 = vld [vmem:[%s3 + $0x2c] sm:$0xf]
  %v1688 = vld [vmem:[%s3 + $0x30] sm:$0xf]
  %v1689 = vld [vmem:[%s3 + $0x34] sm:$0xf]
  %v1690 = vld [vmem:[%s3 + $0x38] sm:$0xf]
  %v1691 = vld [vmem:[%s3 + $0x3c] sm:$0xf]
  %s1692 = scalar_lea.vmem %s3, 64
  %v1693 = vld [vmem:[%s1692] sm:$0xf]
  %v1694 = vld [vmem:[%s1692 + $0x4] sm:$0xf]
  %v1695 = vld [vmem:[%s1692 + $0x8] sm:$0xf]
  %v1696 = vld [vmem:[%s1692 + $0xc] sm:$0xf]
  %v1697 = vld [vmem:[%s1692 + $0x10] sm:$0xf]
  %v1698 = vld [vmem:[%s1692 + $0x14] sm:$0xf]
  %v1699 = vld [vmem:[%s1692 + $0x18] sm:$0xf]
  %v1700 = vld [vmem:[%s1692 + $0x1c] sm:$0xf]
  %v1701 = vld [vmem:[%s1692 + $0x20] sm:$0xf]
  %v1702 = vld [vmem:[%s1692 + $0x24] sm:$0xf]
  %v1703 = vld [vmem:[%s1692 + $0x28] sm:$0xf]
  %v1704 = vld [vmem:[%s1692 + $0x2c] sm:$0xf]
  %v1705 = vld [vmem:[%s1692 + $0x30] sm:$0xf]
  %v1706 = vld [vmem:[%s1692 + $0x34] sm:$0xf]
  %v1707 = vld [vmem:[%s1692 + $0x38] sm:$0xf]
  %v1708 = vld [vmem:[%s1692 + $0x3c] sm:$0xf]
  %v1725 = vunpack.c.l.b16 %v1693
  %v1726 = vunpack.c.l.b16 %v1694
  %v1727 = vunpack.c.l.b16 %v1695
  %v1728 = vunpack.c.l.b16 %v1696
  %v1729 = vunpack.c.l.b16 %v1697
  %v1730 = vunpack.c.l.b16 %v1698
  %v1731 = vunpack.c.l.b16 %v1699
  %v1732 = vunpack.c.l.b16 %v1700
  %v1733 = vunpack.c.l.b16 %v1701
  %v1734 = vunpack.c.l.b16 %v1702
  %v1735 = vunpack.c.l.b16 %v1703
  %v1736 = vunpack.c.l.b16 %v1704
  %v1737 = vunpack.c.l.b16 %v1705
  %v1738 = vunpack.c.l.b16 %v1706
  %v1739 = vunpack.c.l.b16 %v1707
  %v1740 = vunpack.c.l.b16 %v1708
  %v1741 = vpack.c.b16 %v1726, %v1725
  %v1742 = vpack.c.b16 %v1728, %v1727
  %v1743 = vpack.c.b16 %v1730, %v1729
  %v1744 = vpack.c.b16 %v1732, %v1731
  %v1745 = vpack.c.b16 %v1734, %v1733
  %v1746 = vpack.c.b16 %v1736, %v1735
  %v1747 = vpack.c.b16 %v1738, %v1737
  %v1748 = vpack.c.b16 %v1740, %v1739
  %1757 = vmatpush.bf16.msra.mxu0 %v1748
  %1758 = vmatpush.bf16.msra.mxu0 %v1747
  %1759 = vmatpush.bf16.msra.mxu0 %v1746
  %1760 = vmatpush.bf16.msra.mxu0 %v1745
  %1761 = vmatpush.bf16.msra.mxu0 %v1744
  %1762 = vmatpush.bf16.msra.mxu0 %v1743
  %1763 = vmatpush.bf16.msra.mxu0 %v1742
  %1764 = vmatpush.bf16.msra.mxu0 %v1741
  %1765 = vmatmul.bf16.gmra.mxu0 %v1668
  %v1766 = vpop.f32.mrf.mxu0
  %v1767 = vadd.f32 0.0, %v1766
  %v1768 = vpop.f32.mrf.mxu0
  %1769 = vdwg.mxu0
  %v1786 = vunpack.c.l.b16 %v1676
  %v1787 = vunpack.c.l.b16 %v1677
  %v1788 = vunpack.c.l.b16 %v1678
  %v1789 = vunpack.c.l.b16 %v1679
  %v1790 = vunpack.c.l.b16 %v1680
  %v1791 = vunpack.c.l.b16 %v1681
  %v1792 = vunpack.c.l.b16 %v1682
  %v1793 = vunpack.c.l.b16 %v1683
  %v1794 = vunpack.c.l.b16 %v1684
  %v1795 = vunpack.c.l.b16 %v1685
  %v1796 = vunpack.c.l.b16 %v1686
  %v1797 = vunpack.c.l.b16 %v1687
  %v1798 = vunpack.c.l.b16 %v1688
  %v1799 = vunpack.c.l.b16 %v1689
  %v1800 = vunpack.c.l.b16 %v1690
  %v1801 = vunpack.c.l.b16 %v1691
  %v1802 = vpack.c.b16 %v1787, %v1786
  %v1803 = vpack.c.b16 %v1789, %v1788
  %v1804 = vpack.c.b16 %v1791, %v1790
  %v1805 = vpack.c.b16 %v1793, %v1792
  %v1806 = vpack.c.b16 %v1795, %v1794
  %v1807 = vpack.c.b16 %v1797, %v1796
  %v1808 = vpack.c.b16 %v1799, %v1798
  %v1809 = vpack.c.b16 %v1801, %v1800
  %1818 = vmatpush.bf16.msra.mxu0 %v1809
  %1819 = vmatpush.bf16.msra.mxu0 %v1808
  %1820 = vmatpush.bf16.msra.mxu0 %v1807
  %1821 = vmatpush.bf16.msra.mxu0 %v1806
  %1822 = vmatpush.bf16.msra.mxu0 %v1805
  %1823 = vmatpush.bf16.msra.mxu0 %v1804
  %1824 = vmatpush.bf16.msra.mxu0 %v1803
  %1825 = vmatpush.bf16.msra.mxu0 %v1802
  %1826 = vmatmul.bf16.gmra.mxu0 %v1667
  %v1827 = vpop.f32.mrf.mxu0
  %v1828 = vadd.f32 %v1767, %v1827
  %v1829 = vpop.f32.mrf.mxu0
  %1830 = vdwg.mxu0
  %s1831 = scalar_lea.vmem %s3, 128
  %v1832 = vld [vmem:[%s1831] sm:$0xf]
  %v1833 = vld [vmem:[%s1831 + $0x4] sm:$0xf]
  %v1834 = vld [vmem:[%s1831 + $0x8] sm:$0xf]
  %v1835 = vld [vmem:[%s1831 + $0xc] sm:$0xf]
  %v1836 = vld [vmem:[%s1831 + $0x10] sm:$0xf]
  %v1837 = vld [vmem:[%s1831 + $0x14] sm:$0xf]
  %v1838 = vld [vmem:[%s1831 + $0x18] sm:$0xf]
  %v1839 = vld [vmem:[%s1831 + $0x1c] sm:$0xf]
  %v1840 = vld [vmem:[%s1831 + $0x20] sm:$0xf]
  %v1841 = vld [vmem:[%s1831 + $0x24] sm:$0xf]
  %v1842 = vld [vmem:[%s1831 + $0x28] sm:$0xf]
  %v1843 = vld [vmem:[%s1831 + $0x2c] sm:$0xf]
  %v1844 = vld [vmem:[%s1831 + $0x30] sm:$0xf]
  %v1845 = vld [vmem:[%s1831 + $0x34] sm:$0xf]
  %v1846 = vld [vmem:[%s1831 + $0x38] sm:$0xf]
  %v1847 = vld [vmem:[%s1831 + $0x3c] sm:$0xf]
  %v1864 = vunpack.c.l.b16 %v1832
  %v1865 = vunpack.c.l.b16 %v1833
  %v1866 = vunpack.c.l.b16 %v1834
  %v1867 = vunpack.c.l.b16 %v1835
  %v1868 = vunpack.c.l.b16 %v1836
  %v1869 = vunpack.c.l.b16 %v1837
  %v1870 = vunpack.c.l.b16 %v1838
  %v1871 = vunpack.c.l.b16 %v1839
  %v1872 = vunpack.c.l.b16 %v1840
  %v1873 = vunpack.c.l.b16 %v1841
  %v1874 = vunpack.c.l.b16 %v1842
  %v1875 = vunpack.c.l.b16 %v1843
  %v1876 = vunpack.c.l.b16 %v1844
  %v1877 = vunpack.c.l.b16 %v1845
  %v1878 = vunpack.c.l.b16 %v1846
  %v1879 = vunpack.c.l.b16 %v1847
  %v1880 = vpack.c.b16 %v1865, %v1864
  %v1881 = vpack.c.b16 %v1867, %v1866
  %v1882 = vpack.c.b16 %v1869, %v1868
  %v1883 = vpack.c.b16 %v1871, %v1870
  %v1884 = vpack.c.b16 %v1873, %v1872
  %v1885 = vpack.c.b16 %v1875, %v1874
  %v1886 = vpack.c.b16 %v1877, %v1876
  %v1887 = vpack.c.b16 %v1879, %v1878
  %1896 = vmatpush.bf16.msra.mxu0 %v1887
  %1897 = vmatpush.bf16.msra.mxu0 %v1886
  %1898 = vmatpush.bf16.msra.mxu0 %v1885
  %1899 = vmatpush.bf16.msra.mxu0 %v1884
  %1900 = vmatpush.bf16.msra.mxu0 %v1883
  %1901 = vmatpush.bf16.msra.mxu0 %v1882
  %1902 = vmatpush.bf16.msra.mxu0 %v1881
  %1903 = vmatpush.bf16.msra.mxu0 %v1880
  %1904 = vmatmul.bf16.gmra.mxu0 %v1669
  %v1905 = vpop.f32.mrf.mxu0
  %v1906 = vadd.f32 0.0, %v1905
  %v1907 = vpop.f32.mrf.mxu0
  %1908 = vdwg.mxu0
  %v1909 = vadd.f32 %v1828, %v1906
  %s1910 = scalar_lea.vmem %s3, 192
  %v1911 = vld [vmem:[%s1910] sm:$0xf]
  %v1912 = vld [vmem:[%s1910 + $0x4] sm:$0xf]
  %v1913 = vld [vmem:[%s1910 + $0x8] sm:$0xf]
  %v1914 = vld [vmem:[%s1910 + $0xc] sm:$0xf]
  %v1915 = vld [vmem:[%s1910 + $0x10] sm:$0xf]
  %v1916 = vld [vmem:[%s1910 + $0x14] sm:$0xf]
  %v1917 = vld [vmem:[%s1910 + $0x18] sm:$0xf]
  %v1918 = vld [vmem:[%s1910 + $0x1c] sm:$0xf]
  %v1919 = vld [vmem:[%s1910 + $0x20] sm:$0xf]
  %v1920 = vld [vmem:[%s1910 + $0x24] sm:$0xf]
  %v1921 = vld [vmem:[%s1910 + $0x28] sm:$0xf]
  %v1922 = vld [vmem:[%s1910 + $0x2c] sm:$0xf]
  %v1923 = vld [vmem:[%s1910 + $0x30] sm:$0xf]
  %v1924 = vld [vmem:[%s1910 + $0x34] sm:$0xf]
  %v1925 = vld [vmem:[%s1910 + $0x38] sm:$0xf]
  %v1926 = vld [vmem:[%s1910 + $0x3c] sm:$0xf]
  %v1943 = vunpack.c.l.b16 %v1911
  %v1944 = vunpack.c.l.b16 %v1912
  %v1945 = vunpack.c.l.b16 %v1913
  %v1946 = vunpack.c.l.b16 %v1914
  %v1947 = vunpack.c.l.b16 %v1915
  %v1948 = vunpack.c.l.b16 %v1916
  %v1949 = vunpack.c.l.b16 %v1917
  %v1950 = vunpack.c.l.b16 %v1918
  %v1951 = vunpack.c.l.b16 %v1919
  %v1952 = vunpack.c.l.b16 %v1920
  %v1953 = vunpack.c.l.b16 %v1921
  %v1954 = vunpack.c.l.b16 %v1922
  %v1955 = vunpack.c.l.b16 %v1923
  %v1956 = vunpack.c.l.b16 %v1924
  %v1957 = vunpack.c.l.b16 %v1925
  %v1958 = vunpack.c.l.b16 %v1926
  %v1959 = vpack.c.b16 %v1944, %v1943
  %v1960 = vpack.c.b16 %v1946, %v1945
  %v1961 = vpack.c.b16 %v1948, %v1947
  %v1962 = vpack.c.b16 %v1950, %v1949
  %v1963 = vpack.c.b16 %v1952, %v1951
  %v1964 = vpack.c.b16 %v1954, %v1953
  %v1965 = vpack.c.b16 %v1956, %v1955
  %v1966 = vpack.c.b16 %v1958, %v1957
  %1975 = vmatpush.bf16.msra.mxu0 %v1966
  %1976 = vmatpush.bf16.msra.mxu0 %v1965
  %1977 = vmatpush.bf16.msra.mxu0 %v1964
  %1978 = vmatpush.bf16.msra.mxu0 %v1963
  %1979 = vmatpush.bf16.msra.mxu0 %v1962
  %1980 = vmatpush.bf16.msra.mxu0 %v1961
  %1981 = vmatpush.bf16.msra.mxu0 %v1960
  %1982 = vmatpush.bf16.msra.mxu0 %v1959
  %1983 = vmatmul.bf16.gmra.mxu0 %v1670
  %v1984 = vpop.f32.mrf.mxu0
  %v1985 = vadd.f32 0.0, %v1984
  %v1986 = vpop.f32.mrf.mxu0
  %1987 = vdwg.mxu0
  %v1988 = vadd.f32 %v1909, %v1985
  %s1989 = scalar_lea.vmem %s3, 256
  %v1990 = vld [vmem:[%s1989] sm:$0xf]
  %v1991 = vld [vmem:[%s1989 + $0x4] sm:$0xf]
  %v1992 = vld [vmem:[%s1989 + $0x8] sm:$0xf]
  %v1993 = vld [vmem:[%s1989 + $0xc] sm:$0xf]
  %v1994 = vld [vmem:[%s1989 + $0x10] sm:$0xf]
  %v1995 = vld [vmem:[%s1989 + $0x14] sm:$0xf]
  %v1996 = vld [vmem:[%s1989 + $0x18] sm:$0xf]
  %v1997 = vld [vmem:[%s1989 + $0x1c] sm:$0xf]
  %v1998 = vld [vmem:[%s1989 + $0x20] sm:$0xf]
  %v1999 = vld [vmem:[%s1989 + $0x24] sm:$0xf]
  %v2000 = vld [vmem:[%s1989 + $0x28] sm:$0xf]
  %v2001 = vld [vmem:[%s1989 + $0x2c] sm:$0xf]
  %v2002 = vld [vmem:[%s1989 + $0x30] sm:$0xf]
  %v2003 = vld [vmem:[%s1989 + $0x34] sm:$0xf]
  %v2004 = vld [vmem:[%s1989 + $0x38] sm:$0xf]
  %v2005 = vld [vmem:[%s1989 + $0x3c] sm:$0xf]
  %v2022 = vunpack.c.l.b16 %v1990
  %v2023 = vunpack.c.l.b16 %v1991
  %v2024 = vunpack.c.l.b16 %v1992
  %v2025 = vunpack.c.l.b16 %v1993
  %v2026 = vunpack.c.l.b16 %v1994
  %v2027 = vunpack.c.l.b16 %v1995
  %v2028 = vunpack.c.l.b16 %v1996
  %v2029 = vunpack.c.l.b16 %v1997
  %v2030 = vunpack.c.l.b16 %v1998
  %v2031 = vunpack.c.l.b16 %v1999
  %v2032 = vunpack.c.l.b16 %v2000
  %v2033 = vunpack.c.l.b16 %v2001
  %v2034 = vunpack.c.l.b16 %v2002
  %v2035 = vunpack.c.l.b16 %v2003
  %v2036 = vunpack.c.l.b16 %v2004
  %v2037 = vunpack.c.l.b16 %v2005
  %v2038 = vpack.c.b16 %v2023, %v2022
  %v2039 = vpack.c.b16 %v2025, %v2024
  %v2040 = vpack.c.b16 %v2027, %v2026
  %v2041 = vpack.c.b16 %v2029, %v2028
  %v2042 = vpack.c.b16 %v2031, %v2030
  %v2043 = vpack.c.b16 %v2033, %v2032
  %v2044 = vpack.c.b16 %v2035, %v2034
  %v2045 = vpack.c.b16 %v2037, %v2036
  %2054 = vmatpush.bf16.msra.mxu0 %v2045
  %2055 = vmatpush.bf16.msra.mxu0 %v2044
  %2056 = vmatpush.bf16.msra.mxu0 %v2043
  %2057 = vmatpush.bf16.msra.mxu0 %v2042
  %2058 = vmatpush.bf16.msra.mxu0 %v2041
  %2059 = vmatpush.bf16.msra.mxu0 %v2040
  %2060 = vmatpush.bf16.msra.mxu0 %v2039
  %2061 = vmatpush.bf16.msra.mxu0 %v2038
  %2062 = vmatmul.bf16.gmra.mxu0 %v1671
  %v2063 = vpop.f32.mrf.mxu0
  %v2064 = vadd.f32 0.0, %v2063
  %v2065 = vpop.f32.mrf.mxu0
  %2066 = vdwg.mxu0
  %v2067 = vadd.f32 %v1988, %v2064
  %s2068 = scalar_lea.vmem %s3, 320
  %v2069 = vld [vmem:[%s2068] sm:$0xf]
  %v2070 = vld [vmem:[%s2068 + $0x4] sm:$0xf]
  %v2071 = vld [vmem:[%s2068 + $0x8] sm:$0xf]
  %v2072 = vld [vmem:[%s2068 + $0xc] sm:$0xf]
  %v2073 = vld [vmem:[%s2068 + $0x10] sm:$0xf]
  %v2074 = vld [vmem:[%s2068 + $0x14] sm:$0xf]
  %v2075 = vld [vmem:[%s2068 + $0x18] sm:$0xf]
  %v2076 = vld [vmem:[%s2068 + $0x1c] sm:$0xf]
  %v2077 = vld [vmem:[%s2068 + $0x20] sm:$0xf]
  %v2078 = vld [vmem:[%s2068 + $0x24] sm:$0xf]
  %v2079 = vld [vmem:[%s2068 + $0x28] sm:$0xf]
  %v2080 = vld [vmem:[%s2068 + $0x2c] sm:$0xf]
  %v2081 = vld [vmem:[%s2068 + $0x30] sm:$0xf]
  %v2082 = vld [vmem:[%s2068 + $0x34] sm:$0xf]
  %v2083 = vld [vmem:[%s2068 + $0x38] sm:$0xf]
  %v2084 = vld [vmem:[%s2068 + $0x3c] sm:$0xf]
  %v2101 = vunpack.c.l.b16 %v2069
  %v2102 = vunpack.c.l.b16 %v2070
  %v2103 = vunpack.c.l.b16 %v2071
  %v2104 = vunpack.c.l.b16 %v2072
  %v2105 = vunpack.c.l.b16 %v2073
  %v2106 = vunpack.c.l.b16 %v2074
  %v2107 = vunpack.c.l.b16 %v2075
  %v2108 = vunpack.c.l.b16 %v2076
  %v2109 = vunpack.c.l.b16 %v2077
  %v2110 = vunpack.c.l.b16 %v2078
  %v2111 = vunpack.c.l.b16 %v2079
  %v2112 = vunpack.c.l.b16 %v2080
  %v2113 = vunpack.c.l.b16 %v2081
  %v2114 = vunpack.c.l.b16 %v2082
  %v2115 = vunpack.c.l.b16 %v2083
  %v2116 = vunpack.c.l.b16 %v2084
  %v2117 = vpack.c.b16 %v2102, %v2101
  %v2118 = vpack.c.b16 %v2104, %v2103
  %v2119 = vpack.c.b16 %v2106, %v2105
  %v2120 = vpack.c.b16 %v2108, %v2107
  %v2121 = vpack.c.b16 %v2110, %v2109
  %v2122 = vpack.c.b16 %v2112, %v2111
  %v2123 = vpack.c.b16 %v2114, %v2113
  %v2124 = vpack.c.b16 %v2116, %v2115
  %2133 = vmatpush.bf16.msra.mxu0 %v2124
  %2134 = vmatpush.bf16.msra.mxu0 %v2123
  %2135 = vmatpush.bf16.msra.mxu0 %v2122
  %2136 = vmatpush.bf16.msra.mxu0 %v2121
  %2137 = vmatpush.bf16.msra.mxu0 %v2120
  %2138 = vmatpush.bf16.msra.mxu0 %v2119
  %2139 = vmatpush.bf16.msra.mxu0 %v2118
  %2140 = vmatpush.bf16.msra.mxu0 %v2117
  %2141 = vmatmul.bf16.gmra.mxu0 %v1672
  %v2142 = vpop.f32.mrf.mxu0
  %v2143 = vadd.f32 0.0, %v2142
  %v2144 = vpop.f32.mrf.mxu0
  %2145 = vdwg.mxu0
  %v2146 = vadd.f32 %v2067, %v2143
  %s2147 = scalar_lea.vmem %s3, 384
  %v2148 = vld [vmem:[%s2147] sm:$0xf]
  %v2149 = vld [vmem:[%s2147 + $0x4] sm:$0xf]
  %v2150 = vld [vmem:[%s2147 + $0x8] sm:$0xf]
  %v2151 = vld [vmem:[%s2147 + $0xc] sm:$0xf]
  %v2152 = vld [vmem:[%s2147 + $0x10] sm:$0xf]
  %v2153 = vld [vmem:[%s2147 + $0x14] sm:$0xf]
  %v2154 = vld [vmem:[%s2147 + $0x18] sm:$0xf]
  %v2155 = vld [vmem:[%s2147 + $0x1c] sm:$0xf]
  %v2156 = vld [vmem:[%s2147 + $0x20] sm:$0xf]
  %v2157 = vld [vmem:[%s2147 + $0x24] sm:$0xf]
  %v2158 = vld [vmem:[%s2147 + $0x28] sm:$0xf]
  %v2159 = vld [vmem:[%s2147 + $0x2c] sm:$0xf]
  %v2160 = vld [vmem:[%s2147 + $0x30] sm:$0xf]
  %v2161 = vld [vmem:[%s2147 + $0x34] sm:$0xf]
  %v2162 = vld [vmem:[%s2147 + $0x38] sm:$0xf]
  %v2163 = vld [vmem:[%s2147 + $0x3c] sm:$0xf]
  %v2180 = vunpack.c.l.b16 %v2148
  %v2181 = vunpack.c.l.b16 %v2149
  %v2182 = vunpack.c.l.b16 %v2150
  %v2183 = vunpack.c.l.b16 %v2151
  %v2184 = vunpack.c.l.b16 %v2152
  %v2185 = vunpack.c.l.b16 %v2153
  %v2186 = vunpack.c.l.b16 %v2154
  %v2187 = vunpack.c.l.b16 %v2155
  %v2188 = vunpack.c.l.b16 %v2156
  %v2189 = vunpack.c.l.b16 %v2157
  %v2190 = vunpack.c.l.b16 %v2158
  %v2191 = vunpack.c.l.b16 %v2159
  %v2192 = vunpack.c.l.b16 %v2160
  %v2193 = vunpack.c.l.b16 %v2161
  %v2194 = vunpack.c.l.b16 %v2162
  %v2195 = vunpack.c.l.b16 %v2163
  %v2196 = vpack.c.b16 %v2181, %v2180
  %v2197 = vpack.c.b16 %v2183, %v2182
  %v2198 = vpack.c.b16 %v2185, %v2184
  %v2199 = vpack.c.b16 %v2187, %v2186
  %v2200 = vpack.c.b16 %v2189, %v2188
  %v2201 = vpack.c.b16 %v2191, %v2190
  %v2202 = vpack.c.b16 %v2193, %v2192
  %v2203 = vpack.c.b16 %v2195, %v2194
  %2212 = vmatpush.bf16.msra.mxu0 %v2203
  %2213 = vmatpush.bf16.msra.mxu0 %v2202
  %2214 = vmatpush.bf16.msra.mxu0 %v2201
  %2215 = vmatpush.bf16.msra.mxu0 %v2200
  %2216 = vmatpush.bf16.msra.mxu0 %v2199
  %2217 = vmatpush.bf16.msra.mxu0 %v2198
  %2218 = vmatpush.bf16.msra.mxu0 %v2197
  %2219 = vmatpush.bf16.msra.mxu0 %v2196
  %2220 = vmatmul.bf16.gmra.mxu0 %v1673
  %v2221 = vpop.f32.mrf.mxu0
  %v2222 = vadd.f32 0.0, %v2221
  %v2223 = vpop.f32.mrf.mxu0
  %2224 = vdwg.mxu0
  %v2225 = vadd.f32 %v2146, %v2222
  %s2226 = scalar_lea.vmem %s3, 448
  %v2227 = vld [vmem:[%s2226] sm:$0xf]
  %v2228 = vld [vmem:[%s2226 + $0x4] sm:$0xf]
  %v2229 = vld [vmem:[%s2226 + $0x8] sm:$0xf]
  %v2230 = vld [vmem:[%s2226 + $0xc] sm:$0xf]
  %v2231 = vld [vmem:[%s2226 + $0x10] sm:$0xf]
  %v2232 = vld [vmem:[%s2226 + $0x14] sm:$0xf]
  %v2233 = vld [vmem:[%s2226 + $0x18] sm:$0xf]
  %v2234 = vld [vmem:[%s2226 + $0x1c] sm:$0xf]
  %v2235 = vld [vmem:[%s2226 + $0x20] sm:$0xf]
  %v2236 = vld [vmem:[%s2226 + $0x24] sm:$0xf]
  %v2237 = vld [vmem:[%s2226 + $0x28] sm:$0xf]
  %v2238 = vld [vmem:[%s2226 + $0x2c] sm:$0xf]
  %v2239 = vld [vmem:[%s2226 + $0x30] sm:$0xf]
  %v2240 = vld [vmem:[%s2226 + $0x34] sm:$0xf]
  %v2241 = vld [vmem:[%s2226 + $0x38] sm:$0xf]
  %v2242 = vld [vmem:[%s2226 + $0x3c] sm:$0xf]
  %v2259 = vunpack.c.l.b16 %v2227
  %v2260 = vunpack.c.l.b16 %v2228
  %v2261 = vunpack.c.l.b16 %v2229
  %v2262 = vunpack.c.l.b16 %v2230
  %v2263 = vunpack.c.l.b16 %v2231
  %v2264 = vunpack.c.l.b16 %v2232
  %v2265 = vunpack.c.l.b16 %v2233
  %v2266 = vunpack.c.l.b16 %v2234
  %v2267 = vunpack.c.l.b16 %v2235
  %v2268 = vunpack.c.l.b16 %v2236
  %v2269 = vunpack.c.l.b16 %v2237
  %v2270 = vunpack.c.l.b16 %v2238
  %v2271 = vunpack.c.l.b16 %v2239
  %v2272 = vunpack.c.l.b16 %v2240
  %v2273 = vunpack.c.l.b16 %v2241
  %v2274 = vunpack.c.l.b16 %v2242
  %v2275 = vpack.c.b16 %v2260, %v2259
  %v2276 = vpack.c.b16 %v2262, %v2261
  %v2277 = vpack.c.b16 %v2264, %v2263
  %v2278 = vpack.c.b16 %v2266, %v2265
  %v2279 = vpack.c.b16 %v2268, %v2267
  %v2280 = vpack.c.b16 %v2270, %v2269
  %v2281 = vpack.c.b16 %v2272, %v2271
  %v2282 = vpack.c.b16 %v2274, %v2273
  %2291 = vmatpush.bf16.msra.mxu0 %v2282
  %2292 = vmatpush.bf16.msra.mxu0 %v2281
  %2293 = vmatpush.bf16.msra.mxu0 %v2280
  %2294 = vmatpush.bf16.msra.mxu0 %v2279
  %2295 = vmatpush.bf16.msra.mxu0 %v2278
  %2296 = vmatpush.bf16.msra.mxu0 %v2277
  %2297 = vmatpush.bf16.msra.mxu0 %v2276
  %2298 = vmatpush.bf16.msra.mxu0 %v2275
  %2299 = vmatmul.bf16.gmra.mxu0 %v1674
  %v2300 = vpop.f32.mrf.mxu0
  %v2301 = vadd.f32 0.0, %v2300
  %v2302 = vpop.f32.mrf.mxu0
  %2303 = vdwg.mxu0
  %v2304 = vadd.f32 %v2225, %v2301
  %s2305 = scalar_lea.vmem %s3, 512
  %v2306 = vld [vmem:[%s2305] sm:$0xf]
  %v2307 = vld [vmem:[%s2305 + $0x4] sm:$0xf]
  %v2308 = vld [vmem:[%s2305 + $0x8] sm:$0xf]
  %v2309 = vld [vmem:[%s2305 + $0xc] sm:$0xf]
  %v2310 = vld [vmem:[%s2305 + $0x10] sm:$0xf]
  %v2311 = vld [vmem:[%s2305 + $0x14] sm:$0xf]
  %v2312 = vld [vmem:[%s2305 + $0x18] sm:$0xf]
  %v2313 = vld [vmem:[%s2305 + $0x1c] sm:$0xf]
  %v2314 = vld [vmem:[%s2305 + $0x20] sm:$0xf]
  %v2315 = vld [vmem:[%s2305 + $0x24] sm:$0xf]
  %v2316 = vld [vmem:[%s2305 + $0x28] sm:$0xf]
  %v2317 = vld [vmem:[%s2305 + $0x2c] sm:$0xf]
  %v2318 = vld [vmem:[%s2305 + $0x30] sm:$0xf]
  %v2319 = vld [vmem:[%s2305 + $0x34] sm:$0xf]
  %v2320 = vld [vmem:[%s2305 + $0x38] sm:$0xf]
  %v2321 = vld [vmem:[%s2305 + $0x3c] sm:$0xf]
  %v2338 = vunpack.c.l.b16 %v2306
  %v2339 = vunpack.c.l.b16 %v2307
  %v2340 = vunpack.c.l.b16 %v2308
  %v2341 = vunpack.c.l.b16 %v2309
  %v2342 = vunpack.c.l.b16 %v2310
  %v2343 = vunpack.c.l.b16 %v2311
  %v2344 = vunpack.c.l.b16 %v2312
  %v2345 = vunpack.c.l.b16 %v2313
  %v2346 = vunpack.c.l.b16 %v2314
  %v2347 = vunpack.c.l.b16 %v2315
  %v2348 = vunpack.c.l.b16 %v2316
  %v2349 = vunpack.c.l.b16 %v2317
  %v2350 = vunpack.c.l.b16 %v2318
  %v2351 = vunpack.c.l.b16 %v2319
  %v2352 = vunpack.c.l.b16 %v2320
  %v2353 = vunpack.c.l.b16 %v2321
  %v2354 = vpack.c.b16 %v2339, %v2338
  %v2355 = vpack.c.b16 %v2341, %v2340
  %v2356 = vpack.c.b16 %v2343, %v2342
  %v2357 = vpack.c.b16 %v2345, %v2344
  %v2358 = vpack.c.b16 %v2347, %v2346
  %v2359 = vpack.c.b16 %v2349, %v2348
  %v2360 = vpack.c.b16 %v2351, %v2350
  %v2361 = vpack.c.b16 %v2353, %v2352
  %2370 = vmatpush.bf16.msra.mxu0 %v2361
  %2371 = vmatpush.bf16.msra.mxu0 %v2360
  %2372 = vmatpush.bf16.msra.mxu0 %v2359
  %2373 = vmatpush.bf16.msra.mxu0 %v2358
  %2374 = vmatpush.bf16.msra.mxu0 %v2357
  %2375 = vmatpush.bf16.msra.mxu0 %v2356
  %2376 = vmatpush.bf16.msra.mxu0 %v2355
  %2377 = vmatpush.bf16.msra.mxu0 %v2354
  %2378 = vmatmul.bf16.gmra.mxu0 %v1675
  %v2379 = vpop.f32.mrf.mxu0
  %v2380 = vadd.f32 0.0, %v2379
  %v2381 = vpop.f32.mrf.mxu0
  %2382 = vdwg.mxu0
  %v2383 = vadd.f32 %v2304, %v2380
  %v2384 = vld [vmem:[%s4] sm:$0x1]
  %v2386 = vperm.slane %v2384, 0
  %v2388 = vadd.f32 %v2383, %v2386
  %2389 = vst [vmem:[%s5] sm:$0xff] %v2388
  // Predicated region
  $region22: #{dqn_forward.5} parent=0 // pred_check
    _
  $region23: #{dqn_forward.5} parent=0 // pred_check_branch
    %2391 = sbr.rel (0) target = $region25
  $region24: #{dqn_forward.5} parent=0 // pred_region
    _
  $region25: #{dqn_forward.5} parent=0 // pred_fallthru
    _
  // Predicated region
  $region26: #{dqn_forward.5} parent=0 // pred_check
    _
  $region27: #{dqn_forward.5} parent=0 // pred_check_branch
    %2393 = sbr.rel (0) target = $region29
  $region28: #{dqn_forward.5} parent=0 // pred_region
    _
  $region29: #{dqn_forward.5} parent=0 // pred_fallthru
    _

</llo_original>
